<compile_context>
chip_gen: v6e
topology: v6e:2x2x1
jax: 0.10.0
libtpu: 0.0.40
codegen_flags: <defaults>
</compile_context>

<pallas_src>
import functools

import jax
import jax.numpy as jnp
from jax.experimental import pallas as pl
from jax.experimental.pallas import tpu as pltpu

# ---------------- hyper-parameters (small, consistent with Decoder.__init__) ----------------
N_MEL = 8                      # n_mel_channel
N_FRAMES_PER_STEP = 2          # n_frames_per_step
MEL_STEP = N_MEL * N_FRAMES_PER_STEP   # 16  (= n_mel_channel * n_frames_per_step)
ENC_DIM = 32                   # encoder_embedding_dim
ATT_RNN_DIM = 32               # attention_rnn_dim
ATT_DIM = 32                   # attention_dim
DEC_RNN_DIM = 32               # decoder_rnn_dim
PRENET_DIM = 32                # prenet_dim
LOC_FILTERS = 4                # attention_location_n_filters
LOC_KERNEL = 5                 # attention_location_kernel_size

BATCH = 2
MAX_TIME = 16                  # encoder time steps
T_OUT = 8                      # mel frames (teacher forcing input length)
T_STEPS = T_OUT // N_FRAMES_PER_STEP   # 4 decoder steps
OUT_W = MEL_STEP + 1 + MAX_TIME        # packed per-step output: mel | gate | alignment


# --------------------------------- the Pallas kernel ---------------------------------
def _decoder_kernel(
    dec_ref, mem_ref, key_ref, bias_ref,              # per-batch data
    wp1, wp2,                                         # prenet
    wa, ba,                                           # fused attention LSTM cell
    wq_t, m_loc, v_blk,                               # attention layer (folded)
    wd, bd,                                           # fused decoder LSTM cell
    wproj, bproj,                                     # fused mel+gate projection
    out_ref,                                          # packed output [1, T_STEPS, OUT_W]
):
    dot = functools.partial(jnp.dot, preferred_element_type=jnp.float32)

    dec = dec_ref[0]          # [T_STEPS, MEL_STEP] teacher-forced frames (frame 0 = go frame)
    mem = mem_ref[0]          # [T, ENC_DIM]        encoder outputs
    key_flat = key_ref[0]     # [1, T*ATT_DIM]      processed memory (flattened, lane-dense)
    mask_bias = bias_ref[0]   # [1, T]              0 where valid, -1e30 where padded

    # Load grid-constant weights once.
    wp1_v, wp2_v = wp1[...], wp2[...]
    wa_v, ba_v = wa[...], ba[...]
    wq_v, mloc_v, vblk_v = wq_t[...], m_loc[...], v_blk[...]
    wd_v, bd_v = wd[...], bd[...]
    wproj_v, bproj_v = wproj[...], bproj[...]

    def lstm_cell(gates, c_prev, hdim):
        # PyTorch LSTMCell gate order: i, f, g, o
        i_g = jax.nn.sigmoid(gates[:, 0:hdim])
        f_g = jax.nn.sigmoid(gates[:, hdim:2 * hdim])
        g_g = jnp.tanh(gates[:, 2 * hdim:3 * hdim])
        o_g = jax.nn.sigmoid(gates[:, 3 * hdim:4 * hdim])
        c_new = f_g * c_prev + i_g * g_g
        return o_g * jnp.tanh(c_new), c_new

    # initialize_decoder_stats(): recurrent state as plain values (lives in vregs).
    h_a = jnp.zeros((1, ATT_RNN_DIM), jnp.float32)
    c_a = jnp.zeros((1, ATT_RNN_DIM), jnp.float32)
    h_d = jnp.zeros((1, DEC_RNN_DIM), jnp.float32)
    c_d = jnp.zeros((1, DEC_RNN_DIM), jnp.float32)
    aw = jnp.zeros((1, MAX_TIME), jnp.float32)       # attention_weight     (row, lane-dense)
    awc = jnp.zeros((1, MAX_TIME), jnp.float32)      # attention_weight_cum (row, lane-dense)
    ctx = jnp.zeros((1, ENC_DIM), jnp.float32)       # attention_context

    rows = []
    for t in range(T_STEPS):                          # fully unrolled recurrence
        x = dec[t:t + 1, :]                           # [1, MEL_STEP]

        # ---- Prenet (two bias-free linears + relu; dropout = identity in eval mode) ----
        p = jnp.maximum(dot(x, wp1_v), 0.0)
        p = jnp.maximum(dot(p, wp2_v), 0.0)           # [1, PRENET_DIM]

        # ---- attention_rnn: LSTMCell(cat(prenet, context)) — one fused matmul ----
        gates_a = dot(jnp.concatenate([p, ctx, h_a], axis=-1), wa_v) + ba_v
        h_a, c_a = lstm_cell(gates_a, c_a, ATT_RNN_DIM)

        # ---- location-sensitive attention (fully lane-dense) ----
        q_flat = dot(h_a, wq_v)                                       # [1, T*ATT_DIM]
        loc_flat = dot(jnp.concatenate([aw, awc], axis=-1), mloc_v)   # [1, T*ATT_DIM]
        s = jnp.tanh(q_flat + key_flat + loc_flat)                    # [1, T*ATT_DIM]
        e = dot(s, vblk_v) + mask_bias                                # [1, T] energies (+ mask)
        m = jnp.max(e, axis=-1, keepdims=True)                        # softmax over lanes
        w = jnp.exp(e - m)
        w = w / jnp.sum(w, axis=-1, keepdims=True)                    # [1, T] attention weights
        ctx = dot(w, mem)                                             # [1, ENC_DIM] (bmm)
        aw = w
        awc = awc + w

        # ---- decoder_rnn: LSTMCell(cat(attention_hidden, context)) — one fused matmul ----
        gates_d = dot(jnp.concatenate([h_a, ctx, h_d], axis=-1), wd_v) + bd_v
        h_d, c_d = lstm_cell(gates_d, c_d, DEC_RNN_DIM)

        # ---- mel + gate projections in one matmul on cat(decoder_hidden, context) ----
        mel_gate = dot(jnp.concatenate([h_d, ctx], axis=-1), wproj_v) + bproj_v   # [1, MEL_STEP+1]
        rows.append(jnp.concatenate([mel_gate, w], axis=-1))                      # [1, OUT_W]

    # Single packed store per batch element (one output DMA).
    out_ref[0] = jnp.concatenate(rows, axis=0)        # [T_STEPS, OUT_W]


# --------------------------------- host-side weight packing ---------------------------------
def _pack_params(p, T):
    A = ATT_DIM
    # Fused LSTM input/recurrent weights: input = cat(prenet, ctx, h).
    wa = jnp.concatenate([p['wa_xp'], p['wa_xc'], p['wa_h']], axis=0)       # [96, 4*ATT_RNN_DIM]
    wd = jnp.concatenate([p['wd_xh'], p['wd_xc'], p['wd_h']], axis=0)       # [96, 4*DEC_RNN_DIM]
    # Fused mel+gate projection on cat(h_dec, ctx).
    wproj = jnp.concatenate(
        [jnp.concatenate([p['wpr_h'], p['wpr_c']], axis=0),
         jnp.concatenate([p['wg_h'], p['wg_c']], axis=0)], axis=1)          # [64, MEL_STEP+1]
    bproj = jnp.concatenate([p['bpr'], p['bg']], axis=1)                    # [1, MEL_STEP+1]
    # Query layer tiled so q_flat[0, j*A+d] = query[0, d].
    wq_tiled = jnp.tile(p['wq'], (1, T))                                    # [ATT_RNN_DIM, T*A]
    # Location layer folded with its output linear: loc_flat = [aw | awc] @ m_loc.
    m_prev = jnp.einsum('fjk,fd->kjd', p['cprev'], p['wloc']).reshape(T, T * A)
    m_cum = jnp.einsum('fjk,fd->kjd', p['ccum'], p['wloc']).reshape(T, T * A)
    m_loc = jnp.concatenate([m_prev, m_cum], axis=0)                        # [2T, T*A]
    # Block-diagonal v so e[0, j] = sum_d tanh(...)[j*A+d] * v[d].
    v_blk = jnp.kron(jnp.eye(T, dtype=jnp.float32), p['vcol'])              # [T*A, T]
    return [p['wp1'], p['wp2'], wa, p['ba'], wq_tiled, m_loc, v_blk,
            wd, p['bd'], wproj, bproj]


# --------------------------------- host-side wrapper ---------------------------------
def decoder_forward(params, memory, decoder_inputs, memory_lengths):
    B, T, E = memory.shape
    assert (B, T, E) == (BATCH, MAX_TIME, ENC_DIM)
    t_steps = decoder_inputs.shape[1] // N_FRAMES_PER_STEP
    assert t_steps == T_STEPS

    # parse_decoder_inputs + go frame (only the first T_STEPS frames are consumed)
    parsed = decoder_inputs.reshape(B, t_steps, MEL_STEP)
    go = jnp.zeros((B, 1, MEL_STEP), jnp.float32)
    dec_steps = jnp.concatenate([go, parsed[:, :-1, :]], axis=1)            # [B, T_STEPS, MEL_STEP]

    # processed_memory (key) precomputed once, flattened lane-dense.
    key_flat = jnp.einsum('bte,ea->bta', memory, params['wk']).reshape(B, 1, T * ATT_DIM)

    # ~get_mask_from_lengths: additive bias, -1e30 where padded (avoids -inf arithmetic).
    mask_bias = jnp.where(jnp.arange(T)[None, :] >= memory_lengths[:, None],
                          -1e30, 0.0).astype(jnp.float32)[:, None, :]       # [B, 1, T]

    w_list = _pack_params(params, T)

    def full_spec(arr):
        nd = arr.ndim
        return pl.BlockSpec(arr.shape, lambda b, nd=nd: (0,) * nd)

    in_specs = [
        pl.BlockSpec((1, t_steps, MEL_STEP), lambda b: (b, 0, 0)),          # dec_steps
        pl.BlockSpec((1, T, ENC_DIM), lambda b: (b, 0, 0)),                 # memory
        pl.BlockSpec((1, 1, T * ATT_DIM), lambda b: (b, 0, 0)),             # key_flat
        pl.BlockSpec((1, 1, T), lambda b: (b, 0, 0)),                       # mask_bias
    ] + [full_spec(w) for w in w_list]

    out_spec = pl.BlockSpec((1, t_steps, OUT_W), lambda b: (b, 0, 0))

    packed = pl.pallas_call(
        _decoder_kernel,
        out_shape=jax.ShapeDtypeStruct((B, t_steps, OUT_W), jnp.float32),
        grid_spec=pltpu.PrefetchScalarGridSpec(
            num_scalar_prefetch=0,
            grid=(B,),                                # batch only; time unrolled in-kernel
            in_specs=in_specs,
            out_specs=out_spec,
        ),
        compiler_params=pltpu.CompilerParams(
            dimension_semantics=("parallel",)),       # batch elements independent -> megacore-safe
    )(dec_steps, memory, key_flat, mask_bias, *w_list)

    # parse_decoder_outputs (split the packed slab host-side)
    mel = packed[:, :, :MEL_STEP]                                           # [B, T_STEPS, MEL_STEP]
    mel = mel.reshape(B, t_steps * N_FRAMES_PER_STEP, N_MEL).transpose(0, 2, 1)   # [B, n_mel, T_out]
    gate = packed[:, :, MEL_STEP]                                           # [B, T_STEPS]
    align = packed[:, :, MEL_STEP + 1:]                                     # [B, T_STEPS, T]
    return mel, gate, align


# --------------------------------- parameter init ---------------------------------
def init_params(key):
    keys = iter(jax.random.split(key, 32))

    def rnd(shape, scale=0.1):
        return (scale * jax.random.normal(next(keys), shape)).astype(jnp.float32)

    h4a, h4d = 4 * ATT_RNN_DIM, 4 * DEC_RNN_DIM
    pad = (LOC_KERNEL - 1) // 2

    # location conv weights [F, 2, K]; fold conv ('same' padding, stride 1) and
    # eval-mode BatchNorm1d (running_mean=0, running_var=1, gamma=1, beta=0) into [T,T] matrices.
    conv_w = rnd((LOC_FILTERS, 2, LOC_KERNEL))
    tt = jnp.arange(MAX_TIME)
    shift_ops = jnp.stack(
        [((tt[:, None] + (k - pad)) == tt[None, :]).astype(jnp.float32) for k in range(LOC_KERNEL)],
        axis=0)                                                     # [K, T, T]
    bn_scale = 1.0 / (1.0 + 1e-5) ** 0.5
    cprev = jnp.einsum('fk,ktu->ftu', conv_w[:, 0], shift_ops) * bn_scale
    ccum = jnp.einsum('fk,ktu->ftu', conv_w[:, 1], shift_ops) * bn_scale

    return dict(
        # Prenet (bias-free)
        wp1=rnd((MEL_STEP, PRENET_DIM)), wp2=rnd((PRENET_DIM, PRENET_DIM)),
        # attention_rnn LSTMCell (input weight split: prenet part / context part), bias = b_ih + b_hh
        wa_xp=rnd((PRENET_DIM, h4a)), wa_xc=rnd((ENC_DIM, h4a)), wa_h=rnd((ATT_RNN_DIM, h4a)), ba=rnd((1, h4a)),
        # Attention layer
        wq=rnd((ATT_RNN_DIM, ATT_DIM)), wk=rnd((ENC_DIM, ATT_DIM)),
        cprev=cprev, ccum=ccum, wloc=rnd((LOC_FILTERS, ATT_DIM)), vcol=rnd((ATT_DIM, 1)),
        # decoder_rnn LSTMCell (input weight split: attention_hidden part / context part)
        wd_xh=rnd((ATT_RNN_DIM, h4d)), wd_xc=rnd((ENC_DIM, h4d)), wd_h=rnd((DEC_RNN_DIM, h4d)), bd=rnd((1, h4d)),
        # linear_project / gate_layer (weights split: decoder_hidden part / context part)
        wpr_h=rnd((DEC_RNN_DIM, MEL_STEP)), wpr_c=rnd((ENC_DIM, MEL_STEP)), bpr=rnd((1, MEL_STEP)),
        wg_h=rnd((DEC_RNN_DIM, 1)), wg_c=rnd((ENC_DIM, 1)), bg=rnd((1, 1)),
    )


# --------------------------------- pure-JAX reference ---------------------------------
def reference_forward(p, memory, decoder_inputs, memory_lengths):
    B, T, _ = memory.shape
    t_steps = decoder_inputs.shape[1] // N_FRAMES_PER_STEP
    parsed = decoder_inputs.reshape(B, t_steps, MEL_STEP)
    dec_steps = jnp.concatenate([jnp.zeros((B, 1, MEL_STEP), jnp.float32), parsed[:, :-1, :]], axis=1)
    pad_mask = jnp.arange(T)[None, :] >= memory_lengths[:, None]

    def lstm(g, c, hdim):
        i = jax.nn.sigmoid(g[:, :hdim]); f = jax.nn.sigmoid(g[:, hdim:2 * hdim])
        gg = jnp.tanh(g[:, 2 * hdim:3 * hdim]); o = jax.nn.sigmoid(g[:, 3 * hdim:])
        c2 = f * c + i * gg
        return o * jnp.tanh(c2), c2

    h_a = jnp.zeros((B, ATT_RNN_DIM)); c_a = jnp.zeros((B, ATT_RNN_DIM))
    h_d = jnp.zeros((B, DEC_RNN_DIM)); c_d = jnp.zeros((B, DEC_RNN_DIM))
    aw = jnp.zeros((B, T)); awc = jnp.zeros((B, T)); ctx = jnp.zeros((B, ENC_DIM))
    mels, gates, aligns = [], [], []
    for t in range(t_steps):
        x = dec_steps[:, t]
        pr = jax.nn.relu(x @ p['wp1']); pr = jax.nn.relu(pr @ p['wp2'])
        h_a, c_a = lstm(pr @ p['wa_xp'] + ctx @ p['wa_xc'] + h_a @ p['wa_h'] + p['ba'], c_a, ATT_RNN_DIM)
        query = h_a @ p['wq']
        key = jnp.einsum('bte,ea->bta', memory, p['wk'])
        loc = jnp.zeros((B, T, ATT_DIM))
        for fi in range(LOC_FILTERS):
            cf = aw @ p['cprev'][fi].T + awc @ p['ccum'][fi].T
            loc = loc + cf[:, :, None] * p['wloc'][fi][None, None, :]
        e = (jnp.tanh(query[:, None, :] + key + loc) @ p['vcol'])[:, :, 0]
        e = jnp.where(pad_mask, -jnp.inf, e)
        m = jnp.max(e, axis=1, keepdims=True)
        w = jnp.exp(e - m); w = w / jnp.sum(w, axis=1, keepdims=True)
        ctx = jnp.einsum('bt,bte->be', w, memory)
        aw = w; awc = awc + w
        h_d, c_d = lstm(h_a @ p['wd_xh'] + ctx @ p['wd_xc'] + h_d @ p['wd_h'] + p['bd'], c_d, DEC_RNN_DIM)
        mels.append(h_d @ p['wpr_h'] + ctx @ p['wpr_c'] + p['bpr'])
        gates.append((h_d @ p['wg_h'] + ctx @ p['wg_c'] + p['bg'])[:, 0])
        aligns.append(w)
    mel = jnp.stack(mels, 1).reshape(B, t_steps * N_FRAMES_PER_STEP, N_MEL).transpose(0, 2, 1)
    return mel, jnp.stack(gates, 1), jnp.stack(aligns, 1)


if __name__ == "__main__":
    key = jax.random.PRNGKey(0)
    k_params, k_mem, k_dec = jax.random.split(key, 3)
    params = init_params(k_params)
    memory = jax.random.normal(k_mem, (BATCH, MAX_TIME, ENC_DIM), jnp.float32)
    decoder_inputs = jax.random.normal(k_dec, (BATCH, T_OUT, N_MEL), jnp.float32)
    memory_lengths = jnp.array([MAX_TIME, MAX_TIME - 4], jnp.int32)

    mel, gate, align = decoder_forward(params, memory, decoder_inputs, memory_lengths)
    jax.block_until_ready((mel, gate, align))

    assert mel.shape == (BATCH, N_MEL, T_OUT)
    assert gate.shape == (BATCH, T_STEPS)
    assert align.shape == (BATCH, T_STEPS, MAX_TIME)

    mel_r, gate_r, align_r = reference_forward(params, memory, decoder_inputs, memory_lengths)
    for got, ref in ((mel, mel_r), (gate, gate_r), (align, align_r)):
        assert jnp.allclose(got, ref, atol=2e-4, rtol=2e-4), float(jnp.max(jnp.abs(got - ref)))

    print("KERNEL_OK")
</pallas_src>

<mosaic_0001>
module attributes {stable_mosaic.version = 11 : i64} {
  func.func @_decoder_kernel(%arg0: i32, %arg1: memref<1x4x16xf32, #tpu.memory_space<vmem>>, %arg2: memref<1x16x32xf32, #tpu.memory_space<vmem>>, %arg3: memref<1x1x512xf32, #tpu.memory_space<vmem>>, %arg4: memref<1x1x16xf32, #tpu.memory_space<vmem>>, %arg5: memref<16x32xf32, #tpu.memory_space<vmem>>, %arg6: memref<32x32xf32, #tpu.memory_space<vmem>>, %arg7: memref<96x128xf32, #tpu.memory_space<vmem>>, %arg8: memref<1x128xf32, #tpu.memory_space<vmem>>, %arg9: memref<32x512xf32, #tpu.memory_space<vmem>>, %arg10: memref<32x512xf32, #tpu.memory_space<vmem>>, %arg11: memref<512x16xf32, #tpu.memory_space<vmem>>, %arg12: memref<96x128xf32, #tpu.memory_space<vmem>>, %arg13: memref<1x128xf32, #tpu.memory_space<vmem>>, %arg14: memref<64x17xf32, #tpu.memory_space<vmem>>, %arg15: memref<1x17xf32, #tpu.memory_space<vmem>>, %arg16: memref<1x4x33xf32, #tpu.memory_space<vmem>>) attributes {dimension_semantics = [#tpu.dimension_semantics<parallel>], iteration_bounds = array<i64: 2>, scalar_prefetch = 0 : i64, scratch_operands = 0 : i64, tpu.core_type = #tpu.core_type<tc>, window_params = [{transform_indices = @transform_0, window_bounds = array<i64: 1, 4, 16>}, {transform_indices = @transform_1, window_bounds = array<i64: 1, 16, 32>}, {transform_indices = @transform_2, window_bounds = array<i64: 1, 1, 512>}, {transform_indices = @transform_3, window_bounds = array<i64: 1, 1, 16>}, {pipeline_mode = #tpu.pipeline_mode<synchronous>, transform_indices = @transform_4, window_bounds = array<i64: 16, 32>}, {pipeline_mode = #tpu.pipeline_mode<synchronous>, transform_indices = @transform_5, window_bounds = array<i64: 32, 32>}, {pipeline_mode = #tpu.pipeline_mode<synchronous>, transform_indices = @transform_6, window_bounds = array<i64: 96, 128>}, {pipeline_mode = #tpu.pipeline_mode<synchronous>, transform_indices = @transform_7, window_bounds = array<i64: 1, 128>}, {pipeline_mode = #tpu.pipeline_mode<synchronous>, transform_indices = @transform_8, window_bounds = array<i64: 32, 512>}, {pipeline_mode = #tpu.pipeline_mode<synchronous>, transform_indices = @transform_9, window_bounds = array<i64: 32, 512>}, {pipeline_mode = #tpu.pipeline_mode<synchronous>, transform_indices = @transform_10, window_bounds = array<i64: 512, 16>}, {pipeline_mode = #tpu.pipeline_mode<synchronous>, transform_indices = @transform_11, window_bounds = array<i64: 96, 128>}, {pipeline_mode = #tpu.pipeline_mode<synchronous>, transform_indices = @transform_12, window_bounds = array<i64: 1, 128>}, {pipeline_mode = #tpu.pipeline_mode<synchronous>, transform_indices = @transform_13, window_bounds = array<i64: 64, 17>}, {pipeline_mode = #tpu.pipeline_mode<synchronous>, transform_indices = @transform_14, window_bounds = array<i64: 1, 17>}, {transform_indices = @transform_15, window_bounds = array<i64: 1, 4, 33>}]} {
    %c0 = arith.constant 0 : index
    %c0_0 = arith.constant 0 : index
    %c0_1 = arith.constant 0 : index
    %0 = vector.load %arg1[%c0, %c0_0, %c0_1] : memref<1x4x16xf32, #tpu.memory_space<vmem>>, vector<1x4x16xf32>
    %1 = vector.shape_cast %0 : vector<1x4x16xf32> to vector<4x16xf32>
    %c0_2 = arith.constant 0 : index
    %c0_3 = arith.constant 0 : index
    %c0_4 = arith.constant 0 : index
    %2 = vector.load %arg2[%c0_2, %c0_3, %c0_4] : memref<1x16x32xf32, #tpu.memory_space<vmem>>, vector<1x16x32xf32>
    %3 = vector.shape_cast %2 : vector<1x16x32xf32> to vector<16x32xf32>
    %c0_5 = arith.constant 0 : index
    %c0_6 = arith.constant 0 : index
    %c0_7 = arith.constant 0 : index
    %4 = vector.load %arg3[%c0_5, %c0_6, %c0_7] : memref<1x1x512xf32, #tpu.memory_space<vmem>>, vector<1x1x512xf32>
    %5 = vector.shape_cast %4 : vector<1x1x512xf32> to vector<1x512xf32>
    %c0_8 = arith.constant 0 : index
    %c0_9 = arith.constant 0 : index
    %c0_10 = arith.constant 0 : index
    %6 = vector.load %arg4[%c0_8, %c0_9, %c0_10] : memref<1x1x16xf32, #tpu.memory_space<vmem>>, vector<1x1x16xf32>
    %7 = vector.shape_cast %6 : vector<1x1x16xf32> to vector<1x16xf32>
    %c0_11 = arith.constant 0 : index
    %c0_12 = arith.constant 0 : index
    %8 = vector.load %arg5[%c0_11, %c0_12] : memref<16x32xf32, #tpu.memory_space<vmem>>, vector<16x32xf32>
    %c0_13 = arith.constant 0 : index
    %c0_14 = arith.constant 0 : index
    %9 = vector.load %arg6[%c0_13, %c0_14] : memref<32x32xf32, #tpu.memory_space<vmem>>, vector<32x32xf32>
    %c0_15 = arith.constant 0 : index
    %c0_16 = arith.constant 0 : index
    %10 = vector.load %arg7[%c0_15, %c0_16] : memref<96x128xf32, #tpu.memory_space<vmem>>, vector<96x128xf32>
    %c0_17 = arith.constant 0 : index
    %c0_18 = arith.constant 0 : index
    %11 = vector.load %arg8[%c0_17, %c0_18] : memref<1x128xf32, #tpu.memory_space<vmem>>, vector<1x128xf32>
    %c0_19 = arith.constant 0 : index
    %c0_20 = arith.constant 0 : index
    %12 = vector.load %arg9[%c0_19, %c0_20] : memref<32x512xf32, #tpu.memory_space<vmem>>, vector<32x512xf32>
    %c0_21 = arith.constant 0 : index
    %c0_22 = arith.constant 0 : index
    %13 = vector.load %arg10[%c0_21, %c0_22] : memref<32x512xf32, #tpu.memory_space<vmem>>, vector<32x512xf32>
    %c0_23 = arith.constant 0 : index
    %c0_24 = arith.constant 0 : index
    %14 = vector.load %arg11[%c0_23, %c0_24] : memref<512x16xf32, #tpu.memory_space<vmem>>, vector<512x16xf32>
    %c0_25 = arith.constant 0 : index
    %c0_26 = arith.constant 0 : index
    %15 = vector.load %arg12[%c0_25, %c0_26] : memref<96x128xf32, #tpu.memory_space<vmem>>, vector<96x128xf32>
    %c0_27 = arith.constant 0 : index
    %c0_28 = arith.constant 0 : index
    %16 = vector.load %arg13[%c0_27, %c0_28] : memref<1x128xf32, #tpu.memory_space<vmem>>, vector<1x128xf32>
    %c0_29 = arith.constant 0 : index
    %c0_30 = arith.constant 0 : index
    %17 = vector.load %arg14[%c0_29, %c0_30] : memref<64x17xf32, #tpu.memory_space<vmem>>, vector<64x17xf32>
    %c0_31 = arith.constant 0 : index
    %c0_32 = arith.constant 0 : index
    %18 = vector.load %arg15[%c0_31, %c0_32] : memref<1x17xf32, #tpu.memory_space<vmem>>, vector<1x17xf32>
    %cst = arith.constant 0.000000e+00 : f32
    %19 = vector.broadcast %cst : f32 to vector<1x32xf32>
    %cst_33 = arith.constant 0.000000e+00 : f32
    %20 = vector.broadcast %cst_33 : f32 to vector<1x32xf32>
    %cst_34 = arith.constant 0.000000e+00 : f32
    %21 = vector.broadcast %cst_34 : f32 to vector<1x32xf32>
    %cst_35 = arith.constant 0.000000e+00 : f32
    %22 = vector.broadcast %cst_35 : f32 to vector<1x32xf32>
    %cst_36 = arith.constant 0.000000e+00 : f32
    %23 = vector.broadcast %cst_36 : f32 to vector<1x16xf32>
    %cst_37 = arith.constant 0.000000e+00 : f32
    %24 = vector.broadcast %cst_37 : f32 to vector<1x16xf32>
    %cst_38 = arith.constant 0.000000e+00 : f32
    %25 = vector.broadcast %cst_38 : f32 to vector<1x32xf32>
    %26 = vector.extract_strided_slice %1 {offsets = [0, 0], sizes = [1, 16], strides = [1, 1]} : vector<4x16xf32> to vector<1x16xf32>
    %cst_39 = arith.constant dense<0.000000e+00> : vector<1x32xf32>
    %27 = tpu.matmul %26, %8, %cst_39 {dimension_numbers = #tpu.dot_dimension_numbers<[1], [0], [0], [1], [0, 0, 1, 1], [], []>} : vector<1x16xf32>, vector<16x32xf32>, vector<1x32xf32> -> vector<1x32xf32>
    %cst_40 = arith.constant 0.000000e+00 : f32
    %28 = vector.broadcast %cst_40 : f32 to vector<1x32xf32>
    %29 = arith.maximumf %27, %28 : vector<1x32xf32>
    %cst_41 = arith.constant dense<0.000000e+00> : vector<1x32xf32>
    %30 = tpu.matmul %29, %9, %cst_41 {dimension_numbers = #tpu.dot_dimension_numbers<[1], [0], [0], [1], [0, 0, 1, 1], [], []>} : vector<1x32xf32>, vector<32x32xf32>, vector<1x32xf32> -> vector<1x32xf32>
    %cst_42 = arith.constant 0.000000e+00 : f32
    %31 = vector.broadcast %cst_42 : f32 to vector<1x32xf32>
    %32 = arith.maximumf %30, %31 : vector<1x32xf32>
    %33 = tpu.concatenate %32, %25, %19 in 1 : vector<1x32xf32>, vector<1x32xf32>, vector<1x32xf32> -> vector<1x96xf32>
    %cst_43 = arith.constant dense<0.000000e+00> : vector<1x128xf32>
    %34 = tpu.matmul %33, %10, %cst_43 {dimension_numbers = #tpu.dot_dimension_numbers<[1], [0], [0], [1], [0, 0, 1, 1], [], []>} : vector<1x96xf32>, vector<96x128xf32>, vector<1x128xf32> -> vector<1x128xf32>
    %35 = arith.addf %34, %11 : vector<1x128xf32>
    %36 = vector.extract_strided_slice %35 {offsets = [0, 0], sizes = [1, 32], strides = [1, 1]} : vector<1x128xf32> to vector<1x32xf32>
    %37 = arith.negf %36 : vector<1x32xf32>
    %38 = math.exp %37 : vector<1x32xf32>
    %cst_44 = arith.constant 1.000000e+00 : f32
    %39 = vector.broadcast %cst_44 : f32 to vector<1x32xf32>
    %40 = arith.addf %39, %38 : vector<1x32xf32>
    %41 = arith.divf %39, %40 : vector<1x32xf32>
    %42 = vector.extract_strided_slice %35 {offsets = [0, 32], sizes = [1, 32], strides = [1, 1]} : vector<1x128xf32> to vector<1x32xf32>
    %43 = arith.negf %42 : vector<1x32xf32>
    %44 = math.exp %43 : vector<1x32xf32>
    %cst_45 = arith.constant 1.000000e+00 : f32
    %45 = vector.broadcast %cst_45 : f32 to vector<1x32xf32>
    %46 = arith.addf %45, %44 : vector<1x32xf32>
    %47 = arith.divf %45, %46 : vector<1x32xf32>
    %48 = vector.extract_strided_slice %35 {offsets = [0, 64], sizes = [1, 32], strides = [1, 1]} : vector<1x128xf32> to vector<1x32xf32>
    %49 = math.tanh %48 : vector<1x32xf32>
    %50 = vector.extract_strided_slice %35 {offsets = [0, 96], sizes = [1, 32], strides = [1, 1]} : vector<1x128xf32> to vector<1x32xf32>
    %51 = arith.negf %50 : vector<1x32xf32>
    %52 = math.exp %51 : vector<1x32xf32>
    %cst_46 = arith.constant 1.000000e+00 : f32
    %53 = vector.broadcast %cst_46 : f32 to vector<1x32xf32>
    %54 = arith.addf %53, %52 : vector<1x32xf32>
    %55 = arith.divf %53, %54 : vector<1x32xf32>
    %56 = arith.mulf %47, %20 : vector<1x32xf32>
    %57 = arith.mulf %41, %49 : vector<1x32xf32>
    %58 = arith.addf %56, %57 : vector<1x32xf32>
    %59 = math.tanh %58 : vector<1x32xf32>
    %60 = arith.mulf %55, %59 : vector<1x32xf32>
    %cst_47 = arith.constant dense<0.000000e+00> : vector<1x512xf32>
    %61 = tpu.matmul %60, %12, %cst_47 {dimension_numbers = #tpu.dot_dimension_numbers<[1], [0], [0], [1], [0, 0, 1, 1], [], []>} : vector<1x32xf32>, vector<32x512xf32>, vector<1x512xf32> -> vector<1x512xf32>
    %62 = tpu.concatenate %23, %24 in 1 : vector<1x16xf32>, vector<1x16xf32> -> vector<1x32xf32>
    %cst_48 = arith.constant dense<0.000000e+00> : vector<1x512xf32>
    %63 = tpu.matmul %62, %13, %cst_48 {dimension_numbers = #tpu.dot_dimension_numbers<[1], [0], [0], [1], [0, 0, 1, 1], [], []>} : vector<1x32xf32>, vector<32x512xf32>, vector<1x512xf32> -> vector<1x512xf32>
    %64 = arith.addf %61, %5 : vector<1x512xf32>
    %65 = arith.addf %64, %63 : vector<1x512xf32>
    %66 = math.tanh %65 : vector<1x512xf32>
    %cst_49 = arith.constant dense<0.000000e+00> : vector<1x16xf32>
    %67 = tpu.matmul %66, %14, %cst_49 {dimension_numbers = #tpu.dot_dimension_numbers<[1], [0], [0], [1], [0, 0, 1, 1], [], []>} : vector<1x512xf32>, vector<512x16xf32>, vector<1x16xf32> -> vector<1x16xf32>
    %68 = arith.addf %67, %7 : vector<1x16xf32>
    %cst_50 = arith.constant dense<0xFF800000> : vector<1xf32>
    %69 = vector.multi_reduction <maximumf>, %68, %cst_50 [1] : vector<1x16xf32> to vector<1xf32>
    %70 = vector.shape_cast %69 : vector<1xf32> to vector<1x1xf32>
    %71 = vector.broadcast %70 : vector<1x1xf32> to vector<1x16xf32>
    %72 = arith.subf %68, %71 : vector<1x16xf32>
    %73 = math.exp %72 : vector<1x16xf32>
    %cst_51 = arith.constant dense<0.000000e+00> : vector<1xf32>
    %74 = vector.multi_reduction <add>, %73, %cst_51 [1] : vector<1x16xf32> to vector<1xf32>
    %75 = vector.shape_cast %74 : vector<1xf32> to vector<1x1xf32>
    %76 = vector.broadcast %75 : vector<1x1xf32> to vector<1x16xf32>
    %77 = arith.divf %73, %76 : vector<1x16xf32>
    %cst_52 = arith.constant dense<0.000000e+00> : vector<1x32xf32>
    %78 = tpu.matmul %77, %3, %cst_52 {dimension_numbers = #tpu.dot_dimension_numbers<[1], [0], [0], [1], [0, 0, 1, 1], [], []>} : vector<1x16xf32>, vector<16x32xf32>, vector<1x32xf32> -> vector<1x32xf32>
    %79 = arith.addf %24, %77 : vector<1x16xf32>
    %80 = tpu.concatenate %60, %78, %21 in 1 : vector<1x32xf32>, vector<1x32xf32>, vector<1x32xf32> -> vector<1x96xf32>
    %cst_53 = arith.constant dense<0.000000e+00> : vector<1x128xf32>
    %81 = tpu.matmul %80, %15, %cst_53 {dimension_numbers = #tpu.dot_dimension_numbers<[1], [0], [0], [1], [0, 0, 1, 1], [], []>} : vector<1x96xf32>, vector<96x128xf32>, vector<1x128xf32> -> vector<1x128xf32>
    %82 = arith.addf %81, %16 : vector<1x128xf32>
    %83 = vector.extract_strided_slice %82 {offsets = [0, 0], sizes = [1, 32], strides = [1, 1]} : vector<1x128xf32> to vector<1x32xf32>
    %84 = arith.negf %83 : vector<1x32xf32>
    %85 = math.exp %84 : vector<1x32xf32>
    %cst_54 = arith.constant 1.000000e+00 : f32
    %86 = vector.broadcast %cst_54 : f32 to vector<1x32xf32>
    %87 = arith.addf %86, %85 : vector<1x32xf32>
    %88 = arith.divf %86, %87 : vector<1x32xf32>
    %89 = vector.extract_strided_slice %82 {offsets = [0, 32], sizes = [1, 32], strides = [1, 1]} : vector<1x128xf32> to vector<1x32xf32>
    %90 = arith.negf %89 : vector<1x32xf32>
    %91 = math.exp %90 : vector<1x32xf32>
    %cst_55 = arith.constant 1.000000e+00 : f32
    %92 = vector.broadcast %cst_55 : f32 to vector<1x32xf32>
    %93 = arith.addf %92, %91 : vector<1x32xf32>
    %94 = arith.divf %92, %93 : vector<1x32xf32>
    %95 = vector.extract_strided_slice %82 {offsets = [0, 64], sizes = [1, 32], strides = [1, 1]} : vector<1x128xf32> to vector<1x32xf32>
    %96 = math.tanh %95 : vector<1x32xf32>
    %97 = vector.extract_strided_slice %82 {offsets = [0, 96], sizes = [1, 32], strides = [1, 1]} : vector<1x128xf32> to vector<1x32xf32>
    %98 = arith.negf %97 : vector<1x32xf32>
    %99 = math.exp %98 : vector<1x32xf32>
    %cst_56 = arith.constant 1.000000e+00 : f32
    %100 = vector.broadcast %cst_56 : f32 to vector<1x32xf32>
    %101 = arith.addf %100, %99 : vector<1x32xf32>
    %102 = arith.divf %100, %101 : vector<1x32xf32>
    %103 = arith.mulf %94, %22 : vector<1x32xf32>
    %104 = arith.mulf %88, %96 : vector<1x32xf32>
    %105 = arith.addf %103, %104 : vector<1x32xf32>
    %106 = math.tanh %105 : vector<1x32xf32>
    %107 = arith.mulf %102, %106 : vector<1x32xf32>
    %108 = tpu.concatenate %107, %78 in 1 : vector<1x32xf32>, vector<1x32xf32> -> vector<1x64xf32>
    %cst_57 = arith.constant dense<0.000000e+00> : vector<1x17xf32>
    %109 = tpu.matmul %108, %17, %cst_57 {dimension_numbers = #tpu.dot_dimension_numbers<[1], [0], [0], [1], [0, 0, 1, 1], [], []>} : vector<1x64xf32>, vector<64x17xf32>, vector<1x17xf32> -> vector<1x17xf32>
    %110 = arith.addf %109, %18 : vector<1x17xf32>
    %111 = tpu.concatenate %110, %77 in 1 : vector<1x17xf32>, vector<1x16xf32> -> vector<1x33xf32>
    %112 = vector.extract_strided_slice %1 {offsets = [1, 0], sizes = [1, 16], strides = [1, 1]} : vector<4x16xf32> to vector<1x16xf32>
    %cst_58 = arith.constant dense<0.000000e+00> : vector<1x32xf32>
    %113 = tpu.matmul %112, %8, %cst_58 {dimension_numbers = #tpu.dot_dimension_numbers<[1], [0], [0], [1], [0, 0, 1, 1], [], []>} : vector<1x16xf32>, vector<16x32xf32>, vector<1x32xf32> -> vector<1x32xf32>
    %cst_59 = arith.constant 0.000000e+00 : f32
    %114 = vector.broadcast %cst_59 : f32 to vector<1x32xf32>
    %115 = arith.maximumf %113, %114 : vector<1x32xf32>
    %cst_60 = arith.constant dense<0.000000e+00> : vector<1x32xf32>
    %116 = tpu.matmul %115, %9, %cst_60 {dimension_numbers = #tpu.dot_dimension_numbers<[1], [0], [0], [1], [0, 0, 1, 1], [], []>} : vector<1x32xf32>, vector<32x32xf32>, vector<1x32xf32> -> vector<1x32xf32>
    %cst_61 = arith.constant 0.000000e+00 : f32
    %117 = vector.broadcast %cst_61 : f32 to vector<1x32xf32>
    %118 = arith.maximumf %116, %117 : vector<1x32xf32>
    %119 = tpu.concatenate %118, %78, %60 in 1 : vector<1x32xf32>, vector<1x32xf32>, vector<1x32xf32> -> vector<1x96xf32>
    %cst_62 = arith.constant dense<0.000000e+00> : vector<1x128xf32>
    %120 = tpu.matmul %119, %10, %cst_62 {dimension_numbers = #tpu.dot_dimension_numbers<[1], [0], [0], [1], [0, 0, 1, 1], [], []>} : vector<1x96xf32>, vector<96x128xf32>, vector<1x128xf32> -> vector<1x128xf32>
    %121 = arith.addf %120, %11 : vector<1x128xf32>
    %122 = vector.extract_strided_slice %121 {offsets = [0, 0], sizes = [1, 32], strides = [1, 1]} : vector<1x128xf32> to vector<1x32xf32>
    %123 = arith.negf %122 : vector<1x32xf32>
    %124 = math.exp %123 : vector<1x32xf32>
    %cst_63 = arith.constant 1.000000e+00 : f32
    %125 = vector.broadcast %cst_63 : f32 to vector<1x32xf32>
    %126 = arith.addf %125, %124 : vector<1x32xf32>
    %127 = arith.divf %125, %126 : vector<1x32xf32>
    %128 = vector.extract_strided_slice %121 {offsets = [0, 32], sizes = [1, 32], strides = [1, 1]} : vector<1x128xf32> to vector<1x32xf32>
    %129 = arith.negf %128 : vector<1x32xf32>
    %130 = math.exp %129 : vector<1x32xf32>
    %cst_64 = arith.constant 1.000000e+00 : f32
    %131 = vector.broadcast %cst_64 : f32 to vector<1x32xf32>
    %132 = arith.addf %131, %130 : vector<1x32xf32>
    %133 = arith.divf %131, %132 : vector<1x32xf32>
    %134 = vector.extract_strided_slice %121 {offsets = [0, 64], sizes = [1, 32], strides = [1, 1]} : vector<1x128xf32> to vector<1x32xf32>
    %135 = math.tanh %134 : vector<1x32xf32>
    %136 = vector.extract_strided_slice %121 {offsets = [0, 96], sizes = [1, 32], strides = [1, 1]} : vector<1x128xf32> to vector<1x32xf32>
    %137 = arith.negf %136 : vector<1x32xf32>
    %138 = math.exp %137 : vector<1x32xf32>
    %cst_65 = arith.constant 1.000000e+00 : f32
    %139 = vector.broadcast %cst_65 : f32 to vector<1x32xf32>
    %140 = arith.addf %139, %138 : vector<1x32xf32>
    %141 = arith.divf %139, %140 : vector<1x32xf32>
    %142 = arith.mulf %133, %58 : vector<1x32xf32>
    %143 = arith.mulf %127, %135 : vector<1x32xf32>
    %144 = arith.addf %142, %143 : vector<1x32xf32>
    %145 = math.tanh %144 : vector<1x32xf32>
    %146 = arith.mulf %141, %145 : vector<1x32xf32>
    %cst_66 = arith.constant dense<0.000000e+00> : vector<1x512xf32>
    %147 = tpu.matmul %146, %12, %cst_66 {dimension_numbers = #tpu.dot_dimension_numbers<[1], [0], [0], [1], [0, 0, 1, 1], [], []>} : vector<1x32xf32>, vector<32x512xf32>, vector<1x512xf32> -> vector<1x512xf32>
    %148 = tpu.concatenate %77, %79 in 1 : vector<1x16xf32>, vector<1x16xf32> -> vector<1x32xf32>
    %cst_67 = arith.constant dense<0.000000e+00> : vector<1x512xf32>
    %149 = tpu.matmul %148, %13, %cst_67 {dimension_numbers = #tpu.dot_dimension_numbers<[1], [0], [0], [1], [0, 0, 1, 1], [], []>} : vector<1x32xf32>, vector<32x512xf32>, vector<1x512xf32> -> vector<1x512xf32>
    %150 = arith.addf %147, %5 : vector<1x512xf32>
    %151 = arith.addf %150, %149 : vector<1x512xf32>
    %152 = math.tanh %151 : vector<1x512xf32>
    %cst_68 = arith.constant dense<0.000000e+00> : vector<1x16xf32>
    %153 = tpu.matmul %152, %14, %cst_68 {dimension_numbers = #tpu.dot_dimension_numbers<[1], [0], [0], [1], [0, 0, 1, 1], [], []>} : vector<1x512xf32>, vector<512x16xf32>, vector<1x16xf32> -> vector<1x16xf32>
    %154 = arith.addf %153, %7 : vector<1x16xf32>
    %cst_69 = arith.constant dense<0xFF800000> : vector<1xf32>
    %155 = vector.multi_reduction <maximumf>, %154, %cst_69 [1] : vector<1x16xf32> to vector<1xf32>
    %156 = vector.shape_cast %155 : vector<1xf32> to vector<1x1xf32>
    %157 = vector.broadcast %156 : vector<1x1xf32> to vector<1x16xf32>
    %158 = arith.subf %154, %157 : vector<1x16xf32>
    %159 = math.exp %158 : vector<1x16xf32>
    %cst_70 = arith.constant dense<0.000000e+00> : vector<1xf32>
    %160 = vector.multi_reduction <add>, %159, %cst_70 [1] : vector<1x16xf32> to vector<1xf32>
    %161 = vector.shape_cast %160 : vector<1xf32> to vector<1x1xf32>
    %162 = vector.broadcast %161 : vector<1x1xf32> to vector<1x16xf32>
    %163 = arith.divf %159, %162 : vector<1x16xf32>
    %cst_71 = arith.constant dense<0.000000e+00> : vector<1x32xf32>
    %164 = tpu.matmul %163, %3, %cst_71 {dimension_numbers = #tpu.dot_dimension_numbers<[1], [0], [0], [1], [0, 0, 1, 1], [], []>} : vector<1x16xf32>, vector<16x32xf32>, vector<1x32xf32> -> vector<1x32xf32>
    %165 = arith.addf %79, %163 : vector<1x16xf32>
    %166 = tpu.concatenate %146, %164, %107 in 1 : vector<1x32xf32>, vector<1x32xf32>, vector<1x32xf32> -> vector<1x96xf32>
    %cst_72 = arith.constant dense<0.000000e+00> : vector<1x128xf32>
    %167 = tpu.matmul %166, %15, %cst_72 {dimension_numbers = #tpu.dot_dimension_numbers<[1], [0], [0], [1], [0, 0, 1, 1], [], []>} : vector<1x96xf32>, vector<96x128xf32>, vector<1x128xf32> -> vector<1x128xf32>
    %168 = arith.addf %167, %16 : vector<1x128xf32>
    %169 = vector.extract_strided_slice %168 {offsets = [0, 0], sizes = [1, 32], strides = [1, 1]} : vector<1x128xf32> to vector<1x32xf32>
    %170 = arith.negf %169 : vector<1x32xf32>
    %171 = math.exp %170 : vector<1x32xf32>
    %cst_73 = arith.constant 1.000000e+00 : f32
    %172 = vector.broadcast %cst_73 : f32 to vector<1x32xf32>
    %173 = arith.addf %172, %171 : vector<1x32xf32>
    %174 = arith.divf %172, %173 : vector<1x32xf32>
    %175 = vector.extract_strided_slice %168 {offsets = [0, 32], sizes = [1, 32], strides = [1, 1]} : vector<1x128xf32> to vector<1x32xf32>
    %176 = arith.negf %175 : vector<1x32xf32>
    %177 = math.exp %176 : vector<1x32xf32>
    %cst_74 = arith.constant 1.000000e+00 : f32
    %178 = vector.broadcast %cst_74 : f32 to vector<1x32xf32>
    %179 = arith.addf %178, %177 : vector<1x32xf32>
    %180 = arith.divf %178, %179 : vector<1x32xf32>
    %181 = vector.extract_strided_slice %168 {offsets = [0, 64], sizes = [1, 32], strides = [1, 1]} : vector<1x128xf32> to vector<1x32xf32>
    %182 = math.tanh %181 : vector<1x32xf32>
    %183 = vector.extract_strided_slice %168 {offsets = [0, 96], sizes = [1, 32], strides = [1, 1]} : vector<1x128xf32> to vector<1x32xf32>
    %184 = arith.negf %183 : vector<1x32xf32>
    %185 = math.exp %184 : vector<1x32xf32>
    %cst_75 = arith.constant 1.000000e+00 : f32
    %186 = vector.broadcast %cst_75 : f32 to vector<1x32xf32>
    %187 = arith.addf %186, %185 : vector<1x32xf32>
    %188 = arith.divf %186, %187 : vector<1x32xf32>
    %189 = arith.mulf %180, %105 : vector<1x32xf32>
    %190 = arith.mulf %174, %182 : vector<1x32xf32>
    %191 = arith.addf %189, %190 : vector<1x32xf32>
    %192 = math.tanh %191 : vector<1x32xf32>
    %193 = arith.mulf %188, %192 : vector<1x32xf32>
    %194 = tpu.concatenate %193, %164 in 1 : vector<1x32xf32>, vector<1x32xf32> -> vector<1x64xf32>
    %cst_76 = arith.constant dense<0.000000e+00> : vector<1x17xf32>
    %195 = tpu.matmul %194, %17, %cst_76 {dimension_numbers = #tpu.dot_dimension_numbers<[1], [0], [0], [1], [0, 0, 1, 1], [], []>} : vector<1x64xf32>, vector<64x17xf32>, vector<1x17xf32> -> vector<1x17xf32>
    %196 = arith.addf %195, %18 : vector<1x17xf32>
    %197 = tpu.concatenate %196, %163 in 1 : vector<1x17xf32>, vector<1x16xf32> -> vector<1x33xf32>
    %198 = vector.extract_strided_slice %1 {offsets = [2, 0], sizes = [1, 16], strides = [1, 1]} : vector<4x16xf32> to vector<1x16xf32>
    %cst_77 = arith.constant dense<0.000000e+00> : vector<1x32xf32>
    %199 = tpu.matmul %198, %8, %cst_77 {dimension_numbers = #tpu.dot_dimension_numbers<[1], [0], [0], [1], [0, 0, 1, 1], [], []>} : vector<1x16xf32>, vector<16x32xf32>, vector<1x32xf32> -> vector<1x32xf32>
    %cst_78 = arith.constant 0.000000e+00 : f32
    %200 = vector.broadcast %cst_78 : f32 to vector<1x32xf32>
    %201 = arith.maximumf %199, %200 : vector<1x32xf32>
    %cst_79 = arith.constant dense<0.000000e+00> : vector<1x32xf32>
    %202 = tpu.matmul %201, %9, %cst_79 {dimension_numbers = #tpu.dot_dimension_numbers<[1], [0], [0], [1], [0, 0, 1, 1], [], []>} : vector<1x32xf32>, vector<32x32xf32>, vector<1x32xf32> -> vector<1x32xf32>
    %cst_80 = arith.constant 0.000000e+00 : f32
    %203 = vector.broadcast %cst_80 : f32 to vector<1x32xf32>
    %204 = arith.maximumf %202, %203 : vector<1x32xf32>
    %205 = tpu.concatenate %204, %164, %146 in 1 : vector<1x32xf32>, vector<1x32xf32>, vector<1x32xf32> -> vector<1x96xf32>
    %cst_81 = arith.constant dense<0.000000e+00> : vector<1x128xf32>
    %206 = tpu.matmul %205, %10, %cst_81 {dimension_numbers = #tpu.dot_dimension_numbers<[1], [0], [0], [1], [0, 0, 1, 1], [], []>} : vector<1x96xf32>, vector<96x128xf32>, vector<1x128xf32> -> vector<1x128xf32>
    %207 = arith.addf %206, %11 : vector<1x128xf32>
    %208 = vector.extract_strided_slice %207 {offsets = [0, 0], sizes = [1, 32], strides = [1, 1]} : vector<1x128xf32> to vector<1x32xf32>
    %209 = arith.negf %208 : vector<1x32xf32>
    %210 = math.exp %209 : vector<1x32xf32>
    %cst_82 = arith.constant 1.000000e+00 : f32
    %211 = vector.broadcast %cst_82 : f32 to vector<1x32xf32>
    %212 = arith.addf %211, %210 : vector<1x32xf32>
    %213 = arith.divf %211, %212 : vector<1x32xf32>
    %214 = vector.extract_strided_slice %207 {offsets = [0, 32], sizes = [1, 32], strides = [1, 1]} : vector<1x128xf32> to vector<1x32xf32>
    %215 = arith.negf %214 : vector<1x32xf32>
    %216 = math.exp %215 : vector<1x32xf32>
    %cst_83 = arith.constant 1.000000e+00 : f32
    %217 = vector.broadcast %cst_83 : f32 to vector<1x32xf32>
    %218 = arith.addf %217, %216 : vector<1x32xf32>
    %219 = arith.divf %217, %218 : vector<1x32xf32>
    %220 = vector.extract_strided_slice %207 {offsets = [0, 64], sizes = [1, 32], strides = [1, 1]} : vector<1x128xf32> to vector<1x32xf32>
    %221 = math.tanh %220 : vector<1x32xf32>
    %222 = vector.extract_strided_slice %207 {offsets = [0, 96], sizes = [1, 32], strides = [1, 1]} : vector<1x128xf32> to vector<1x32xf32>
    %223 = arith.negf %222 : vector<1x32xf32>
    %224 = math.exp %223 : vector<1x32xf32>
    %cst_84 = arith.constant 1.000000e+00 : f32
    %225 = vector.broadcast %cst_84 : f32 to vector<1x32xf32>
    %226 = arith.addf %225, %224 : vector<1x32xf32>
    %227 = arith.divf %225, %226 : vector<1x32xf32>
    %228 = arith.mulf %219, %144 : vector<1x32xf32>
    %229 = arith.mulf %213, %221 : vector<1x32xf32>
    %230 = arith.addf %228, %229 : vector<1x32xf32>
    %231 = math.tanh %230 : vector<1x32xf32>
    %232 = arith.mulf %227, %231 : vector<1x32xf32>
    %cst_85 = arith.constant dense<0.000000e+00> : vector<1x512xf32>
    %233 = tpu.matmul %232, %12, %cst_85 {dimension_numbers = #tpu.dot_dimension_numbers<[1], [0], [0], [1], [0, 0, 1, 1], [], []>} : vector<1x32xf32>, vector<32x512xf32>, vector<1x512xf32> -> vector<1x512xf32>
    %234 = tpu.concatenate %163, %165 in 1 : vector<1x16xf32>, vector<1x16xf32> -> vector<1x32xf32>
    %cst_86 = arith.constant dense<0.000000e+00> : vector<1x512xf32>
    %235 = tpu.matmul %234, %13, %cst_86 {dimension_numbers = #tpu.dot_dimension_numbers<[1], [0], [0], [1], [0, 0, 1, 1], [], []>} : vector<1x32xf32>, vector<32x512xf32>, vector<1x512xf32> -> vector<1x512xf32>
    %236 = arith.addf %233, %5 : vector<1x512xf32>
    %237 = arith.addf %236, %235 : vector<1x512xf32>
    %238 = math.tanh %237 : vector<1x512xf32>
    %cst_87 = arith.constant dense<0.000000e+00> : vector<1x16xf32>
    %239 = tpu.matmul %238, %14, %cst_87 {dimension_numbers = #tpu.dot_dimension_numbers<[1], [0], [0], [1], [0, 0, 1, 1], [], []>} : vector<1x512xf32>, vector<512x16xf32>, vector<1x16xf32> -> vector<1x16xf32>
    %240 = arith.addf %239, %7 : vector<1x16xf32>
    %cst_88 = arith.constant dense<0xFF800000> : vector<1xf32>
    %241 = vector.multi_reduction <maximumf>, %240, %cst_88 [1] : vector<1x16xf32> to vector<1xf32>
    %242 = vector.shape_cast %241 : vector<1xf32> to vector<1x1xf32>
    %243 = vector.broadcast %242 : vector<1x1xf32> to vector<1x16xf32>
    %244 = arith.subf %240, %243 : vector<1x16xf32>
    %245 = math.exp %244 : vector<1x16xf32>
    %cst_89 = arith.constant dense<0.000000e+00> : vector<1xf32>
    %246 = vector.multi_reduction <add>, %245, %cst_89 [1] : vector<1x16xf32> to vector<1xf32>
    %247 = vector.shape_cast %246 : vector<1xf32> to vector<1x1xf32>
    %248 = vector.broadcast %247 : vector<1x1xf32> to vector<1x16xf32>
    %249 = arith.divf %245, %248 : vector<1x16xf32>
    %cst_90 = arith.constant dense<0.000000e+00> : vector<1x32xf32>
    %250 = tpu.matmul %249, %3, %cst_90 {dimension_numbers = #tpu.dot_dimension_numbers<[1], [0], [0], [1], [0, 0, 1, 1], [], []>} : vector<1x16xf32>, vector<16x32xf32>, vector<1x32xf32> -> vector<1x32xf32>
    %251 = arith.addf %165, %249 : vector<1x16xf32>
    %252 = tpu.concatenate %232, %250, %193 in 1 : vector<1x32xf32>, vector<1x32xf32>, vector<1x32xf32> -> vector<1x96xf32>
    %cst_91 = arith.constant dense<0.000000e+00> : vector<1x128xf32>
    %253 = tpu.matmul %252, %15, %cst_91 {dimension_numbers = #tpu.dot_dimension_numbers<[1], [0], [0], [1], [0, 0, 1, 1], [], []>} : vector<1x96xf32>, vector<96x128xf32>, vector<1x128xf32> -> vector<1x128xf32>
    %254 = arith.addf %253, %16 : vector<1x128xf32>
    %255 = vector.extract_strided_slice %254 {offsets = [0, 0], sizes = [1, 32], strides = [1, 1]} : vector<1x128xf32> to vector<1x32xf32>
    %256 = arith.negf %255 : vector<1x32xf32>
    %257 = math.exp %256 : vector<1x32xf32>
    %cst_92 = arith.constant 1.000000e+00 : f32
    %258 = vector.broadcast %cst_92 : f32 to vector<1x32xf32>
    %259 = arith.addf %258, %257 : vector<1x32xf32>
    %260 = arith.divf %258, %259 : vector<1x32xf32>
    %261 = vector.extract_strided_slice %254 {offsets = [0, 32], sizes = [1, 32], strides = [1, 1]} : vector<1x128xf32> to vector<1x32xf32>
    %262 = arith.negf %261 : vector<1x32xf32>
    %263 = math.exp %262 : vector<1x32xf32>
    %cst_93 = arith.constant 1.000000e+00 : f32
    %264 = vector.broadcast %cst_93 : f32 to vector<1x32xf32>
    %265 = arith.addf %264, %263 : vector<1x32xf32>
    %266 = arith.divf %264, %265 : vector<1x32xf32>
    %267 = vector.extract_strided_slice %254 {offsets = [0, 64], sizes = [1, 32], strides = [1, 1]} : vector<1x128xf32> to vector<1x32xf32>
    %268 = math.tanh %267 : vector<1x32xf32>
    %269 = vector.extract_strided_slice %254 {offsets = [0, 96], sizes = [1, 32], strides = [1, 1]} : vector<1x128xf32> to vector<1x32xf32>
    %270 = arith.negf %269 : vector<1x32xf32>
    %271 = math.exp %270 : vector<1x32xf32>
    %cst_94 = arith.constant 1.000000e+00 : f32
    %272 = vector.broadcast %cst_94 : f32 to vector<1x32xf32>
    %273 = arith.addf %272, %271 : vector<1x32xf32>
    %274 = arith.divf %272, %273 : vector<1x32xf32>
    %275 = arith.mulf %266, %191 : vector<1x32xf32>
    %276 = arith.mulf %260, %268 : vector<1x32xf32>
    %277 = arith.addf %275, %276 : vector<1x32xf32>
    %278 = math.tanh %277 : vector<1x32xf32>
    %279 = arith.mulf %274, %278 : vector<1x32xf32>
    %280 = tpu.concatenate %279, %250 in 1 : vector<1x32xf32>, vector<1x32xf32> -> vector<1x64xf32>
    %cst_95 = arith.constant dense<0.000000e+00> : vector<1x17xf32>
    %281 = tpu.matmul %280, %17, %cst_95 {dimension_numbers = #tpu.dot_dimension_numbers<[1], [0], [0], [1], [0, 0, 1, 1], [], []>} : vector<1x64xf32>, vector<64x17xf32>, vector<1x17xf32> -> vector<1x17xf32>
    %282 = arith.addf %281, %18 : vector<1x17xf32>
    %283 = tpu.concatenate %282, %249 in 1 : vector<1x17xf32>, vector<1x16xf32> -> vector<1x33xf32>
    %284 = vector.extract_strided_slice %1 {offsets = [3, 0], sizes = [1, 16], strides = [1, 1]} : vector<4x16xf32> to vector<1x16xf32>
    %cst_96 = arith.constant dense<0.000000e+00> : vector<1x32xf32>
    %285 = tpu.matmul %284, %8, %cst_96 {dimension_numbers = #tpu.dot_dimension_numbers<[1], [0], [0], [1], [0, 0, 1, 1], [], []>} : vector<1x16xf32>, vector<16x32xf32>, vector<1x32xf32> -> vector<1x32xf32>
    %cst_97 = arith.constant 0.000000e+00 : f32
    %286 = vector.broadcast %cst_97 : f32 to vector<1x32xf32>
    %287 = arith.maximumf %285, %286 : vector<1x32xf32>
    %cst_98 = arith.constant dense<0.000000e+00> : vector<1x32xf32>
    %288 = tpu.matmul %287, %9, %cst_98 {dimension_numbers = #tpu.dot_dimension_numbers<[1], [0], [0], [1], [0, 0, 1, 1], [], []>} : vector<1x32xf32>, vector<32x32xf32>, vector<1x32xf32> -> vector<1x32xf32>
    %cst_99 = arith.constant 0.000000e+00 : f32
    %289 = vector.broadcast %cst_99 : f32 to vector<1x32xf32>
    %290 = arith.maximumf %288, %289 : vector<1x32xf32>
    %291 = tpu.concatenate %290, %250, %232 in 1 : vector<1x32xf32>, vector<1x32xf32>, vector<1x32xf32> -> vector<1x96xf32>
    %cst_100 = arith.constant dense<0.000000e+00> : vector<1x128xf32>
    %292 = tpu.matmul %291, %10, %cst_100 {dimension_numbers = #tpu.dot_dimension_numbers<[1], [0], [0], [1], [0, 0, 1, 1], [], []>} : vector<1x96xf32>, vector<96x128xf32>, vector<1x128xf32> -> vector<1x128xf32>
    %293 = arith.addf %292, %11 : vector<1x128xf32>
    %294 = vector.extract_strided_slice %293 {offsets = [0, 0], sizes = [1, 32], strides = [1, 1]} : vector<1x128xf32> to vector<1x32xf32>
    %295 = arith.negf %294 : vector<1x32xf32>
    %296 = math.exp %295 : vector<1x32xf32>
    %cst_101 = arith.constant 1.000000e+00 : f32
    %297 = vector.broadcast %cst_101 : f32 to vector<1x32xf32>
    %298 = arith.addf %297, %296 : vector<1x32xf32>
    %299 = arith.divf %297, %298 : vector<1x32xf32>
    %300 = vector.extract_strided_slice %293 {offsets = [0, 32], sizes = [1, 32], strides = [1, 1]} : vector<1x128xf32> to vector<1x32xf32>
    %301 = arith.negf %300 : vector<1x32xf32>
    %302 = math.exp %301 : vector<1x32xf32>
    %cst_102 = arith.constant 1.000000e+00 : f32
    %303 = vector.broadcast %cst_102 : f32 to vector<1x32xf32>
    %304 = arith.addf %303, %302 : vector<1x32xf32>
    %305 = arith.divf %303, %304 : vector<1x32xf32>
    %306 = vector.extract_strided_slice %293 {offsets = [0, 64], sizes = [1, 32], strides = [1, 1]} : vector<1x128xf32> to vector<1x32xf32>
    %307 = math.tanh %306 : vector<1x32xf32>
    %308 = vector.extract_strided_slice %293 {offsets = [0, 96], sizes = [1, 32], strides = [1, 1]} : vector<1x128xf32> to vector<1x32xf32>
    %309 = arith.negf %308 : vector<1x32xf32>
    %310 = math.exp %309 : vector<1x32xf32>
    %cst_103 = arith.constant 1.000000e+00 : f32
    %311 = vector.broadcast %cst_103 : f32 to vector<1x32xf32>
    %312 = arith.addf %311, %310 : vector<1x32xf32>
    %313 = arith.divf %311, %312 : vector<1x32xf32>
    %314 = arith.mulf %305, %230 : vector<1x32xf32>
    %315 = arith.mulf %299, %307 : vector<1x32xf32>
    %316 = arith.addf %314, %315 : vector<1x32xf32>
    %317 = math.tanh %316 : vector<1x32xf32>
    %318 = arith.mulf %313, %317 : vector<1x32xf32>
    %cst_104 = arith.constant dense<0.000000e+00> : vector<1x512xf32>
    %319 = tpu.matmul %318, %12, %cst_104 {dimension_numbers = #tpu.dot_dimension_numbers<[1], [0], [0], [1], [0, 0, 1, 1], [], []>} : vector<1x32xf32>, vector<32x512xf32>, vector<1x512xf32> -> vector<1x512xf32>
    %320 = tpu.concatenate %249, %251 in 1 : vector<1x16xf32>, vector<1x16xf32> -> vector<1x32xf32>
    %cst_105 = arith.constant dense<0.000000e+00> : vector<1x512xf32>
    %321 = tpu.matmul %320, %13, %cst_105 {dimension_numbers = #tpu.dot_dimension_numbers<[1], [0], [0], [1], [0, 0, 1, 1], [], []>} : vector<1x32xf32>, vector<32x512xf32>, vector<1x512xf32> -> vector<1x512xf32>
    %322 = arith.addf %319, %5 : vector<1x512xf32>
    %323 = arith.addf %322, %321 : vector<1x512xf32>
    %324 = math.tanh %323 : vector<1x512xf32>
    %cst_106 = arith.constant dense<0.000000e+00> : vector<1x16xf32>
    %325 = tpu.matmul %324, %14, %cst_106 {dimension_numbers = #tpu.dot_dimension_numbers<[1], [0], [0], [1], [0, 0, 1, 1], [], []>} : vector<1x512xf32>, vector<512x16xf32>, vector<1x16xf32> -> vector<1x16xf32>
    %326 = arith.addf %325, %7 : vector<1x16xf32>
    %cst_107 = arith.constant dense<0xFF800000> : vector<1xf32>
    %327 = vector.multi_reduction <maximumf>, %326, %cst_107 [1] : vector<1x16xf32> to vector<1xf32>
    %328 = vector.shape_cast %327 : vector<1xf32> to vector<1x1xf32>
    %329 = vector.broadcast %328 : vector<1x1xf32> to vector<1x16xf32>
    %330 = arith.subf %326, %329 : vector<1x16xf32>
    %331 = math.exp %330 : vector<1x16xf32>
    %cst_108 = arith.constant dense<0.000000e+00> : vector<1xf32>
    %332 = vector.multi_reduction <add>, %331, %cst_108 [1] : vector<1x16xf32> to vector<1xf32>
    %333 = vector.shape_cast %332 : vector<1xf32> to vector<1x1xf32>
    %334 = vector.broadcast %333 : vector<1x1xf32> to vector<1x16xf32>
    %335 = arith.divf %331, %334 : vector<1x16xf32>
    %cst_109 = arith.constant dense<0.000000e+00> : vector<1x32xf32>
    %336 = tpu.matmul %335, %3, %cst_109 {dimension_numbers = #tpu.dot_dimension_numbers<[1], [0], [0], [1], [0, 0, 1, 1], [], []>} : vector<1x16xf32>, vector<16x32xf32>, vector<1x32xf32> -> vector<1x32xf32>
    %337 = tpu.concatenate %318, %336, %279 in 1 : vector<1x32xf32>, vector<1x32xf32>, vector<1x32xf32> -> vector<1x96xf32>
    %cst_110 = arith.constant dense<0.000000e+00> : vector<1x128xf32>
    %338 = tpu.matmul %337, %15, %cst_110 {dimension_numbers = #tpu.dot_dimension_numbers<[1], [0], [0], [1], [0, 0, 1, 1], [], []>} : vector<1x96xf32>, vector<96x128xf32>, vector<1x128xf32> -> vector<1x128xf32>
    %339 = arith.addf %338, %16 : vector<1x128xf32>
    %340 = vector.extract_strided_slice %339 {offsets = [0, 0], sizes = [1, 32], strides = [1, 1]} : vector<1x128xf32> to vector<1x32xf32>
    %341 = arith.negf %340 : vector<1x32xf32>
    %342 = math.exp %341 : vector<1x32xf32>
    %cst_111 = arith.constant 1.000000e+00 : f32
    %343 = vector.broadcast %cst_111 : f32 to vector<1x32xf32>
    %344 = arith.addf %343, %342 : vector<1x32xf32>
    %345 = arith.divf %343, %344 : vector<1x32xf32>
    %346 = vector.extract_strided_slice %339 {offsets = [0, 32], sizes = [1, 32], strides = [1, 1]} : vector<1x128xf32> to vector<1x32xf32>
    %347 = arith.negf %346 : vector<1x32xf32>
    %348 = math.exp %347 : vector<1x32xf32>
    %cst_112 = arith.constant 1.000000e+00 : f32
    %349 = vector.broadcast %cst_112 : f32 to vector<1x32xf32>
    %350 = arith.addf %349, %348 : vector<1x32xf32>
    %351 = arith.divf %349, %350 : vector<1x32xf32>
    %352 = vector.extract_strided_slice %339 {offsets = [0, 64], sizes = [1, 32], strides = [1, 1]} : vector<1x128xf32> to vector<1x32xf32>
    %353 = math.tanh %352 : vector<1x32xf32>
    %354 = vector.extract_strided_slice %339 {offsets = [0, 96], sizes = [1, 32], strides = [1, 1]} : vector<1x128xf32> to vector<1x32xf32>
    %355 = arith.negf %354 : vector<1x32xf32>
    %356 = math.exp %355 : vector<1x32xf32>
    %cst_113 = arith.constant 1.000000e+00 : f32
    %357 = vector.broadcast %cst_113 : f32 to vector<1x32xf32>
    %358 = arith.addf %357, %356 : vector<1x32xf32>
    %359 = arith.divf %357, %358 : vector<1x32xf32>
    %360 = arith.mulf %351, %277 : vector<1x32xf32>
    %361 = arith.mulf %345, %353 : vector<1x32xf32>
    %362 = arith.addf %360, %361 : vector<1x32xf32>
    %363 = math.tanh %362 : vector<1x32xf32>
    %364 = arith.mulf %359, %363 : vector<1x32xf32>
    %365 = tpu.concatenate %364, %336 in 1 : vector<1x32xf32>, vector<1x32xf32> -> vector<1x64xf32>
    %cst_114 = arith.constant dense<0.000000e+00> : vector<1x17xf32>
    %366 = tpu.matmul %365, %17, %cst_114 {dimension_numbers = #tpu.dot_dimension_numbers<[1], [0], [0], [1], [0, 0, 1, 1], [], []>} : vector<1x64xf32>, vector<64x17xf32>, vector<1x17xf32> -> vector<1x17xf32>
    %367 = arith.addf %366, %18 : vector<1x17xf32>
    %368 = tpu.concatenate %367, %335 in 1 : vector<1x17xf32>, vector<1x16xf32> -> vector<1x33xf32>
    %369 = tpu.concatenate %111, %197, %283, %368 in 0 : vector<1x33xf32>, vector<1x33xf32>, vector<1x33xf32>, vector<1x33xf32> -> vector<4x33xf32>
    %c0_115 = arith.constant 0 : index
    %c0_116 = arith.constant 0 : index
    %c0_117 = arith.constant 0 : index
    %370 = vector.load %arg16[%c0_115, %c0_116, %c0_117] : memref<1x4x33xf32, #tpu.memory_space<vmem>>, vector<1x4x33xf32>
    %371 = vector.shape_cast %370 : vector<1x4x33xf32> to vector<4x33xf32>
    %372 = vector.shape_cast %369 : vector<4x33xf32> to vector<1x4x33xf32>
    tpu.vector_store %arg16[%c0_115, %c0_116, %c0_117], %372 {strides = array<i32>} : memref<1x4x33xf32, #tpu.memory_space<vmem>>, vector<1x4x33xf32>,
    return
  }
  func.func @transform_0(%arg0: i32) -> (i32, i32, i32) {
    %c0_i32 = arith.constant 0 : i32
    %c0_i32_0 = arith.constant 0 : i32
    %c0_i32_1 = arith.constant 0 : i32
    return %arg0, %c0_i32, %c0_i32_0 : i32, i32, i32
  }
  func.func @transform_1(%arg0: i32) -> (i32, i32, i32) {
    %c0_i32 = arith.constant 0 : i32
    %c0_i32_0 = arith.constant 0 : i32
    %c0_i32_1 = arith.constant 0 : i32
    return %arg0, %c0_i32, %c0_i32_0 : i32, i32, i32
  }
  func.func @transform_2(%arg0: i32) -> (i32, i32, i32) {
    %c0_i32 = arith.constant 0 : i32
    %c0_i32_0 = arith.constant 0 : i32
    %c0_i32_1 = arith.constant 0 : i32
    return %arg0, %c0_i32, %c0_i32_0 : i32, i32, i32
  }
  func.func @transform_3(%arg0: i32) -> (i32, i32, i32) {
    %c0_i32 = arith.constant 0 : i32
    %c0_i32_0 = arith.constant 0 : i32
    %c0_i32_1 = arith.constant 0 : i32
    return %arg0, %c0_i32, %c0_i32_0 : i32, i32, i32
  }
  func.func @transform_4(%arg0: i32) -> (i32, i32) {
    %c0_i32 = arith.constant 0 : i32
    %c0_i32_0 = arith.constant 0 : i32
    %c0_i32_1 = arith.constant 0 : i32
    return %c0_i32, %c0_i32_0 : i32, i32
  }
  func.func @transform_5(%arg0: i32) -> (i32, i32) {
    %c0_i32 = arith.constant 0 : i32
    %c0_i32_0 = arith.constant 0 : i32
    %c0_i32_1 = arith.constant 0 : i32
    return %c0_i32, %c0_i32_0 : i32, i32
  }
  func.func @transform_6(%arg0: i32) -> (i32, i32) {
    %c0_i32 = arith.constant 0 : i32
    %c0_i32_0 = arith.constant 0 : i32
    %c0_i32_1 = arith.constant 0 : i32
    return %c0_i32, %c0_i32_0 : i32, i32
  }
  func.func @transform_7(%arg0: i32) -> (i32, i32) {
    %c0_i32 = arith.constant 0 : i32
    %c0_i32_0 = arith.constant 0 : i32
    %c0_i32_1 = arith.constant 0 : i32
    return %c0_i32, %c0_i32_0 : i32, i32
  }
  func.func @transform_8(%arg0: i32) -> (i32, i32) {
    %c0_i32 = arith.constant 0 : i32
    %c0_i32_0 = arith.constant 0 : i32
    %c0_i32_1 = arith.constant 0 : i32
    return %c0_i32, %c0_i32_0 : i32, i32
  }
  func.func @transform_9(%arg0: i32) -> (i32, i32) {
    %c0_i32 = arith.constant 0 : i32
    %c0_i32_0 = arith.constant 0 : i32
    %c0_i32_1 = arith.constant 0 : i32
    return %c0_i32, %c0_i32_0 : i32, i32
  }
  func.func @transform_10(%arg0: i32) -> (i32, i32) {
    %c0_i32 = arith.constant 0 : i32
    %c0_i32_0 = arith.constant 0 : i32
    %c0_i32_1 = arith.constant 0 : i32
    return %c0_i32, %c0_i32_0 : i32, i32
  }
  func.func @transform_11(%arg0: i32) -> (i32, i32) {
    %c0_i32 = arith.constant 0 : i32
    %c0_i32_0 = arith.constant 0 : i32
    %c0_i32_1 = arith.constant 0 : i32
    return %c0_i32, %c0_i32_0 : i32, i32
  }
  func.func @transform_12(%arg0: i32) -> (i32, i32) {
    %c0_i32 = arith.constant 0 : i32
    %c0_i32_0 = arith.constant 0 : i32
    %c0_i32_1 = arith.constant 0 : i32
    return %c0_i32, %c0_i32_0 : i32, i32
  }
  func.func @transform_13(%arg0: i32) -> (i32, i32) {
    %c0_i32 = arith.constant 0 : i32
    %c0_i32_0 = arith.constant 0 : i32
    %c0_i32_1 = arith.constant 0 : i32
    return %c0_i32, %c0_i32_0 : i32, i32
  }
  func.func @transform_14(%arg0: i32) -> (i32, i32) {
    %c0_i32 = arith.constant 0 : i32
    %c0_i32_0 = arith.constant 0 : i32
    %c0_i32_1 = arith.constant 0 : i32
    return %c0_i32, %c0_i32_0 : i32, i32
  }
  func.func @transform_15(%arg0: i32) -> (i32, i32, i32) {
    %c0_i32 = arith.constant 0 : i32
    %c0_i32_0 = arith.constant 0 : i32
    %c0_i32_1 = arith.constant 0 : i32
    return %arg0, %c0_i32, %c0_i32_0 : i32, i32, i32
  }
}

</mosaic_0001>

<llo_original>
// kernel: tpu_custom_call.1
$region0: #{tpu_custom_call.1}
  #allocation0 [shape = 'u32[]', space=smem, size = 0x4, offset = 0x4, fixed_abs, tag = 'smem constant byte address 0x4 - core index']
  #allocation1 [shape = 'u32[144,128]{1,0:T(1,128)}', space=vmem, size = 0x12000, scoped, tag = 'internal scratch']
  %s0 = inlined_call_operand.vmem [shape: f32[2,4,16], index: 0, kind: input, shape index: {}]
  %s1 = inlined_call_operand.vmem [shape: f32[2,16,32], index: 1, kind: input, shape index: {}]
  %s2 = inlined_call_operand.vmem [shape: f32[2,1,512], index: 2, kind: input, shape index: {}]
  %s3 = inlined_call_operand.vmem [shape: f32[2,1,16], index: 3, kind: input, shape index: {}]
  %s4 = inlined_call_operand.vmem [shape: f32[16,32], index: 4, kind: input, shape index: {}]
  %s5 = inlined_call_operand.vmem [shape: f32[32,32], index: 5, kind: input, shape index: {}]
  %s6 = inlined_call_operand.vmem [shape: f32[96,128], index: 6, kind: input, shape index: {}]
  %s7 = inlined_call_operand.vmem [shape: f32[1,128], index: 7, kind: input, shape index: {}]
  %s8 = inlined_call_operand.vmem [shape: f32[32,512], index: 8, kind: input, shape index: {}]
  %s9 = inlined_call_operand.vmem [shape: f32[32,512], index: 9, kind: input, shape index: {}]
  %s10 = inlined_call_operand.vmem [shape: f32[512,16], index: 10, kind: input, shape index: {}]
  %s11 = inlined_call_operand.vmem [shape: f32[96,128], index: 11, kind: input, shape index: {}]
  %s12 = inlined_call_operand.vmem [shape: f32[1,128], index: 12, kind: input, shape index: {}]
  %s13 = inlined_call_operand.vmem [shape: f32[64,17], index: 13, kind: input, shape index: {}]
  %s14 = inlined_call_operand.vmem [shape: f32[1,17], index: 14, kind: input, shape index: {}]
  %s15 = inlined_call_operand.hbm [shape: f32[2,4,33], index: 15, kind: output, shape index: {}]
  %s16 = sld [smem:[#allocation0]]
  $region93: #{tpu_custom_call.1} parent=0
    _
  %s18 = ssub.s32 1, %s16
  %s19 = scalar_select 0, %s18, %s16
  $region1: #{tpu_custom_call.1} parent=0
    #allocation2 [shape = 'u8[4096]{0}', space=vmem, size = 0x1000, scoped, tag = 'output window, operand 0']
    #allocation3 [shape = 's32[2]{0}', space=sflag, size = 0x8, scoped, tag = 'scoped memory for tpu_custom_call.1']
    %20 = vsyncpa [#allocation3], 0
    %s21 = scalar_lea.sflag [#allocation3], 1
    %22 = vsyncpa %s21, 0
    loop: start=0, step=1, limit=4
    $region2: #{tpu_custom_call.1} parent=1 // loop_pre_header
      _
    $region3: #{tpu_custom_call.1} parent=1 // loop_header
      %s24 = sphi 0, %s28
      %p25 = scmp.ge.s32.totalorder %s24, 4
      %s34 = sphi 0, %s36
      %s37 = sphi 0, %s34
      %s38 = sphi 0, %s37
      %s54 = sphi 0, %s38
      %s60 = sphi 0, %s62
      %s63 = sphi 0, %s60
      %s64 = sphi 0, %s63
      %s80 = sphi 0, %s64
      %s86 = sphi 0, %s88
      %s89 = sphi 0, %s86
      %s90 = sphi 0, %s89
      %s106 = sphi 0, %s90
      %s112 = sphi 0, %s114
      %s115 = sphi 0, %s112
      %s116 = sphi 0, %s115
      %s132 = sphi 0, %s116
      %s136 = sphi 0, %s136
      %s138 = sphi 0, %s136
      %s139 = sphi 0, %s138
      %s153 = sphi 0, %s139
      %s157 = sphi 0, %s157
      %s159 = sphi 0, %s157
      %s160 = sphi 0, %s159
      %s174 = sphi 0, %s160
      %s178 = sphi 0, %s178
      %s180 = sphi 0, %s178
      %s181 = sphi 0, %s180
      %s195 = sphi 0, %s181
      %s199 = sphi 0, %s199
      %s201 = sphi 0, %s199
      %s202 = sphi 0, %s201
      %s216 = sphi 0, %s202
      %s220 = sphi 0, %s220
      %s222 = sphi 0, %s220
      %s223 = sphi 0, %s222
      %s237 = sphi 0, %s223
      %s241 = sphi 0, %s241
      %s243 = sphi 0, %s241
      %s244 = sphi 0, %s243
      %s258 = sphi 0, %s244
      %s262 = sphi 0, %s262
      %s264 = sphi 0, %s262
      %s265 = sphi 0, %s264
      %s279 = sphi 0, %s265
      %s283 = sphi 0, %s283
      %s285 = sphi 0, %s283
      %s286 = sphi 0, %s285
      %s300 = sphi 0, %s286
      %s304 = sphi 0, %s304
      %s306 = sphi 0, %s304
      %s307 = sphi 0, %s306
      %s321 = sphi 0, %s307
      %s325 = sphi 0, %s325
      %s327 = sphi 0, %s325
      %s328 = sphi 0, %s327
      %s342 = sphi 0, %s328
      %s346 = sphi 0, %s346
      %s348 = sphi 0, %s346
      %s349 = sphi 0, %s348
      %s363 = sphi 0, %s349
      %s369 = sphi 0, %s371
      %s372 = sphi 0, %s369
      %s373 = sphi 0, %s372
      %s389 = sphi 0, %s373
    $region4: #{tpu_custom_call.1} parent=1 // loop_header_branch
      %27 = sbr.rel (%p25) target = $region8
    $region5: #{tpu_custom_call.1} parent=1 // loop_body
      %s29 = ssub.s32 %s24, 1
      %s30 = ssub.s32 %s24, 2
      %s31 = sadd.s32 %s24, 1
      %s32 = ssub.s32 %s24, %s31
      %p33 = scmp.eq.s32.totalorder %s32, 0
      %s35 = sadd.s32 %s34, 1
      %s36 = scalar_select %p33, %s34, %s35
      %p39 = pneg %p33
      %p40 = scmp.eq.s32.totalorder %s24, 1
      %p41 = por %p39, %p40
      %p42 = scmp.ne.s32.totalorder %s34, %s37
      %p43 = scmp.eq.s32.totalorder %s24, 0
      %p44 = por %p42, %p43
      %p45 = scmp.ne.s32.totalorder %s34, %s37
      %p46 = scmp.eq.s32.totalorder %s29, 1
      %p47 = por %p45, %p46
      %p48 = scmp.ne.s32.totalorder %s37, %s38
      %p49 = scmp.eq.s32.totalorder %s29, 0
      %p50 = por %p48, %p49
      %p51 = scmp.ne.s32.totalorder %s37, %s38
      %p52 = scmp.eq.s32.totalorder %s30, 1
      %p53 = por %p51, %p52
      %p55 = scmp.ne.s32.totalorder %s38, %s54
      %p56 = scmp.eq.s32.totalorder %s30, 0
      %p57 = por %p55, %p56
      %s58 = ssub.s32 %s24, %s31
      %p59 = scmp.eq.s32.totalorder %s58, 0
      %s61 = sadd.s32 %s60, 1
      %s62 = scalar_select %p59, %s60, %s61
      %p65 = pneg %p59
      %p66 = scmp.eq.s32.totalorder %s24, 1
      %p67 = por %p65, %p66
      %p68 = scmp.ne.s32.totalorder %s60, %s63
      %p69 = scmp.eq.s32.totalorder %s24, 0
      %p70 = por %p68, %p69
      %p71 = scmp.ne.s32.totalorder %s60, %s63
      %p72 = scmp.eq.s32.totalorder %s29, 1
      %p73 = por %p71, %p72
      %p74 = scmp.ne.s32.totalorder %s63, %s64
      %p75 = scmp.eq.s32.totalorder %s29, 0
      %p76 = por %p74, %p75
      %p77 = scmp.ne.s32.totalorder %s63, %s64
      %p78 = scmp.eq.s32.totalorder %s30, 1
      %p79 = por %p77, %p78
      %p81 = scmp.ne.s32.totalorder %s64, %s80
      %p82 = scmp.eq.s32.totalorder %s30, 0
      %p83 = por %p81, %p82
      %s84 = ssub.s32 %s24, %s31
      %p85 = scmp.eq.s32.totalorder %s84, 0
      %s87 = sadd.s32 %s86, 1
      %s88 = scalar_select %p85, %s86, %s87
      %p91 = pneg %p85
      %p92 = scmp.eq.s32.totalorder %s24, 1
      %p93 = por %p91, %p92
      %p94 = scmp.ne.s32.totalorder %s86, %s89
      %p95 = scmp.eq.s32.totalorder %s24, 0
      %p96 = por %p94, %p95
      %p97 = scmp.ne.s32.totalorder %s86, %s89
      %p98 = scmp.eq.s32.totalorder %s29, 1
      %p99 = por %p97, %p98
      %p100 = scmp.ne.s32.totalorder %s89, %s90
      %p101 = scmp.eq.s32.totalorder %s29, 0
      %p102 = por %p100, %p101
      %p103 = scmp.ne.s32.totalorder %s89, %s90
      %p104 = scmp.eq.s32.totalorder %s30, 1
      %p105 = por %p103, %p104
      %p107 = scmp.ne.s32.totalorder %s90, %s106
      %p108 = scmp.eq.s32.totalorder %s30, 0
      %p109 = por %p107, %p108
      %s110 = ssub.s32 %s24, %s31
      %p111 = scmp.eq.s32.totalorder %s110, 0
      %s113 = sadd.s32 %s112, 1
      %s114 = scalar_select %p111, %s112, %s113
      %p117 = pneg %p111
      %p118 = scmp.eq.s32.totalorder %s24, 1
      %p119 = por %p117, %p118
      %p120 = scmp.ne.s32.totalorder %s112, %s115
      %p121 = scmp.eq.s32.totalorder %s24, 0
      %p122 = por %p120, %p121
      %p123 = scmp.ne.s32.totalorder %s112, %s115
      %p124 = scmp.eq.s32.totalorder %s29, 1
      %p125 = por %p123, %p124
      %p126 = scmp.ne.s32.totalorder %s115, %s116
      %p127 = scmp.eq.s32.totalorder %s29, 0
      %p128 = por %p126, %p127
      %p129 = scmp.ne.s32.totalorder %s115, %s116
      %p130 = scmp.eq.s32.totalorder %s30, 1
      %p131 = por %p129, %p130
      %p133 = scmp.ne.s32.totalorder %s116, %s132
      %p134 = scmp.eq.s32.totalorder %s30, 0
      %p135 = por %p133, %p134
      %s137 = sadd.s32 %s136, 1
      %p140 = scmp.eq.s32.totalorder %s24, 1
      %p141 = scmp.ne.s32.totalorder %s136, %s138
      %p142 = scmp.eq.s32.totalorder %s24, 0
      %p143 = por %p141, %p142
      %p144 = scmp.ne.s32.totalorder %s136, %s138
      %p145 = scmp.eq.s32.totalorder %s29, 1
      %p146 = por %p144, %p145
      %p147 = scmp.ne.s32.totalorder %s138, %s139
      %p148 = scmp.eq.s32.totalorder %s29, 0
      %p149 = por %p147, %p148
      %p150 = scmp.ne.s32.totalorder %s138, %s139
      %p151 = scmp.eq.s32.totalorder %s30, 1
      %p152 = por %p150, %p151
      %p154 = scmp.ne.s32.totalorder %s139, %s153
      %p155 = scmp.eq.s32.totalorder %s30, 0
      %p156 = por %p154, %p155
      %s158 = sadd.s32 %s157, 1
      %p161 = scmp.eq.s32.totalorder %s24, 1
      %p162 = scmp.ne.s32.totalorder %s157, %s159
      %p163 = scmp.eq.s32.totalorder %s24, 0
      %p164 = por %p162, %p163
      %p165 = scmp.ne.s32.totalorder %s157, %s159
      %p166 = scmp.eq.s32.totalorder %s29, 1
      %p167 = por %p165, %p166
      %p168 = scmp.ne.s32.totalorder %s159, %s160
      %p169 = scmp.eq.s32.totalorder %s29, 0
      %p170 = por %p168, %p169
      %p171 = scmp.ne.s32.totalorder %s159, %s160
      %p172 = scmp.eq.s32.totalorder %s30, 1
      %p173 = por %p171, %p172
      %p175 = scmp.ne.s32.totalorder %s160, %s174
      %p176 = scmp.eq.s32.totalorder %s30, 0
      %p177 = por %p175, %p176
      %s179 = sadd.s32 %s178, 1
      %p182 = scmp.eq.s32.totalorder %s24, 1
      %p183 = scmp.ne.s32.totalorder %s178, %s180
      %p184 = scmp.eq.s32.totalorder %s24, 0
      %p185 = por %p183, %p184
      %p186 = scmp.ne.s32.totalorder %s178, %s180
      %p187 = scmp.eq.s32.totalorder %s29, 1
      %p188 = por %p186, %p187
      %p189 = scmp.ne.s32.totalorder %s180, %s181
      %p190 = scmp.eq.s32.totalorder %s29, 0
      %p191 = por %p189, %p190
      %p192 = scmp.ne.s32.totalorder %s180, %s181
      %p193 = scmp.eq.s32.totalorder %s30, 1
      %p194 = por %p192, %p193
      %p196 = scmp.ne.s32.totalorder %s181, %s195
      %p197 = scmp.eq.s32.totalorder %s30, 0
      %p198 = por %p196, %p197
      %s200 = sadd.s32 %s199, 1
      %p203 = scmp.eq.s32.totalorder %s24, 1
      %p204 = scmp.ne.s32.totalorder %s199, %s201
      %p205 = scmp.eq.s32.totalorder %s24, 0
      %p206 = por %p204, %p205
      %p207 = scmp.ne.s32.totalorder %s199, %s201
      %p208 = scmp.eq.s32.totalorder %s29, 1
      %p209 = por %p207, %p208
      %p210 = scmp.ne.s32.totalorder %s201, %s202
      %p211 = scmp.eq.s32.totalorder %s29, 0
      %p212 = por %p210, %p211
      %p213 = scmp.ne.s32.totalorder %s201, %s202
      %p214 = scmp.eq.s32.totalorder %s30, 1
      %p215 = por %p213, %p214
      %p217 = scmp.ne.s32.totalorder %s202, %s216
      %p218 = scmp.eq.s32.totalorder %s30, 0
      %p219 = por %p217, %p218
      %s221 = sadd.s32 %s220, 1
      %p224 = scmp.eq.s32.totalorder %s24, 1
      %p225 = scmp.ne.s32.totalorder %s220, %s222
      %p226 = scmp.eq.s32.totalorder %s24, 0
      %p227 = por %p225, %p226
      %p228 = scmp.ne.s32.totalorder %s220, %s222
      %p229 = scmp.eq.s32.totalorder %s29, 1
      %p230 = por %p228, %p229
      %p231 = scmp.ne.s32.totalorder %s222, %s223
      %p232 = scmp.eq.s32.totalorder %s29, 0
      %p233 = por %p231, %p232
      %p234 = scmp.ne.s32.totalorder %s222, %s223
      %p235 = scmp.eq.s32.totalorder %s30, 1
      %p236 = por %p234, %p235
      %p238 = scmp.ne.s32.totalorder %s223, %s237
      %p239 = scmp.eq.s32.totalorder %s30, 0
      %p240 = por %p238, %p239
      %s242 = sadd.s32 %s241, 1
      %p245 = scmp.eq.s32.totalorder %s24, 1
      %p246 = scmp.ne.s32.totalorder %s241, %s243
      %p247 = scmp.eq.s32.totalorder %s24, 0
      %p248 = por %p246, %p247
      %p249 = scmp.ne.s32.totalorder %s241, %s243
      %p250 = scmp.eq.s32.totalorder %s29, 1
      %p251 = por %p249, %p250
      %p252 = scmp.ne.s32.totalorder %s243, %s244
      %p253 = scmp.eq.s32.totalorder %s29, 0
      %p254 = por %p252, %p253
      %p255 = scmp.ne.s32.totalorder %s243, %s244
      %p256 = scmp.eq.s32.totalorder %s30, 1
      %p257 = por %p255, %p256
      %p259 = scmp.ne.s32.totalorder %s244, %s258
      %p260 = scmp.eq.s32.totalorder %s30, 0
      %p261 = por %p259, %p260
      %s263 = sadd.s32 %s262, 1
      %p266 = scmp.eq.s32.totalorder %s24, 1
      %p267 = scmp.ne.s32.totalorder %s262, %s264
      %p268 = scmp.eq.s32.totalorder %s24, 0
      %p269 = por %p267, %p268
      %p270 = scmp.ne.s32.totalorder %s262, %s264
      %p271 = scmp.eq.s32.totalorder %s29, 1
      %p272 = por %p270, %p271
      %p273 = scmp.ne.s32.totalorder %s264, %s265
      %p274 = scmp.eq.s32.totalorder %s29, 0
      %p275 = por %p273, %p274
      %p276 = scmp.ne.s32.totalorder %s264, %s265
      %p277 = scmp.eq.s32.totalorder %s30, 1
      %p278 = por %p276, %p277
      %p280 = scmp.ne.s32.totalorder %s265, %s279
      %p281 = scmp.eq.s32.totalorder %s30, 0
      %p282 = por %p280, %p281
      %s284 = sadd.s32 %s283, 1
      %p287 = scmp.eq.s32.totalorder %s24, 1
      %p288 = scmp.ne.s32.totalorder %s283, %s285
      %p289 = scmp.eq.s32.totalorder %s24, 0
      %p290 = por %p288, %p289
      %p291 = scmp.ne.s32.totalorder %s283, %s285
      %p292 = scmp.eq.s32.totalorder %s29, 1
      %p293 = por %p291, %p292
      %p294 = scmp.ne.s32.totalorder %s285, %s286
      %p295 = scmp.eq.s32.totalorder %s29, 0
      %p296 = por %p294, %p295
      %p297 = scmp.ne.s32.totalorder %s285, %s286
      %p298 = scmp.eq.s32.totalorder %s30, 1
      %p299 = por %p297, %p298
      %p301 = scmp.ne.s32.totalorder %s286, %s300
      %p302 = scmp.eq.s32.totalorder %s30, 0
      %p303 = por %p301, %p302
      %s305 = sadd.s32 %s304, 1
      %p308 = scmp.eq.s32.totalorder %s24, 1
      %p309 = scmp.ne.s32.totalorder %s304, %s306
      %p310 = scmp.eq.s32.totalorder %s24, 0
      %p311 = por %p309, %p310
      %p312 = scmp.ne.s32.totalorder %s304, %s306
      %p313 = scmp.eq.s32.totalorder %s29, 1
      %p314 = por %p312, %p313
      %p315 = scmp.ne.s32.totalorder %s306, %s307
      %p316 = scmp.eq.s32.totalorder %s29, 0
      %p317 = por %p315, %p316
      %p318 = scmp.ne.s32.totalorder %s306, %s307
      %p319 = scmp.eq.s32.totalorder %s30, 1
      %p320 = por %p318, %p319
      %p322 = scmp.ne.s32.totalorder %s307, %s321
      %p323 = scmp.eq.s32.totalorder %s30, 0
      %p324 = por %p322, %p323
      %s326 = sadd.s32 %s325, 1
      %p329 = scmp.eq.s32.totalorder %s24, 1
      %p330 = scmp.ne.s32.totalorder %s325, %s327
      %p331 = scmp.eq.s32.totalorder %s24, 0
      %p332 = por %p330, %p331
      %p333 = scmp.ne.s32.totalorder %s325, %s327
      %p334 = scmp.eq.s32.totalorder %s29, 1
      %p335 = por %p333, %p334
      %p336 = scmp.ne.s32.totalorder %s327, %s328
      %p337 = scmp.eq.s32.totalorder %s29, 0
      %p338 = por %p336, %p337
      %p339 = scmp.ne.s32.totalorder %s327, %s328
      %p340 = scmp.eq.s32.totalorder %s30, 1
      %p341 = por %p339, %p340
      %p343 = scmp.ne.s32.totalorder %s328, %s342
      %p344 = scmp.eq.s32.totalorder %s30, 0
      %p345 = por %p343, %p344
      %s347 = sadd.s32 %s346, 1
      %p350 = scmp.eq.s32.totalorder %s24, 1
      %p351 = scmp.ne.s32.totalorder %s346, %s348
      %p352 = scmp.eq.s32.totalorder %s24, 0
      %p353 = por %p351, %p352
      %p354 = scmp.ne.s32.totalorder %s346, %s348
      %p355 = scmp.eq.s32.totalorder %s29, 1
      %p356 = por %p354, %p355
      %p357 = scmp.ne.s32.totalorder %s348, %s349
      %p358 = scmp.eq.s32.totalorder %s29, 0
      %p359 = por %p357, %p358
      %p360 = scmp.ne.s32.totalorder %s348, %s349
      %p361 = scmp.eq.s32.totalorder %s30, 1
      %p362 = por %p360, %p361
      %p364 = scmp.ne.s32.totalorder %s349, %s363
      %p365 = scmp.eq.s32.totalorder %s30, 0
      %p366 = por %p364, %p365
      %s367 = ssub.s32 %s24, %s31
      %p368 = scmp.eq.s32.totalorder %s367, 0
      %s370 = sadd.s32 %s369, 1
      %s371 = scalar_select %p368, %s369, %s370
      %p374 = pneg %p368
      %p375 = scmp.eq.s32.totalorder %s24, 1
      %p376 = por %p374, %p375
      %p377 = scmp.ne.s32.totalorder %s369, %s372
      %p378 = scmp.eq.s32.totalorder %s24, 0
      %p379 = por %p377, %p378
      %p380 = scmp.ne.s32.totalorder %s369, %s372
      %p381 = scmp.eq.s32.totalorder %s29, 1
      %p382 = por %p380, %p381
      %p383 = scmp.ne.s32.totalorder %s372, %s373
      %p384 = scmp.eq.s32.totalorder %s29, 0
      %p385 = por %p383, %p384
      %p386 = scmp.ne.s32.totalorder %s372, %s373
      %p387 = scmp.eq.s32.totalorder %s30, 1
      %p388 = por %p386, %p387
      %p390 = scmp.ne.s32.totalorder %s373, %s389
      %p391 = scmp.eq.s32.totalorder %s30, 0
      %p392 = por %p390, %p391
      %p393 = scmp.le.s32.totalorder 1, %s24
      %p394 = scmp.lt.s32.totalorder %s24, 3
      %p395 = pnand %p393, %p394
      %p396 = pneg %p395
      // Predicated region
      $region9: #{tpu_custom_call.1} parent=5 // pred_check
        _
      $region10: #{tpu_custom_call.1} parent=5 // pred_check_branch
        %398 = sbr.rel (%p395) target = $region12
      $region11: #{tpu_custom_call.1} parent=5 // pred_region
        %s399 = ssub.s32 %s24, 1
        // Predicated region
        $region13: #{tpu_custom_call.1} parent=11 // pred_check
          %p400 = pneg %p149
        $region14: #{tpu_custom_call.1} parent=11 // pred_check_branch
          %402 = sbr.rel (%p400) target = $region16
        $region15: #{tpu_custom_call.1} parent=11 // pred_region
          _
        $region16: #{tpu_custom_call.1} parent=11 // pred_fallthru
          _
        // Predicated region
        $region17: #{tpu_custom_call.1} parent=11 // pred_check
          %p403 = pneg %p170
        $region18: #{tpu_custom_call.1} parent=11 // pred_check_branch
          %405 = sbr.rel (%p403) target = $region20
        $region19: #{tpu_custom_call.1} parent=11 // pred_region
          _
        $region20: #{tpu_custom_call.1} parent=11 // pred_fallthru
          _
        // Predicated region
        $region21: #{tpu_custom_call.1} parent=11 // pred_check
          %p406 = pneg %p191
        $region22: #{tpu_custom_call.1} parent=11 // pred_check_branch
          %408 = sbr.rel (%p406) target = $region24
        $region23: #{tpu_custom_call.1} parent=11 // pred_region
          _
        $region24: #{tpu_custom_call.1} parent=11 // pred_fallthru
          _
        // Predicated region
        $region25: #{tpu_custom_call.1} parent=11 // pred_check
          %p409 = pneg %p212
        $region26: #{tpu_custom_call.1} parent=11 // pred_check_branch
          %411 = sbr.rel (%p409) target = $region28
        $region27: #{tpu_custom_call.1} parent=11 // pred_region
          _
        $region28: #{tpu_custom_call.1} parent=11 // pred_fallthru
          _
        // Predicated region
        $region29: #{tpu_custom_call.1} parent=11 // pred_check
          %p412 = pneg %p233
        $region30: #{tpu_custom_call.1} parent=11 // pred_check_branch
          %414 = sbr.rel (%p412) target = $region32
        $region31: #{tpu_custom_call.1} parent=11 // pred_region
          _
        $region32: #{tpu_custom_call.1} parent=11 // pred_fallthru
          _
        // Predicated region
        $region33: #{tpu_custom_call.1} parent=11 // pred_check
          %p415 = pneg %p254
        $region34: #{tpu_custom_call.1} parent=11 // pred_check_branch
          %417 = sbr.rel (%p415) target = $region36
        $region35: #{tpu_custom_call.1} parent=11 // pred_region
          _
        $region36: #{tpu_custom_call.1} parent=11 // pred_fallthru
          _
        // Predicated region
        $region37: #{tpu_custom_call.1} parent=11 // pred_check
          %p418 = pneg %p275
        $region38: #{tpu_custom_call.1} parent=11 // pred_check_branch
          %420 = sbr.rel (%p418) target = $region40
        $region39: #{tpu_custom_call.1} parent=11 // pred_region
          _
        $region40: #{tpu_custom_call.1} parent=11 // pred_fallthru
          _
        // Predicated region
        $region41: #{tpu_custom_call.1} parent=11 // pred_check
          %p421 = pneg %p296
        $region42: #{tpu_custom_call.1} parent=11 // pred_check_branch
          %423 = sbr.rel (%p421) target = $region44
        $region43: #{tpu_custom_call.1} parent=11 // pred_region
          _
        $region44: #{tpu_custom_call.1} parent=11 // pred_fallthru
          _
        // Predicated region
        $region45: #{tpu_custom_call.1} parent=11 // pred_check
          %p424 = pneg %p317
        $region46: #{tpu_custom_call.1} parent=11 // pred_check_branch
          %426 = sbr.rel (%p424) target = $region48
        $region47: #{tpu_custom_call.1} parent=11 // pred_region
          _
        $region48: #{tpu_custom_call.1} parent=11 // pred_fallthru
          _
        // Predicated region
        $region49: #{tpu_custom_call.1} parent=11 // pred_check
          %p427 = pneg %p338
        $region50: #{tpu_custom_call.1} parent=11 // pred_check_branch
          %429 = sbr.rel (%p427) target = $region52
        $region51: #{tpu_custom_call.1} parent=11 // pred_region
          _
        $region52: #{tpu_custom_call.1} parent=11 // pred_fallthru
          _
        // Predicated region
        $region53: #{tpu_custom_call.1} parent=11 // pred_check
          %p430 = pneg %p359
        $region54: #{tpu_custom_call.1} parent=11 // pred_check_branch
          %432 = sbr.rel (%p430) target = $region56
        $region55: #{tpu_custom_call.1} parent=11 // pred_region
          _
        $region56: #{tpu_custom_call.1} parent=11 // pred_fallthru
          _
      $region12: #{tpu_custom_call.1} parent=5 // pred_fallthru
        _
      %p433 = scmp.lt.s32.totalorder %s24, 2
      // Predicated region
      $region57: #{tpu_custom_call.1} parent=5 // pred_check
        %p434 = pneg %p433
      $region58: #{tpu_custom_call.1} parent=5 // pred_check_branch
        %436 = sbr.rel (%p434) target = $region60
      $region59: #{tpu_custom_call.1} parent=5 // pred_region
        // Predicated region
        $region61: #{tpu_custom_call.1} parent=59 // pred_check
          %p437 = pneg %p44
        $region62: #{tpu_custom_call.1} parent=59 // pred_check_branch
          %439 = sbr.rel (%p437) target = $region64
        $region63: #{tpu_custom_call.1} parent=59 // pred_region
          %p440 = scmp.lt.s32.totalorder %s24, 1
          %s441 = scalar_select %p440, %s24, 1
          %s442 = smul.addr %s441, 4
          %s443 = scalar_lea.vmem %s0, %s442
        $region64: #{tpu_custom_call.1} parent=59 // pred_fallthru
          _
        // Predicated region
        $region65: #{tpu_custom_call.1} parent=59 // pred_check
          %p444 = pneg %p70
        $region66: #{tpu_custom_call.1} parent=59 // pred_check_branch
          %446 = sbr.rel (%p444) target = $region68
        $region67: #{tpu_custom_call.1} parent=59 // pred_region
          %p447 = scmp.lt.s32.totalorder %s24, 1
          %s448 = scalar_select %p447, %s24, 1
          %s449 = smul.addr %s448, 2
          %s450 = smul.addr %s449, 8
          %s451 = scalar_lea.vmem %s1, %s450
        $region68: #{tpu_custom_call.1} parent=59 // pred_fallthru
          _
        // Predicated region
        $region69: #{tpu_custom_call.1} parent=59 // pred_check
          %p452 = pneg %p96
        $region70: #{tpu_custom_call.1} parent=59 // pred_check_branch
          %454 = sbr.rel (%p452) target = $region72
        $region71: #{tpu_custom_call.1} parent=59 // pred_region
          %p455 = scmp.lt.s32.totalorder %s24, 1
          %s456 = scalar_select %p455, %s24, 1
          %s457 = smul.addr %s456, 4
          %s458 = scalar_lea.vmem %s2, %s457
        $region72: #{tpu_custom_call.1} parent=59 // pred_fallthru
          _
        // Predicated region
        $region73: #{tpu_custom_call.1} parent=59 // pred_check
          %p459 = pneg %p122
        $region74: #{tpu_custom_call.1} parent=59 // pred_check_branch
          %461 = sbr.rel (%p459) target = $region76
        $region75: #{tpu_custom_call.1} parent=59 // pred_region
          %p462 = scmp.lt.s32.totalorder %s24, 1
          %s463 = scalar_select %p462, %s24, 1
          %s464 = scalar_lea.vmem %s3, %s463
        $region76: #{tpu_custom_call.1} parent=59 // pred_fallthru
          _
      $region60: #{tpu_custom_call.1} parent=5 // pred_fallthru
        _
      %p465 = scmp.le.s32.totalorder 1, %s24
      %p466 = scmp.lt.s32.totalorder %s24, 3
      %p467 = pnand %p465, %p466
      %p468 = pneg %p467
      // Predicated region
      $region77: #{tpu_custom_call.1} parent=5 // pred_check
        _
      $region78: #{tpu_custom_call.1} parent=5 // pred_check_branch
        %470 = sbr.rel (%p467) target = $region80
      $region79: #{tpu_custom_call.1} parent=5 // pred_region
        %s471 = ssub.s32 %s24, 1
        %p472 = scmp.lt.s32.totalorder %s29, 1
        %s473 = scalar_select %p472, %s29, 1
        %s474 = smul.addr %s473, 4
        %s475 = scalar_lea.vmem %s0, %s474
        %p476 = pneg %p50
        %p477 = pneg %p47
        %p478 = scmp.lt.s32.totalorder %s29, 1
        %s479 = scalar_select %p478, %s29, 1
        %s480 = smul.addr %s479, 2
        %s481 = smul.addr %s480, 8
        %s482 = scalar_lea.vmem %s1, %s481
        %p483 = pneg %p76
        %p484 = pneg %p73
        %p485 = scmp.lt.s32.totalorder %s29, 1
        %s486 = scalar_select %p485, %s29, 1
        %s487 = smul.addr %s486, 4
        %s488 = scalar_lea.vmem %s2, %s487
        %p489 = pneg %p102
        %p490 = pneg %p99
        %p491 = scmp.lt.s32.totalorder %s29, 1
        %s492 = scalar_select %p491, %s29, 1
        %s493 = scalar_lea.vmem %s3, %s492
        %p494 = pneg %p128
        %p495 = pneg %p125
        %p496 = pneg %p149
        %p497 = pneg %p146
        %p498 = pneg %p170
        %p499 = pneg %p167
        %p500 = pneg %p191
        %p501 = pneg %p188
        %p502 = pneg %p212
        %p503 = pneg %p209
        %p504 = pneg %p233
        %p505 = pneg %p230
        %p506 = pneg %p254
        %p507 = pneg %p251
        %p508 = pneg %p275
        %p509 = pneg %p272
        %p510 = pneg %p296
        %p511 = pneg %p293
        %p512 = pneg %p317
        %p513 = pneg %p314
        %p514 = pneg %p338
        %p515 = pneg %p335
        %p516 = pneg %p359
        %p517 = pneg %p356
        %p518 = pneg %p385
        %p519 = pneg %p382
        %s520 = sand.u32 %s372, 1
        %s521 = scalar_lea.sflag [#allocation3], %s520
        %s522 = sand.u32 %s372, 1
        %s523 = smul.addr %s522, 4
        %s524 = scalar_lea.vmem [#allocation2], %s523
        %p525 = scmp.lt.s32.totalorder %s29, 1
        %s526 = scalar_select %p525, %s29, 1
        %s527 = smul.addr %s526, 4
        %s528 = scalar_lea.vmem %s0, %s527
        %p529 = scmp.lt.s32.totalorder %s29, 1
        %s530 = scalar_select %p529, %s29, 1
        %s531 = smul.addr %s530, 2
        %s532 = smul.addr %s531, 8
        %s533 = scalar_lea.vmem %s1, %s532
        %p534 = scmp.lt.s32.totalorder %s29, 1
        %s535 = scalar_select %p534, %s29, 1
        %s536 = smul.addr %s535, 4
        %s537 = scalar_lea.vmem %s2, %s536
        %p538 = scmp.lt.s32.totalorder %s29, 1
        %s539 = scalar_select %p538, %s29, 1
        %s540 = scalar_lea.vmem %s3, %s539
        %v541 = vld [vmem:[%s528] sm:$0xf]
        %v542 = vld [vmem:[%s533] sm:$0xff]
        %v543 = vld [vmem:[%s533 + $0x8] sm:$0xff]
        %v544 = vld [vmem:[%s537] sm:$0xf]
        %v545 = vld [vmem:[%s540] sm:$0x1]
        %v546 = vld [vmem:[%s4] sm:$0xff]
        %v547 = vld [vmem:[%s4 + $0x8] sm:$0xff]
        %v548 = vld [vmem:[%s5] sm:$0xff]
        %v549 = vld [vmem:[%s5 + $0x8] sm:$0xff]
        %v550 = vld [vmem:[%s5 + $0x10] sm:$0xff]
        %v551 = vld [vmem:[%s5 + $0x18] sm:$0xff]
        %v552 = vld [vmem:[%s6] sm:$0xff]
        %v553 = vld [vmem:[%s6 + $0x8] sm:$0xff]
        %v554 = vld [vmem:[%s6 + $0x10] sm:$0xff]
        %v555 = vld [vmem:[%s6 + $0x18] sm:$0xff]
        %v556 = vld [vmem:[%s6 + $0x20] sm:$0xff]
        %v557 = vld [vmem:[%s6 + $0x28] sm:$0xff]
        %v558 = vld [vmem:[%s6 + $0x30] sm:$0xff]
        %v559 = vld [vmem:[%s6 + $0x38] sm:$0xff]
        %v560 = vld [vmem:[%s6 + $0x40] sm:$0xff]
        %v561 = vld [vmem:[%s6 + $0x48] sm:$0xff]
        %v562 = vld [vmem:[%s6 + $0x50] sm:$0xff]
        %v563 = vld [vmem:[%s6 + $0x58] sm:$0xff]
        %v564 = vld [vmem:[%s7] sm:$0x1]
        %v565 = vld [vmem:[%s8] sm:$0xff]
        %v566 = vld [vmem:[%s8 + $0x8] sm:$0xff]
        %v567 = vld [vmem:[%s8 + $0x10] sm:$0xff]
        %v568 = vld [vmem:[%s8 + $0x18] sm:$0xff]
        %v569 = vld [vmem:[%s8 + $0x20] sm:$0xff]
        %v570 = vld [vmem:[%s8 + $0x28] sm:$0xff]
        %v571 = vld [vmem:[%s8 + $0x30] sm:$0xff]
        %v572 = vld [vmem:[%s8 + $0x38] sm:$0xff]
        %v573 = vld [vmem:[%s8 + $0x40] sm:$0xff]
        %v574 = vld [vmem:[%s8 + $0x48] sm:$0xff]
        %v575 = vld [vmem:[%s8 + $0x50] sm:$0xff]
        %v576 = vld [vmem:[%s8 + $0x58] sm:$0xff]
        %v577 = vld [vmem:[%s8 + $0x60] sm:$0xff]
        %v578 = vld [vmem:[%s8 + $0x68] sm:$0xff]
        %v579 = vld [vmem:[%s8 + $0x70] sm:$0xff]
        %v580 = vld [vmem:[%s8 + $0x78] sm:$0xff]
        %v581 = vld [vmem:[%s9] sm:$0xff]
        %v582 = vld [vmem:[%s9 + $0x8] sm:$0xff]
        %v583 = vld [vmem:[%s9 + $0x10] sm:$0xff]
        %v584 = vld [vmem:[%s9 + $0x18] sm:$0xff]
        %v585 = vld [vmem:[%s9 + $0x20] sm:$0xff]
        %v586 = vld [vmem:[%s9 + $0x28] sm:$0xff]
        %v587 = vld [vmem:[%s9 + $0x30] sm:$0xff]
        %v588 = vld [vmem:[%s9 + $0x38] sm:$0xff]
        %v589 = vld [vmem:[%s9 + $0x40] sm:$0xff]
        %v590 = vld [vmem:[%s9 + $0x48] sm:$0xff]
        %v591 = vld [vmem:[%s9 + $0x50] sm:$0xff]
        %v592 = vld [vmem:[%s9 + $0x58] sm:$0xff]
        %v593 = vld [vmem:[%s9 + $0x60] sm:$0xff]
        %v594 = vld [vmem:[%s9 + $0x68] sm:$0xff]
        %v595 = vld [vmem:[%s9 + $0x70] sm:$0xff]
        %v596 = vld [vmem:[%s9 + $0x78] sm:$0xff]
        %v597 = vld [vmem:[%s10] sm:$0xff]
        %v598 = vld [vmem:[%s10 + $0x8] sm:$0xff]
        %v599 = vld [vmem:[%s10 + $0x10] sm:$0xff]
        %v600 = vld [vmem:[%s10 + $0x18] sm:$0xff]
        %v601 = vld [vmem:[%s10 + $0x20] sm:$0xff]
        %v602 = vld [vmem:[%s10 + $0x28] sm:$0xff]
        %v603 = vld [vmem:[%s10 + $0x30] sm:$0xff]
        %v604 = vld [vmem:[%s10 + $0x38] sm:$0xff]
        %v605 = vld [vmem:[%s10 + $0x40] sm:$0xff]
        %v606 = vld [vmem:[%s10 + $0x48] sm:$0xff]
        %v607 = vld [vmem:[%s10 + $0x50] sm:$0xff]
        %v608 = vld [vmem:[%s10 + $0x58] sm:$0xff]
        %v609 = vld [vmem:[%s10 + $0x60] sm:$0xff]
        %v610 = vld [vmem:[%s10 + $0x68] sm:$0xff]
        %v611 = vld [vmem:[%s10 + $0x70] sm:$0xff]
        %v612 = vld [vmem:[%s10 + $0x78] sm:$0xff]
        %v613 = vld [vmem:[%s10 + $0x80] sm:$0xff]
        %v614 = vld [vmem:[%s10 + $0x88] sm:$0xff]
        %v615 = vld [vmem:[%s10 + $0x90] sm:$0xff]
        %v616 = vld [vmem:[%s10 + $0x98] sm:$0xff]
        %v617 = vld [vmem:[%s10 + $0xa0] sm:$0xff]
        %v618 = vld [vmem:[%s10 + $0xa8] sm:$0xff]
        %v619 = vld [vmem:[%s10 + $0xb0] sm:$0xff]
        %v620 = vld [vmem:[%s10 + $0xb8] sm:$0xff]
        %v621 = vld [vmem:[%s10 + $0xc0] sm:$0xff]
        %v622 = vld [vmem:[%s10 + $0xc8] sm:$0xff]
        %v623 = vld [vmem:[%s10 + $0xd0] sm:$0xff]
        %v624 = vld [vmem:[%s10 + $0xd8] sm:$0xff]
        %v625 = vld [vmem:[%s10 + $0xe0] sm:$0xff]
        %v626 = vld [vmem:[%s10 + $0xe8] sm:$0xff]
        %v627 = vld [vmem:[%s10 + $0xf0] sm:$0xff]
        %v628 = vld [vmem:[%s10 + $0xf8] sm:$0xff]
        %v629 = vld [vmem:[%s10 + $0x100] sm:$0xff]
        %v630 = vld [vmem:[%s10 + $0x108] sm:$0xff]
        %v631 = vld [vmem:[%s10 + $0x110] sm:$0xff]
        %v632 = vld [vmem:[%s10 + $0x118] sm:$0xff]
        %v633 = vld [vmem:[%s10 + $0x120] sm:$0xff]
        %v634 = vld [vmem:[%s10 + $0x128] sm:$0xff]
        %v635 = vld [vmem:[%s10 + $0x130] sm:$0xff]
        %v636 = vld [vmem:[%s10 + $0x138] sm:$0xff]
        %v637 = vld [vmem:[%s10 + $0x140] sm:$0xff]
        %v638 = vld [vmem:[%s10 + $0x148] sm:$0xff]
        %v639 = vld [vmem:[%s10 + $0x150] sm:$0xff]
        %v640 = vld [vmem:[%s10 + $0x158] sm:$0xff]
        %v641 = vld [vmem:[%s10 + $0x160] sm:$0xff]
        %v642 = vld [vmem:[%s10 + $0x168] sm:$0xff]
        %v643 = vld [vmem:[%s10 + $0x170] sm:$0xff]
        %v644 = vld [vmem:[%s10 + $0x178] sm:$0xff]
        %v645 = vld [vmem:[%s10 + $0x180] sm:$0xff]
        %v646 = vld [vmem:[%s10 + $0x188] sm:$0xff]
        %v647 = vld [vmem:[%s10 + $0x190] sm:$0xff]
        %v648 = vld [vmem:[%s10 + $0x198] sm:$0xff]
        %v649 = vld [vmem:[%s10 + $0x1a0] sm:$0xff]
        %v650 = vld [vmem:[%s10 + $0x1a8] sm:$0xff]
        %v651 = vld [vmem:[%s10 + $0x1b0] sm:$0xff]
        %v652 = vld [vmem:[%s10 + $0x1b8] sm:$0xff]
        %v653 = vld [vmem:[%s10 + $0x1c0] sm:$0xff]
        %v654 = vld [vmem:[%s10 + $0x1c8] sm:$0xff]
        %v655 = vld [vmem:[%s10 + $0x1d0] sm:$0xff]
        %v656 = vld [vmem:[%s10 + $0x1d8] sm:$0xff]
        %v657 = vld [vmem:[%s10 + $0x1e0] sm:$0xff]
        %v658 = vld [vmem:[%s10 + $0x1e8] sm:$0xff]
        %v659 = vld [vmem:[%s10 + $0x1f0] sm:$0xff]
        %v660 = vld [vmem:[%s10 + $0x1f8] sm:$0xff]
        %v661 = vld [vmem:[%s11] sm:$0xff]
        %v662 = vld [vmem:[%s11 + $0x8] sm:$0xff]
        %v663 = vld [vmem:[%s11 + $0x10] sm:$0xff]
        %v664 = vld [vmem:[%s11 + $0x18] sm:$0xff]
        %v665 = vld [vmem:[%s11 + $0x20] sm:$0xff]
        %v666 = vld [vmem:[%s11 + $0x28] sm:$0xff]
        %v667 = vld [vmem:[%s11 + $0x30] sm:$0xff]
        %v668 = vld [vmem:[%s11 + $0x38] sm:$0xff]
        %v669 = vld [vmem:[%s11 + $0x40] sm:$0xff]
        %v670 = vld [vmem:[%s11 + $0x48] sm:$0xff]
        %v671 = vld [vmem:[%s11 + $0x50] sm:$0xff]
        %v672 = vld [vmem:[%s11 + $0x58] sm:$0xff]
        %v673 = vld [vmem:[%s12] sm:$0x1]
        %v674 = vld [vmem:[%s13] sm:$0xff]
        %v675 = vld [vmem:[%s13 + $0x8] sm:$0xff]
        %v676 = vld [vmem:[%s13 + $0x10] sm:$0xff]
        %v677 = vld [vmem:[%s13 + $0x18] sm:$0xff]
        %v678 = vld [vmem:[%s13 + $0x20] sm:$0xff]
        %v679 = vld [vmem:[%s13 + $0x28] sm:$0xff]
        %v680 = vld [vmem:[%s13 + $0x30] sm:$0xff]
        %v681 = vld [vmem:[%s13 + $0x38] sm:$0xff]
        %v682 = vld [vmem:[%s14] sm:$0x1]
        %vm683 = vcmask 130048
        %v685 = vsel %vm683, %v541, 0
        %687 = vmatprep.subr.mxu0 0.0
        %688 = vmatpush1.msra.mxu0 0.0
        %689 = vmatprep.subr.mxu0 0.0
        %690 = vmatpush1.msra.mxu0 0.0
        %691 = vmatprep.subr.mxu0 0.0
        %692 = vmatpush1.msra.mxu0 0.0
        %693 = vmatprep.subr.mxu0 0.0
        %694 = vmatpush1.msra.mxu0 0.0
        %695 = vmatprep.subr.mxu0 0.0
        %696 = vmatpush1.msra.mxu0 0.0
        %697 = vmatprep.subr.mxu0 0.0
        %698 = vmatpush1.msra.mxu0 0.0
        %699 = vmatprep.subr.mxu0 0.0
        %700 = vmatpush1.msra.mxu0 0.0
        %701 = vmatprep.subr.mxu0 0.0
        %702 = vmatpush1.msra.mxu0 0.0
        %703 = vmatprep.subr.mxu0 0.0
        %704 = vmatpush1.msra.mxu0 0.0
        %705 = vmatprep.subr.mxu0 0.0
        %706 = vmatpush1.msra.mxu0 0.0
        %707 = vmatprep.subr.mxu0 0.0
        %708 = vmatpush1.msra.mxu0 0.0
        %709 = vmatprep.subr.mxu0 0.0
        %710 = vmatpush1.msra.mxu0 0.0
        %711 = vmatprep.subr.mxu0 0.0
        %712 = vmatpush1.msra.mxu0 0.0
        %713 = vmatprep.subr.mxu0 0.0
        %714 = vmatpush1.msra.mxu0 0.0
        %715 = vmatprep.subr.mxu0 0.0
        %716 = vmatpush1.msra.mxu0 %v547
        %717 = vmatprep.subr.mxu0 0.0
        %718 = vmatpush1.msra.mxu0 %v546
        %719 = vmatprep.subr.mxu0 0.0
        %720 = vmatpush2.msra.mxu0 0.0
        %721 = vmatprep.subr.mxu0 0.0
        %722 = vmatpush2.msra.mxu0 0.0
        %723 = vmatprep.subr.mxu0 0.0
        %724 = vmatpush2.msra.mxu0 0.0
        %725 = vmatprep.subr.mxu0 0.0
        %726 = vmatpush2.msra.mxu0 0.0
        %727 = vmatprep.subr.mxu0 0.0
        %728 = vmatpush2.msra.mxu0 0.0
        %729 = vmatprep.subr.mxu0 0.0
        %730 = vmatpush2.msra.mxu0 0.0
        %731 = vmatprep.subr.mxu0 0.0
        %732 = vmatpush2.msra.mxu0 0.0
        %733 = vmatprep.subr.mxu0 0.0
        %734 = vmatpush2.msra.mxu0 0.0
        %735 = vmatprep.subr.mxu0 0.0
        %736 = vmatpush2.msra.mxu0 0.0
        %737 = vmatprep.subr.mxu0 0.0
        %738 = vmatpush2.msra.mxu0 0.0
        %739 = vmatprep.subr.mxu0 0.0
        %740 = vmatpush2.msra.mxu0 0.0
        %741 = vmatprep.subr.mxu0 0.0
        %742 = vmatpush2.msra.mxu0 0.0
        %743 = vmatprep.subr.mxu0 0.0
        %744 = vmatpush2.msra.mxu0 0.0
        %745 = vmatprep.subr.mxu0 0.0
        %746 = vmatpush2.msra.mxu0 0.0
        %747 = vmatprep.subr.mxu0 0.0
        %748 = vmatpush2.msra.mxu0 0.0
        %749 = vmatprep.subr.mxu0 0.0
        %750 = vmatpush2.msra.mxu0 0.0
        %751 = vmatprep.mubr.f32.mxu0 0.0
        %752 = vmatmul.mubr.f32.gmra.mxu0 %v685
        %v753 = vpop.f32.mrf.mxu0
        %v754 = vadd.f32 0.0, %v753
        %v755 = vpop.f32.mrf.mxu0
        %756 = vdwg.mxu0
        %v757 = vmax.f32 %v754, 0.0
        %vm758 = vcmask 261120
        %v760 = vsel %vm758, %v757, 0
        %762 = vmatprep.subr.mxu0 0.0
        %763 = vmatpush1.msra.mxu0 0.0
        %764 = vmatprep.subr.mxu0 0.0
        %765 = vmatpush1.msra.mxu0 0.0
        %766 = vmatprep.subr.mxu0 0.0
        %767 = vmatpush1.msra.mxu0 0.0
        %768 = vmatprep.subr.mxu0 0.0
        %769 = vmatpush1.msra.mxu0 0.0
        %770 = vmatprep.subr.mxu0 0.0
        %771 = vmatpush1.msra.mxu0 0.0
        %772 = vmatprep.subr.mxu0 0.0
        %773 = vmatpush1.msra.mxu0 0.0
        %774 = vmatprep.subr.mxu0 0.0
        %775 = vmatpush1.msra.mxu0 0.0
        %776 = vmatprep.subr.mxu0 0.0
        %777 = vmatpush1.msra.mxu0 0.0
        %778 = vmatprep.subr.mxu0 0.0
        %779 = vmatpush1.msra.mxu0 0.0
        %780 = vmatprep.subr.mxu0 0.0
        %781 = vmatpush1.msra.mxu0 0.0
        %782 = vmatprep.subr.mxu0 0.0
        %783 = vmatpush1.msra.mxu0 0.0
        %784 = vmatprep.subr.mxu0 0.0
        %785 = vmatpush1.msra.mxu0 0.0
        %786 = vmatprep.subr.mxu0 0.0
        %787 = vmatpush1.msra.mxu0 %v551
        %788 = vmatprep.subr.mxu0 0.0
        %789 = vmatpush1.msra.mxu0 %v550
        %790 = vmatprep.subr.mxu0 0.0
        %791 = vmatpush1.msra.mxu0 %v549
        %792 = vmatprep.subr.mxu0 0.0
        %793 = vmatpush1.msra.mxu0 %v548
        %794 = vmatprep.subr.mxu0 0.0
        %795 = vmatpush2.msra.mxu0 0.0
        %796 = vmatprep.subr.mxu0 0.0
        %797 = vmatpush2.msra.mxu0 0.0
        %798 = vmatprep.subr.mxu0 0.0
        %799 = vmatpush2.msra.mxu0 0.0
        %800 = vmatprep.subr.mxu0 0.0
        %801 = vmatpush2.msra.mxu0 0.0
        %802 = vmatprep.subr.mxu0 0.0
        %803 = vmatpush2.msra.mxu0 0.0
        %804 = vmatprep.subr.mxu0 0.0
        %805 = vmatpush2.msra.mxu0 0.0
        %806 = vmatprep.subr.mxu0 0.0
        %807 = vmatpush2.msra.mxu0 0.0
        %808 = vmatprep.subr.mxu0 0.0
        %809 = vmatpush2.msra.mxu0 0.0
        %810 = vmatprep.subr.mxu0 0.0
        %811 = vmatpush2.msra.mxu0 0.0
        %812 = vmatprep.subr.mxu0 0.0
        %813 = vmatpush2.msra.mxu0 0.0
        %814 = vmatprep.subr.mxu0 0.0
        %815 = vmatpush2.msra.mxu0 0.0
        %816 = vmatprep.subr.mxu0 0.0
        %817 = vmatpush2.msra.mxu0 0.0
        %818 = vmatprep.subr.mxu0 0.0
        %819 = vmatpush2.msra.mxu0 0.0
        %820 = vmatprep.subr.mxu0 0.0
        %821 = vmatpush2.msra.mxu0 0.0
        %822 = vmatprep.subr.mxu0 0.0
        %823 = vmatpush2.msra.mxu0 0.0
        %824 = vmatprep.subr.mxu0 0.0
        %825 = vmatpush2.msra.mxu0 0.0
        %826 = vmatprep.mubr.f32.mxu0 0.0
        %827 = vmatmul.mubr.f32.gmra.mxu0 %v760
        %v828 = vpop.f32.mrf.mxu0
        %v829 = vadd.f32 0.0, %v828
        %v830 = vpop.f32.mrf.mxu0
        %831 = vdwg.mxu0
        %v832 = vmax.f32 %v829, 0.0
        %v833 = vsel %vm758, %v832, 0.0
        %vm834 = vcmask 523264
        %v835 = vsel %vm834, %v833, 0.0
        %vm836 = vcmask 785408
        %v838 = vsel %vm836, %v835, 0
        %840 = vmatprep.subr.mxu0 0.0
        %841 = vmatpush1.msra.mxu0 0.0
        %842 = vmatprep.subr.mxu0 0.0
        %843 = vmatpush1.msra.mxu0 0.0
        %844 = vmatprep.subr.mxu0 0.0
        %845 = vmatpush1.msra.mxu0 0.0
        %846 = vmatprep.subr.mxu0 0.0
        %847 = vmatpush1.msra.mxu0 0.0
        %848 = vmatprep.subr.mxu0 0.0
        %849 = vmatpush1.msra.mxu0 %v563
        %850 = vmatprep.subr.mxu0 0.0
        %851 = vmatpush1.msra.mxu0 %v562
        %852 = vmatprep.subr.mxu0 0.0
        %853 = vmatpush1.msra.mxu0 %v561
        %854 = vmatprep.subr.mxu0 0.0
        %855 = vmatpush1.msra.mxu0 %v560
        %856 = vmatprep.subr.mxu0 0.0
        %857 = vmatpush1.msra.mxu0 %v559
        %858 = vmatprep.subr.mxu0 0.0
        %859 = vmatpush1.msra.mxu0 %v558
        %860 = vmatprep.subr.mxu0 0.0
        %861 = vmatpush1.msra.mxu0 %v557
        %862 = vmatprep.subr.mxu0 0.0
        %863 = vmatpush1.msra.mxu0 %v556
        %864 = vmatprep.subr.mxu0 0.0
        %865 = vmatpush1.msra.mxu0 %v555
        %866 = vmatprep.subr.mxu0 0.0
        %867 = vmatpush1.msra.mxu0 %v554
        %868 = vmatprep.subr.mxu0 0.0
        %869 = vmatpush1.msra.mxu0 %v553
        %870 = vmatprep.subr.mxu0 0.0
        %871 = vmatpush1.msra.mxu0 %v552
        %872 = vmatprep.subr.mxu0 0.0
        %873 = vmatpush2.msra.mxu0 0.0
        %874 = vmatprep.subr.mxu0 0.0
        %875 = vmatpush2.msra.mxu0 0.0
        %876 = vmatprep.subr.mxu0 0.0
        %877 = vmatpush2.msra.mxu0 0.0
        %878 = vmatprep.subr.mxu0 0.0
        %879 = vmatpush2.msra.mxu0 0.0
        %880 = vmatprep.subr.mxu0 0.0
        %881 = vmatpush2.msra.mxu0 0.0
        %882 = vmatprep.subr.mxu0 0.0
        %883 = vmatpush2.msra.mxu0 0.0
        %884 = vmatprep.subr.mxu0 0.0
        %885 = vmatpush2.msra.mxu0 0.0
        %886 = vmatprep.subr.mxu0 0.0
        %887 = vmatpush2.msra.mxu0 0.0
        %888 = vmatprep.subr.mxu0 0.0
        %889 = vmatpush2.msra.mxu0 0.0
        %890 = vmatprep.subr.mxu0 0.0
        %891 = vmatpush2.msra.mxu0 0.0
        %892 = vmatprep.subr.mxu0 0.0
        %893 = vmatpush2.msra.mxu0 0.0
        %894 = vmatprep.subr.mxu0 0.0
        %895 = vmatpush2.msra.mxu0 0.0
        %896 = vmatprep.subr.mxu0 0.0
        %897 = vmatpush2.msra.mxu0 0.0
        %898 = vmatprep.subr.mxu0 0.0
        %899 = vmatpush2.msra.mxu0 0.0
        %900 = vmatprep.subr.mxu0 0.0
        %901 = vmatpush2.msra.mxu0 0.0
        %902 = vmatprep.subr.mxu0 0.0
        %903 = vmatpush2.msra.mxu0 0.0
        %904 = vmatprep.mubr.f32.mxu0 0.0
        %905 = vmatmul.mubr.f32.gmra.mxu0 %v838
        %v906 = vpop.f32.mrf.mxu0
        %v907 = vadd.f32 %v564, %v906
        %v908 = vpop.f32.mrf.mxu0
        %909 = vdwg.mxu0
        %v910 = vxor.u32 %v907, 2147483648
        %v911 = vmul.f32 %v910, 1.442695
        %v912 = vpow.pop %v911
        %v913 = vadd.f32 %v912, 1.0
        %v914 = vrcp.pop %v913
        %v915 = vmul.f32 1.0, %v914
        %v916 = vtanh.pop %v907
        %v917 = vmul.f32 %v915, 0.0
        %919 = vrot.lane.b32.xlu0 %v916, 64
        %v920 = vpop.permute.xlu0 %919
        %v922 = vmul.f32 %v915, %v920
        %924 = vrot.lane.b32.xlu0 %v922, 32
        %v925 = vpop.permute.xlu0 %924
        %v927 = vadd.f32 %v917, %v925
        %v928 = vtanh.pop %v927
        %930 = vrot.lane.b32.xlu0 %v928, 64
        %v931 = vpop.permute.xlu0 %930
        %v933 = vmul.f32 %v915, %v931
        %v935 = vsel %vm758, 0.0, 0
        %937 = vmatprep.subr.mxu0 0.0
        %938 = vmatpush1.msra.mxu0 0.0
        %939 = vmatprep.subr.mxu0 0.0
        %940 = vmatpush1.msra.mxu0 0.0
        %941 = vmatprep.subr.mxu0 0.0
        %942 = vmatpush1.msra.mxu0 0.0
        %943 = vmatprep.subr.mxu0 0.0
        %944 = vmatpush1.msra.mxu0 0.0
        %945 = vmatprep.subr.mxu0 0.0
        %946 = vmatpush1.msra.mxu0 0.0
        %947 = vmatprep.subr.mxu0 0.0
        %948 = vmatpush1.msra.mxu0 0.0
        %949 = vmatprep.subr.mxu0 0.0
        %950 = vmatpush1.msra.mxu0 0.0
        %951 = vmatprep.subr.mxu0 0.0
        %952 = vmatpush1.msra.mxu0 0.0
        %953 = vmatprep.subr.mxu0 0.0
        %954 = vmatpush1.msra.mxu0 0.0
        %955 = vmatprep.subr.mxu0 0.0
        %956 = vmatpush1.msra.mxu0 0.0
        %957 = vmatprep.subr.mxu0 0.0
        %958 = vmatpush1.msra.mxu0 0.0
        %959 = vmatprep.subr.mxu0 0.0
        %960 = vmatpush1.msra.mxu0 0.0
        %961 = vmatprep.subr.mxu0 %v594
        %962 = vmatpush1.msra.mxu0 %v593
        %963 = vmatprep.subr.mxu0 %v590
        %964 = vmatpush1.msra.mxu0 %v589
        %965 = vmatprep.subr.mxu0 %v586
        %966 = vmatpush1.msra.mxu0 %v585
        %967 = vmatprep.subr.mxu0 %v582
        %968 = vmatpush1.msra.mxu0 %v581
        %969 = vmatprep.subr.mxu0 0.0
        %970 = vmatpush2.msra.mxu0 0.0
        %971 = vmatprep.subr.mxu0 0.0
        %972 = vmatpush2.msra.mxu0 0.0
        %973 = vmatprep.subr.mxu0 0.0
        %974 = vmatpush2.msra.mxu0 0.0
        %975 = vmatprep.subr.mxu0 0.0
        %976 = vmatpush2.msra.mxu0 0.0
        %977 = vmatprep.subr.mxu0 0.0
        %978 = vmatpush2.msra.mxu0 0.0
        %979 = vmatprep.subr.mxu0 0.0
        %980 = vmatpush2.msra.mxu0 0.0
        %981 = vmatprep.subr.mxu0 0.0
        %982 = vmatpush2.msra.mxu0 0.0
        %983 = vmatprep.subr.mxu0 0.0
        %984 = vmatpush2.msra.mxu0 0.0
        %985 = vmatprep.subr.mxu0 0.0
        %986 = vmatpush2.msra.mxu0 0.0
        %987 = vmatprep.subr.mxu0 0.0
        %988 = vmatpush2.msra.mxu0 0.0
        %989 = vmatprep.subr.mxu0 0.0
        %990 = vmatpush2.msra.mxu0 0.0
        %991 = vmatprep.subr.mxu0 0.0
        %992 = vmatpush2.msra.mxu0 0.0
        %993 = vmatprep.subr.mxu0 0.0
        %994 = vmatpush2.msra.mxu0 0.0
        %995 = vmatprep.subr.mxu0 0.0
        %996 = vmatpush2.msra.mxu0 0.0
        %997 = vmatprep.subr.mxu0 0.0
        %998 = vmatpush2.msra.mxu0 0.0
        %999 = vmatprep.subr.mxu0 0.0
        %1000 = vmatpush2.msra.mxu0 0.0
        %1001 = vmatprep.mubr.f32.mxu0 0.0
        %1002 = vmatmul.mubr.f32.gmra.mxu0 %v935
        %v1003 = vpop.f32.mrf.mxu0
        %v1004 = vadd.f32 0.0, %v1003
        %v1005 = vpop.f32.mrf.mxu0
        %v1006 = vadd.f32 0.0, %v1005
        %1007 = vdwg.mxu0
        %1008 = vmatprep.subr.mxu0 0.0
        %1009 = vmatpush1.msra.mxu0 0.0
        %1010 = vmatprep.subr.mxu0 0.0
        %1011 = vmatpush1.msra.mxu0 0.0
        %1012 = vmatprep.subr.mxu0 0.0
        %1013 = vmatpush1.msra.mxu0 0.0
        %1014 = vmatprep.subr.mxu0 0.0
        %1015 = vmatpush1.msra.mxu0 0.0
        %1016 = vmatprep.subr.mxu0 0.0
        %1017 = vmatpush1.msra.mxu0 0.0
        %1018 = vmatprep.subr.mxu0 0.0
        %1019 = vmatpush1.msra.mxu0 0.0
        %1020 = vmatprep.subr.mxu0 0.0
        %1021 = vmatpush1.msra.mxu0 0.0
        %1022 = vmatprep.subr.mxu0 0.0
        %1023 = vmatpush1.msra.mxu0 0.0
        %1024 = vmatprep.subr.mxu0 0.0
        %1025 = vmatpush1.msra.mxu0 0.0
        %1026 = vmatprep.subr.mxu0 0.0
        %1027 = vmatpush1.msra.mxu0 0.0
        %1028 = vmatprep.subr.mxu0 0.0
        %1029 = vmatpush1.msra.mxu0 0.0
        %1030 = vmatprep.subr.mxu0 0.0
        %1031 = vmatpush1.msra.mxu0 0.0
        %1032 = vmatprep.subr.mxu0 %v596
        %1033 = vmatpush1.msra.mxu0 %v595
        %1034 = vmatprep.subr.mxu0 %v592
        %1035 = vmatpush1.msra.mxu0 %v591
        %1036 = vmatprep.subr.mxu0 %v588
        %1037 = vmatpush1.msra.mxu0 %v587
        %1038 = vmatprep.subr.mxu0 %v584
        %1039 = vmatpush1.msra.mxu0 %v583
        %1040 = vmatprep.subr.mxu0 0.0
        %1041 = vmatpush2.msra.mxu0 0.0
        %1042 = vmatprep.subr.mxu0 0.0
        %1043 = vmatpush2.msra.mxu0 0.0
        %1044 = vmatprep.subr.mxu0 0.0
        %1045 = vmatpush2.msra.mxu0 0.0
        %1046 = vmatprep.subr.mxu0 0.0
        %1047 = vmatpush2.msra.mxu0 0.0
        %1048 = vmatprep.subr.mxu0 0.0
        %1049 = vmatpush2.msra.mxu0 0.0
        %1050 = vmatprep.subr.mxu0 0.0
        %1051 = vmatpush2.msra.mxu0 0.0
        %1052 = vmatprep.subr.mxu0 0.0
        %1053 = vmatpush2.msra.mxu0 0.0
        %1054 = vmatprep.subr.mxu0 0.0
        %1055 = vmatpush2.msra.mxu0 0.0
        %1056 = vmatprep.subr.mxu0 0.0
        %1057 = vmatpush2.msra.mxu0 0.0
        %1058 = vmatprep.subr.mxu0 0.0
        %1059 = vmatpush2.msra.mxu0 0.0
        %1060 = vmatprep.subr.mxu0 0.0
        %1061 = vmatpush2.msra.mxu0 0.0
        %1062 = vmatprep.subr.mxu0 0.0
        %1063 = vmatpush2.msra.mxu0 0.0
        %1064 = vmatprep.subr.mxu0 0.0
        %1065 = vmatpush2.msra.mxu0 0.0
        %1066 = vmatprep.subr.mxu0 0.0
        %1067 = vmatpush2.msra.mxu0 0.0
        %1068 = vmatprep.subr.mxu0 0.0
        %1069 = vmatpush2.msra.mxu0 0.0
        %1070 = vmatprep.subr.mxu0 0.0
        %1071 = vmatpush2.msra.mxu0 0.0
        %1072 = vmatprep.mubr.f32.mxu0 0.0
        %1073 = vmatmul.mubr.f32.gmra.mxu0 %v935
        %v1074 = vpop.f32.mrf.mxu0
        %v1075 = vadd.f32 0.0, %v1074
        %v1076 = vpop.f32.mrf.mxu0
        %v1077 = vadd.f32 0.0, %v1076
        %1078 = vdwg.mxu0
        %1080 = vrot.lane.b32.xlu0 %v933, 32
        %v1081 = vpop.permute.xlu0 %1080
        %v1083 = vlaneseq
        %v1084 = vshrl.u32 %v1083, 7
        %v1085 = vsub.s32 0, %v1084
        %v1086 = vrot.slane %v544, %v1085
        %v1087 = vlaneseq
        %v1088 = vshrl.u32 %v1087, 7
        %v1089 = vsub.s32 1, %v1088
        %v1090 = vrot.slane %v544, %v1089
        %v1091 = vlaneseq
        %v1092 = vshrl.u32 %v1091, 7
        %v1093 = vsub.s32 2, %v1092
        %v1094 = vrot.slane %v544, %v1093
        %v1095 = vlaneseq
        %v1096 = vshrl.u32 %v1095, 7
        %v1097 = vsub.s32 3, %v1096
        %v1098 = vrot.slane %v544, %v1097
        %v1103 = vsel %vm758, %v1081, 0
        %1105 = vmatprep.subr.mxu0 0.0
        %1106 = vmatpush1.msra.mxu0 0.0
        %1107 = vmatprep.subr.mxu0 0.0
        %1108 = vmatpush1.msra.mxu0 0.0
        %1109 = vmatprep.subr.mxu0 0.0
        %1110 = vmatpush1.msra.mxu0 0.0
        %1111 = vmatprep.subr.mxu0 0.0
        %1112 = vmatpush1.msra.mxu0 0.0
        %1113 = vmatprep.subr.mxu0 0.0
        %1114 = vmatpush1.msra.mxu0 0.0
        %1115 = vmatprep.subr.mxu0 0.0
        %1116 = vmatpush1.msra.mxu0 0.0
        %1117 = vmatprep.subr.mxu0 0.0
        %1118 = vmatpush1.msra.mxu0 0.0
        %1119 = vmatprep.subr.mxu0 0.0
        %1120 = vmatpush1.msra.mxu0 0.0
        %1121 = vmatprep.subr.mxu0 0.0
        %1122 = vmatpush1.msra.mxu0 0.0
        %1123 = vmatprep.subr.mxu0 0.0
        %1124 = vmatpush1.msra.mxu0 0.0
        %1125 = vmatprep.subr.mxu0 0.0
        %1126 = vmatpush1.msra.mxu0 0.0
        %1127 = vmatprep.subr.mxu0 0.0
        %1128 = vmatpush1.msra.mxu0 0.0
        %1129 = vmatprep.subr.mxu0 %v578
        %1130 = vmatpush1.msra.mxu0 %v577
        %1131 = vmatprep.subr.mxu0 %v574
        %1132 = vmatpush1.msra.mxu0 %v573
        %1133 = vmatprep.subr.mxu0 %v570
        %1134 = vmatpush1.msra.mxu0 %v569
        %1135 = vmatprep.subr.mxu0 %v566
        %1136 = vmatpush1.msra.mxu0 %v565
        %1137 = vmatprep.subr.mxu0 0.0
        %1138 = vmatpush2.msra.mxu0 0.0
        %1139 = vmatprep.subr.mxu0 0.0
        %1140 = vmatpush2.msra.mxu0 0.0
        %1141 = vmatprep.subr.mxu0 0.0
        %1142 = vmatpush2.msra.mxu0 0.0
        %1143 = vmatprep.subr.mxu0 0.0
        %1144 = vmatpush2.msra.mxu0 0.0
        %1145 = vmatprep.subr.mxu0 0.0
        %1146 = vmatpush2.msra.mxu0 0.0
        %1147 = vmatprep.subr.mxu0 0.0
        %1148 = vmatpush2.msra.mxu0 0.0
        %1149 = vmatprep.subr.mxu0 0.0
        %1150 = vmatpush2.msra.mxu0 0.0
        %1151 = vmatprep.subr.mxu0 0.0
        %1152 = vmatpush2.msra.mxu0 0.0
        %1153 = vmatprep.subr.mxu0 0.0
        %1154 = vmatpush2.msra.mxu0 0.0
        %1155 = vmatprep.subr.mxu0 0.0
        %1156 = vmatpush2.msra.mxu0 0.0
        %1157 = vmatprep.subr.mxu0 0.0
        %1158 = vmatpush2.msra.mxu0 0.0
        %1159 = vmatprep.subr.mxu0 0.0
        %1160 = vmatpush2.msra.mxu0 0.0
        %1161 = vmatprep.subr.mxu0 0.0
        %1162 = vmatpush2.msra.mxu0 0.0
        %1163 = vmatprep.subr.mxu0 0.0
        %1164 = vmatpush2.msra.mxu0 0.0
        %1165 = vmatprep.subr.mxu0 0.0
        %1166 = vmatpush2.msra.mxu0 0.0
        %1167 = vmatprep.subr.mxu0 0.0
        %1168 = vmatpush2.msra.mxu0 0.0
        %1169 = vmatprep.mubr.f32.mxu0 0.0
        %1170 = vmatmul.mubr.f32.gmra.mxu0 %v1103
        %v1171 = vpop.f32.mrf.mxu0
        %v1172 = vadd.f32 %v1086, %v1171
        %v1173 = vpop.f32.mrf.mxu0
        %v1174 = vadd.f32 %v1090, %v1173
        %1175 = vdwg.mxu0
        %1176 = vmatprep.subr.mxu0 0.0
        %1177 = vmatpush1.msra.mxu0 0.0
        %1178 = vmatprep.subr.mxu0 0.0
        %1179 = vmatpush1.msra.mxu0 0.0
        %1180 = vmatprep.subr.mxu0 0.0
        %1181 = vmatpush1.msra.mxu0 0.0
        %1182 = vmatprep.subr.mxu0 0.0
        %1183 = vmatpush1.msra.mxu0 0.0
        %1184 = vmatprep.subr.mxu0 0.0
        %1185 = vmatpush1.msra.mxu0 0.0
        %1186 = vmatprep.subr.mxu0 0.0
        %1187 = vmatpush1.msra.mxu0 0.0
        %1188 = vmatprep.subr.mxu0 0.0
        %1189 = vmatpush1.msra.mxu0 0.0
        %1190 = vmatprep.subr.mxu0 0.0
        %1191 = vmatpush1.msra.mxu0 0.0
        %1192 = vmatprep.subr.mxu0 0.0
        %1193 = vmatpush1.msra.mxu0 0.0
        %1194 = vmatprep.subr.mxu0 0.0
        %1195 = vmatpush1.msra.mxu0 0.0
        %1196 = vmatprep.subr.mxu0 0.0
        %1197 = vmatpush1.msra.mxu0 0.0
        %1198 = vmatprep.subr.mxu0 0.0
        %1199 = vmatpush1.msra.mxu0 0.0
        %1200 = vmatprep.subr.mxu0 %v580
        %1201 = vmatpush1.msra.mxu0 %v579
        %1202 = vmatprep.subr.mxu0 %v576
        %1203 = vmatpush1.msra.mxu0 %v575
        %1204 = vmatprep.subr.mxu0 %v572
        %1205 = vmatpush1.msra.mxu0 %v571
        %1206 = vmatprep.subr.mxu0 %v568
        %1207 = vmatpush1.msra.mxu0 %v567
        %1208 = vmatprep.subr.mxu0 0.0
        %1209 = vmatpush2.msra.mxu0 0.0
        %1210 = vmatprep.subr.mxu0 0.0
        %1211 = vmatpush2.msra.mxu0 0.0
        %1212 = vmatprep.subr.mxu0 0.0
        %1213 = vmatpush2.msra.mxu0 0.0
        %1214 = vmatprep.subr.mxu0 0.0
        %1215 = vmatpush2.msra.mxu0 0.0
        %1216 = vmatprep.subr.mxu0 0.0
        %1217 = vmatpush2.msra.mxu0 0.0
        %1218 = vmatprep.subr.mxu0 0.0
        %1219 = vmatpush2.msra.mxu0 0.0
        %1220 = vmatprep.subr.mxu0 0.0
        %1221 = vmatpush2.msra.mxu0 0.0
        %1222 = vmatprep.subr.mxu0 0.0
        %1223 = vmatpush2.msra.mxu0 0.0
        %1224 = vmatprep.subr.mxu0 0.0
        %1225 = vmatpush2.msra.mxu0 0.0
        %1226 = vmatprep.subr.mxu0 0.0
        %1227 = vmatpush2.msra.mxu0 0.0
        %1228 = vmatprep.subr.mxu0 0.0
        %1229 = vmatpush2.msra.mxu0 0.0
        %1230 = vmatprep.subr.mxu0 0.0
        %1231 = vmatpush2.msra.mxu0 0.0
        %1232 = vmatprep.subr.mxu0 0.0
        %1233 = vmatpush2.msra.mxu0 0.0
        %1234 = vmatprep.subr.mxu0 0.0
        %1235 = vmatpush2.msra.mxu0 0.0
        %1236 = vmatprep.subr.mxu0 0.0
        %1237 = vmatpush2.msra.mxu0 0.0
        %1238 = vmatprep.subr.mxu0 0.0
        %1239 = vmatpush2.msra.mxu0 0.0
        %1240 = vmatprep.mubr.f32.mxu0 0.0
        %1241 = vmatmul.mubr.f32.gmra.mxu0 %v1103
        %v1242 = vpop.f32.mrf.mxu0
        %v1243 = vadd.f32 %v1094, %v1242
        %v1244 = vpop.f32.mrf.mxu0
        %v1245 = vadd.f32 %v1098, %v1244
        %1246 = vdwg.mxu0
        %v1247 = vadd.f32 %v1172, %v1004
        %v1248 = vadd.f32 %v1174, %v1006
        %v1249 = vadd.f32 %v1243, %v1075
        %v1250 = vadd.f32 %v1245, %v1077
        %v1251 = vtanh.pop %v1247
        %v1252 = vtanh.pop %v1248
        %v1253 = vtanh.pop %v1249
        %v1254 = vtanh.pop %v1250
        %1255 = vmatprep.subr.mxu0 0.0
        %1256 = vmatpush1.msra.mxu0 %v612
        %1257 = vmatprep.subr.mxu0 0.0
        %1258 = vmatpush1.msra.mxu0 %v611
        %1259 = vmatprep.subr.mxu0 0.0
        %1260 = vmatpush1.msra.mxu0 %v610
        %1261 = vmatprep.subr.mxu0 0.0
        %1262 = vmatpush1.msra.mxu0 %v609
        %1263 = vmatprep.subr.mxu0 0.0
        %1264 = vmatpush1.msra.mxu0 %v608
        %1265 = vmatprep.subr.mxu0 0.0
        %1266 = vmatpush1.msra.mxu0 %v607
        %1267 = vmatprep.subr.mxu0 0.0
        %1268 = vmatpush1.msra.mxu0 %v606
        %1269 = vmatprep.subr.mxu0 0.0
        %1270 = vmatpush1.msra.mxu0 %v605
        %1271 = vmatprep.subr.mxu0 0.0
        %1272 = vmatpush1.msra.mxu0 %v604
        %1273 = vmatprep.subr.mxu0 0.0
        %1274 = vmatpush1.msra.mxu0 %v603
        %1275 = vmatprep.subr.mxu0 0.0
        %1276 = vmatpush1.msra.mxu0 %v602
        %1277 = vmatprep.subr.mxu0 0.0
        %1278 = vmatpush1.msra.mxu0 %v601
        %1279 = vmatprep.subr.mxu0 0.0
        %1280 = vmatpush1.msra.mxu0 %v600
        %1281 = vmatprep.subr.mxu0 0.0
        %1282 = vmatpush1.msra.mxu0 %v599
        %1283 = vmatprep.subr.mxu0 0.0
        %1284 = vmatpush1.msra.mxu0 %v598
        %1285 = vmatprep.subr.mxu0 0.0
        %1286 = vmatpush1.msra.mxu0 %v597
        %1287 = vmatprep.subr.mxu0 0.0
        %1288 = vmatpush2.msra.mxu0 %v628
        %1289 = vmatprep.subr.mxu0 0.0
        %1290 = vmatpush2.msra.mxu0 %v627
        %1291 = vmatprep.subr.mxu0 0.0
        %1292 = vmatpush2.msra.mxu0 %v626
        %1293 = vmatprep.subr.mxu0 0.0
        %1294 = vmatpush2.msra.mxu0 %v625
        %1295 = vmatprep.subr.mxu0 0.0
        %1296 = vmatpush2.msra.mxu0 %v624
        %1297 = vmatprep.subr.mxu0 0.0
        %1298 = vmatpush2.msra.mxu0 %v623
        %1299 = vmatprep.subr.mxu0 0.0
        %1300 = vmatpush2.msra.mxu0 %v622
        %1301 = vmatprep.subr.mxu0 0.0
        %1302 = vmatpush2.msra.mxu0 %v621
        %1303 = vmatprep.subr.mxu0 0.0
        %1304 = vmatpush2.msra.mxu0 %v620
        %1305 = vmatprep.subr.mxu0 0.0
        %1306 = vmatpush2.msra.mxu0 %v619
        %1307 = vmatprep.subr.mxu0 0.0
        %1308 = vmatpush2.msra.mxu0 %v618
        %1309 = vmatprep.subr.mxu0 0.0
        %1310 = vmatpush2.msra.mxu0 %v617
        %1311 = vmatprep.subr.mxu0 0.0
        %1312 = vmatpush2.msra.mxu0 %v616
        %1313 = vmatprep.subr.mxu0 0.0
        %1314 = vmatpush2.msra.mxu0 %v615
        %1315 = vmatprep.subr.mxu0 0.0
        %1316 = vmatpush2.msra.mxu0 %v614
        %1317 = vmatprep.subr.mxu0 0.0
        %1318 = vmatpush2.msra.mxu0 %v613
        %1319 = vmatprep.mubr.f32.mxu0 %v1252
        %1320 = vmatmul.mubr.f32.gmra.mxu0 %v1251
        %v1321 = vpop.f32.mrf.mxu0
        %v1322 = vadd.f32 %v545, %v1321
        %v1323 = vpop.f32.mrf.mxu0
        %1324 = vdwg.mxu0
        %1325 = vmatprep.subr.mxu0 0.0
        %1326 = vmatpush1.msra.mxu0 %v644
        %1327 = vmatprep.subr.mxu0 0.0
        %1328 = vmatpush1.msra.mxu0 %v643
        %1329 = vmatprep.subr.mxu0 0.0
        %1330 = vmatpush1.msra.mxu0 %v642
        %1331 = vmatprep.subr.mxu0 0.0
        %1332 = vmatpush1.msra.mxu0 %v641
        %1333 = vmatprep.subr.mxu0 0.0
        %1334 = vmatpush1.msra.mxu0 %v640
        %1335 = vmatprep.subr.mxu0 0.0
        %1336 = vmatpush1.msra.mxu0 %v639
        %1337 = vmatprep.subr.mxu0 0.0
        %1338 = vmatpush1.msra.mxu0 %v638
        %1339 = vmatprep.subr.mxu0 0.0
        %1340 = vmatpush1.msra.mxu0 %v637
        %1341 = vmatprep.subr.mxu0 0.0
        %1342 = vmatpush1.msra.mxu0 %v636
        %1343 = vmatprep.subr.mxu0 0.0
        %1344 = vmatpush1.msra.mxu0 %v635
        %1345 = vmatprep.subr.mxu0 0.0
        %1346 = vmatpush1.msra.mxu0 %v634
        %1347 = vmatprep.subr.mxu0 0.0
        %1348 = vmatpush1.msra.mxu0 %v633
        %1349 = vmatprep.subr.mxu0 0.0
        %1350 = vmatpush1.msra.mxu0 %v632
        %1351 = vmatprep.subr.mxu0 0.0
        %1352 = vmatpush1.msra.mxu0 %v631
        %1353 = vmatprep.subr.mxu0 0.0
        %1354 = vmatpush1.msra.mxu0 %v630
        %1355 = vmatprep.subr.mxu0 0.0
        %1356 = vmatpush1.msra.mxu0 %v629
        %1357 = vmatprep.subr.mxu0 0.0
        %1358 = vmatpush2.msra.mxu0 %v660
        %1359 = vmatprep.subr.mxu0 0.0
        %1360 = vmatpush2.msra.mxu0 %v659
        %1361 = vmatprep.subr.mxu0 0.0
        %1362 = vmatpush2.msra.mxu0 %v658
        %1363 = vmatprep.subr.mxu0 0.0
        %1364 = vmatpush2.msra.mxu0 %v657
        %1365 = vmatprep.subr.mxu0 0.0
        %1366 = vmatpush2.msra.mxu0 %v656
        %1367 = vmatprep.subr.mxu0 0.0
        %1368 = vmatpush2.msra.mxu0 %v655
        %1369 = vmatprep.subr.mxu0 0.0
        %1370 = vmatpush2.msra.mxu0 %v654
        %1371 = vmatprep.subr.mxu0 0.0
        %1372 = vmatpush2.msra.mxu0 %v653
        %1373 = vmatprep.subr.mxu0 0.0
        %1374 = vmatpush2.msra.mxu0 %v652
        %1375 = vmatprep.subr.mxu0 0.0
        %1376 = vmatpush2.msra.mxu0 %v651
        %1377 = vmatprep.subr.mxu0 0.0
        %1378 = vmatpush2.msra.mxu0 %v650
        %1379 = vmatprep.subr.mxu0 0.0
        %1380 = vmatpush2.msra.mxu0 %v649
        %1381 = vmatprep.subr.mxu0 0.0
        %1382 = vmatpush2.msra.mxu0 %v648
        %1383 = vmatprep.subr.mxu0 0.0
        %1384 = vmatpush2.msra.mxu0 %v647
        %1385 = vmatprep.subr.mxu0 0.0
        %1386 = vmatpush2.msra.mxu0 %v646
        %1387 = vmatprep.subr.mxu0 0.0
        %1388 = vmatpush2.msra.mxu0 %v645
        %1389 = vmatprep.mubr.f32.mxu0 %v1254
        %1390 = vmatmul.mubr.f32.gmra.mxu0 %v1253
        %v1391 = vpop.f32.mrf.mxu0
        %v1392 = vadd.f32 %v1322, %v1391
        %v1393 = vpop.f32.mrf.mxu0
        %1394 = vdwg.mxu0
        %vm1395 = vcmask 122880
        %v1396 = vsel %vm1395, %v1392, -inf
        %1397 = vmax.xlane.f32.xlu0 %v1396
        %v1398 = vpop.xlane.xlu0 %1397
        %v1399 = vsub.f32 %v1392, %v1398
        %v1400 = vmul.f32 %v1399, 1.442695
        %v1401 = vpow.pop %v1400
        %v1402 = vsel %vm1395, %v1401, 0.0
        %1403 = vadd.xlane.f32.xlu0 %v1402
        %v1404 = vpop.xlane.xlu0 %1403
        %v1405 = vrcp.pop %v1404
        %v1406 = vmul.f32 %v1401, %v1405
        %v1408 = vsel %vm683, %v1406, 0
        %1410 = vmatprep.subr.mxu0 0.0
        %1411 = vmatpush1.msra.mxu0 0.0
        %1412 = vmatprep.subr.mxu0 0.0
        %1413 = vmatpush1.msra.mxu0 0.0
        %1414 = vmatprep.subr.mxu0 0.0
        %1415 = vmatpush1.msra.mxu0 0.0
        %1416 = vmatprep.subr.mxu0 0.0
        %1417 = vmatpush1.msra.mxu0 0.0
        %1418 = vmatprep.subr.mxu0 0.0
        %1419 = vmatpush1.msra.mxu0 0.0
        %1420 = vmatprep.subr.mxu0 0.0
        %1421 = vmatpush1.msra.mxu0 0.0
        %1422 = vmatprep.subr.mxu0 0.0
        %1423 = vmatpush1.msra.mxu0 0.0
        %1424 = vmatprep.subr.mxu0 0.0
        %1425 = vmatpush1.msra.mxu0 0.0
        %1426 = vmatprep.subr.mxu0 0.0
        %1427 = vmatpush1.msra.mxu0 0.0
        %1428 = vmatprep.subr.mxu0 0.0
        %1429 = vmatpush1.msra.mxu0 0.0
        %1430 = vmatprep.subr.mxu0 0.0
        %1431 = vmatpush1.msra.mxu0 0.0
        %1432 = vmatprep.subr.mxu0 0.0
        %1433 = vmatpush1.msra.mxu0 0.0
        %1434 = vmatprep.subr.mxu0 0.0
        %1435 = vmatpush1.msra.mxu0 0.0
        %1436 = vmatprep.subr.mxu0 0.0
        %1437 = vmatpush1.msra.mxu0 0.0
        %1438 = vmatprep.subr.mxu0 0.0
        %1439 = vmatpush1.msra.mxu0 %v543
        %1440 = vmatprep.subr.mxu0 0.0
        %1441 = vmatpush1.msra.mxu0 %v542
        %1442 = vmatprep.subr.mxu0 0.0
        %1443 = vmatpush2.msra.mxu0 0.0
        %1444 = vmatprep.subr.mxu0 0.0
        %1445 = vmatpush2.msra.mxu0 0.0
        %1446 = vmatprep.subr.mxu0 0.0
        %1447 = vmatpush2.msra.mxu0 0.0
        %1448 = vmatprep.subr.mxu0 0.0
        %1449 = vmatpush2.msra.mxu0 0.0
        %1450 = vmatprep.subr.mxu0 0.0
        %1451 = vmatpush2.msra.mxu0 0.0
        %1452 = vmatprep.subr.mxu0 0.0
        %1453 = vmatpush2.msra.mxu0 0.0
        %1454 = vmatprep.subr.mxu0 0.0
        %1455 = vmatpush2.msra.mxu0 0.0
        %1456 = vmatprep.subr.mxu0 0.0
        %1457 = vmatpush2.msra.mxu0 0.0
        %1458 = vmatprep.subr.mxu0 0.0
        %1459 = vmatpush2.msra.mxu0 0.0
        %1460 = vmatprep.subr.mxu0 0.0
        %1461 = vmatpush2.msra.mxu0 0.0
        %1462 = vmatprep.subr.mxu0 0.0
        %1463 = vmatpush2.msra.mxu0 0.0
        %1464 = vmatprep.subr.mxu0 0.0
        %1465 = vmatpush2.msra.mxu0 0.0
        %1466 = vmatprep.subr.mxu0 0.0
        %1467 = vmatpush2.msra.mxu0 0.0
        %1468 = vmatprep.subr.mxu0 0.0
        %1469 = vmatpush2.msra.mxu0 0.0
        %1470 = vmatprep.subr.mxu0 0.0
        %1471 = vmatpush2.msra.mxu0 0.0
        %1472 = vmatprep.subr.mxu0 0.0
        %1473 = vmatpush2.msra.mxu0 0.0
        %1474 = vmatprep.mubr.f32.mxu0 0.0
        %1475 = vmatmul.mubr.f32.gmra.mxu0 %v1408
        %v1476 = vpop.f32.mrf.mxu0
        %v1477 = vadd.f32 0.0, %v1476
        %v1478 = vpop.f32.mrf.mxu0
        %1479 = vdwg.mxu0
        %v1480 = vadd.f32 %v1406, 0.0
        %1483 = vrot.lane.b32.xlu0 %v1477, 32
        %v1484 = vpop.permute.xlu0 %1483
        %v1486 = vsel %vm758, %v1081, %v1484
        %v1487 = vsel %vm834, %v1486, 0.0
        %v1489 = vsel %vm836, %v1487, 0
        %1491 = vmatprep.subr.mxu0 0.0
        %1492 = vmatpush1.msra.mxu0 0.0
        %1493 = vmatprep.subr.mxu0 0.0
        %1494 = vmatpush1.msra.mxu0 0.0
        %1495 = vmatprep.subr.mxu0 0.0
        %1496 = vmatpush1.msra.mxu0 0.0
        %1497 = vmatprep.subr.mxu0 0.0
        %1498 = vmatpush1.msra.mxu0 0.0
        %1499 = vmatprep.subr.mxu0 0.0
        %1500 = vmatpush1.msra.mxu0 %v672
        %1501 = vmatprep.subr.mxu0 0.0
        %1502 = vmatpush1.msra.mxu0 %v671
        %1503 = vmatprep.subr.mxu0 0.0
        %1504 = vmatpush1.msra.mxu0 %v670
        %1505 = vmatprep.subr.mxu0 0.0
        %1506 = vmatpush1.msra.mxu0 %v669
        %1507 = vmatprep.subr.mxu0 0.0
        %1508 = vmatpush1.msra.mxu0 %v668
        %1509 = vmatprep.subr.mxu0 0.0
        %1510 = vmatpush1.msra.mxu0 %v667
        %1511 = vmatprep.subr.mxu0 0.0
        %1512 = vmatpush1.msra.mxu0 %v666
        %1513 = vmatprep.subr.mxu0 0.0
        %1514 = vmatpush1.msra.mxu0 %v665
        %1515 = vmatprep.subr.mxu0 0.0
        %1516 = vmatpush1.msra.mxu0 %v664
        %1517 = vmatprep.subr.mxu0 0.0
        %1518 = vmatpush1.msra.mxu0 %v663
        %1519 = vmatprep.subr.mxu0 0.0
        %1520 = vmatpush1.msra.mxu0 %v662
        %1521 = vmatprep.subr.mxu0 0.0
        %1522 = vmatpush1.msra.mxu0 %v661
        %1523 = vmatprep.subr.mxu0 0.0
        %1524 = vmatpush2.msra.mxu0 0.0
        %1525 = vmatprep.subr.mxu0 0.0
        %1526 = vmatpush2.msra.mxu0 0.0
        %1527 = vmatprep.subr.mxu0 0.0
        %1528 = vmatpush2.msra.mxu0 0.0
        %1529 = vmatprep.subr.mxu0 0.0
        %1530 = vmatpush2.msra.mxu0 0.0
        %1531 = vmatprep.subr.mxu0 0.0
        %1532 = vmatpush2.msra.mxu0 0.0
        %1533 = vmatprep.subr.mxu0 0.0
        %1534 = vmatpush2.msra.mxu0 0.0
        %1535 = vmatprep.subr.mxu0 0.0
        %1536 = vmatpush2.msra.mxu0 0.0
        %1537 = vmatprep.subr.mxu0 0.0
        %1538 = vmatpush2.msra.mxu0 0.0
        %1539 = vmatprep.subr.mxu0 0.0
        %1540 = vmatpush2.msra.mxu0 0.0
        %1541 = vmatprep.subr.mxu0 0.0
        %1542 = vmatpush2.msra.mxu0 0.0
        %1543 = vmatprep.subr.mxu0 0.0
        %1544 = vmatpush2.msra.mxu0 0.0
        %1545 = vmatprep.subr.mxu0 0.0
        %1546 = vmatpush2.msra.mxu0 0.0
        %1547 = vmatprep.subr.mxu0 0.0
        %1548 = vmatpush2.msra.mxu0 0.0
        %1549 = vmatprep.subr.mxu0 0.0
        %1550 = vmatpush2.msra.mxu0 0.0
        %1551 = vmatprep.subr.mxu0 0.0
        %1552 = vmatpush2.msra.mxu0 0.0
        %1553 = vmatprep.subr.mxu0 0.0
        %1554 = vmatpush2.msra.mxu0 0.0
        %1555 = vmatprep.mubr.f32.mxu0 0.0
        %1556 = vmatmul.mubr.f32.gmra.mxu0 %v1489
        %v1557 = vpop.f32.mrf.mxu0
        %v1558 = vadd.f32 %v673, %v1557
        %v1559 = vpop.f32.mrf.mxu0
        %1560 = vdwg.mxu0
        %v1561 = vxor.u32 %v1558, 2147483648
        %v1562 = vmul.f32 %v1561, 1.442695
        %v1563 = vpow.pop %v1562
        %v1564 = vadd.f32 %v1563, 1.0
        %v1565 = vrcp.pop %v1564
        %v1566 = vmul.f32 1.0, %v1565
        %v1567 = vtanh.pop %v1558
        %v1568 = vmul.f32 %v1566, 0.0
        %1570 = vrot.lane.b32.xlu0 %v1567, 64
        %v1571 = vpop.permute.xlu0 %1570
        %v1573 = vmul.f32 %v1566, %v1571
        %1575 = vrot.lane.b32.xlu0 %v1573, 32
        %v1576 = vpop.permute.xlu0 %1575
        %v1578 = vadd.f32 %v1568, %v1576
        %v1579 = vtanh.pop %v1578
        %1581 = vrot.lane.b32.xlu0 %v1579, 64
        %v1582 = vpop.permute.xlu0 %1581
        %v1584 = vmul.f32 %v1566, %v1582
        %1586 = vrot.lane.b32.xlu0 %v1584, 32
        %v1587 = vpop.permute.xlu0 %1586
        %v1589 = vsel %vm758, %v1587, %v1484
        %v1591 = vsel %vm834, %v1589, 0
        %1593 = vmatprep.subr.mxu0 0.0
        %1594 = vmatpush1.msra.mxu0 0.0
        %1595 = vmatprep.subr.mxu0 0.0
        %1596 = vmatpush1.msra.mxu0 0.0
        %1597 = vmatprep.subr.mxu0 0.0
        %1598 = vmatpush1.msra.mxu0 0.0
        %1599 = vmatprep.subr.mxu0 0.0
        %1600 = vmatpush1.msra.mxu0 0.0
        %1601 = vmatprep.subr.mxu0 0.0
        %1602 = vmatpush1.msra.mxu0 0.0
        %1603 = vmatprep.subr.mxu0 0.0
        %1604 = vmatpush1.msra.mxu0 0.0
        %1605 = vmatprep.subr.mxu0 0.0
        %1606 = vmatpush1.msra.mxu0 0.0
        %1607 = vmatprep.subr.mxu0 0.0
        %1608 = vmatpush1.msra.mxu0 0.0
        %1609 = vmatprep.subr.mxu0 0.0
        %1610 = vmatpush1.msra.mxu0 %v681
        %1611 = vmatprep.subr.mxu0 0.0
        %1612 = vmatpush1.msra.mxu0 %v680
        %1613 = vmatprep.subr.mxu0 0.0
        %1614 = vmatpush1.msra.mxu0 %v679
        %1615 = vmatprep.subr.mxu0 0.0
        %1616 = vmatpush1.msra.mxu0 %v678
        %1617 = vmatprep.subr.mxu0 0.0
        %1618 = vmatpush1.msra.mxu0 %v677
        %1619 = vmatprep.subr.mxu0 0.0
        %1620 = vmatpush1.msra.mxu0 %v676
        %1621 = vmatprep.subr.mxu0 0.0
        %1622 = vmatpush1.msra.mxu0 %v675
        %1623 = vmatprep.subr.mxu0 0.0
        %1624 = vmatpush1.msra.mxu0 %v674
        %1625 = vmatprep.subr.mxu0 0.0
        %1626 = vmatpush2.msra.mxu0 0.0
        %1627 = vmatprep.subr.mxu0 0.0
        %1628 = vmatpush2.msra.mxu0 0.0
        %1629 = vmatprep.subr.mxu0 0.0
        %1630 = vmatpush2.msra.mxu0 0.0
        %1631 = vmatprep.subr.mxu0 0.0
        %1632 = vmatpush2.msra.mxu0 0.0
        %1633 = vmatprep.subr.mxu0 0.0
        %1634 = vmatpush2.msra.mxu0 0.0
        %1635 = vmatprep.subr.mxu0 0.0
        %1636 = vmatpush2.msra.mxu0 0.0
        %1637 = vmatprep.subr.mxu0 0.0
        %1638 = vmatpush2.msra.mxu0 0.0
        %1639 = vmatprep.subr.mxu0 0.0
        %1640 = vmatpush2.msra.mxu0 0.0
        %1641 = vmatprep.subr.mxu0 0.0
        %1642 = vmatpush2.msra.mxu0 0.0
        %1643 = vmatprep.subr.mxu0 0.0
        %1644 = vmatpush2.msra.mxu0 0.0
        %1645 = vmatprep.subr.mxu0 0.0
        %1646 = vmatpush2.msra.mxu0 0.0
        %1647 = vmatprep.subr.mxu0 0.0
        %1648 = vmatpush2.msra.mxu0 0.0
        %1649 = vmatprep.subr.mxu0 0.0
        %1650 = vmatpush2.msra.mxu0 0.0
        %1651 = vmatprep.subr.mxu0 0.0
        %1652 = vmatpush2.msra.mxu0 0.0
        %1653 = vmatprep.subr.mxu0 0.0
        %1654 = vmatpush2.msra.mxu0 0.0
        %1655 = vmatprep.subr.mxu0 0.0
        %1656 = vmatpush2.msra.mxu0 0.0
        %1657 = vmatprep.mubr.f32.mxu0 0.0
        %1658 = vmatmul.mubr.f32.gmra.mxu0 %v1591
        %v1659 = vpop.f32.mrf.mxu0
        %v1660 = vadd.f32 %v682, %v1659
        %v1661 = vpop.f32.mrf.mxu0
        %1662 = vdwg.mxu0
        %1663 = vrot.lane.b32.xlu0 %v1406, 17
        %v1664 = vpop.permute.xlu0 %1663
        %vm1666 = vcmask 138240
        %v1667 = vsel %vm1666, %v1660, %v1664
        %v1668 = vrot.slane %v541, 1
        %v1669 = vsel %vm683, %v1668, 0
        %1671 = vmatprep.subr.mxu0 0.0
        %1672 = vmatpush1.msra.mxu0 0.0
        %1673 = vmatprep.subr.mxu0 0.0
        %1674 = vmatpush1.msra.mxu0 0.0
        %1675 = vmatprep.subr.mxu0 0.0
        %1676 = vmatpush1.msra.mxu0 0.0
        %1677 = vmatprep.subr.mxu0 0.0
        %1678 = vmatpush1.msra.mxu0 0.0
        %1679 = vmatprep.subr.mxu0 0.0
        %1680 = vmatpush1.msra.mxu0 0.0
        %1681 = vmatprep.subr.mxu0 0.0
        %1682 = vmatpush1.msra.mxu0 0.0
        %1683 = vmatprep.subr.mxu0 0.0
        %1684 = vmatpush1.msra.mxu0 0.0
        %1685 = vmatprep.subr.mxu0 0.0
        %1686 = vmatpush1.msra.mxu0 0.0
        %1687 = vmatprep.subr.mxu0 0.0
        %1688 = vmatpush1.msra.mxu0 0.0
        %1689 = vmatprep.subr.mxu0 0.0
        %1690 = vmatpush1.msra.mxu0 0.0
        %1691 = vmatprep.subr.mxu0 0.0
        %1692 = vmatpush1.msra.mxu0 0.0
        %1693 = vmatprep.subr.mxu0 0.0
        %1694 = vmatpush1.msra.mxu0 0.0
        %1695 = vmatprep.subr.mxu0 0.0
        %1696 = vmatpush1.msra.mxu0 0.0
        %1697 = vmatprep.subr.mxu0 0.0
        %1698 = vmatpush1.msra.mxu0 0.0
        %1699 = vmatprep.subr.mxu0 0.0
        %1700 = vmatpush1.msra.mxu0 %v547
        %1701 = vmatprep.subr.mxu0 0.0
        %1702 = vmatpush1.msra.mxu0 %v546
        %1703 = vmatprep.subr.mxu0 0.0
        %1704 = vmatpush2.msra.mxu0 0.0
        %1705 = vmatprep.subr.mxu0 0.0
        %1706 = vmatpush2.msra.mxu0 0.0
        %1707 = vmatprep.subr.mxu0 0.0
        %1708 = vmatpush2.msra.mxu0 0.0
        %1709 = vmatprep.subr.mxu0 0.0
        %1710 = vmatpush2.msra.mxu0 0.0
        %1711 = vmatprep.subr.mxu0 0.0
        %1712 = vmatpush2.msra.mxu0 0.0
        %1713 = vmatprep.subr.mxu0 0.0
        %1714 = vmatpush2.msra.mxu0 0.0
        %1715 = vmatprep.subr.mxu0 0.0
        %1716 = vmatpush2.msra.mxu0 0.0
        %1717 = vmatprep.subr.mxu0 0.0
        %1718 = vmatpush2.msra.mxu0 0.0
        %1719 = vmatprep.subr.mxu0 0.0
        %1720 = vmatpush2.msra.mxu0 0.0
        %1721 = vmatprep.subr.mxu0 0.0
        %1722 = vmatpush2.msra.mxu0 0.0
        %1723 = vmatprep.subr.mxu0 0.0
        %1724 = vmatpush2.msra.mxu0 0.0
        %1725 = vmatprep.subr.mxu0 0.0
        %1726 = vmatpush2.msra.mxu0 0.0
        %1727 = vmatprep.subr.mxu0 0.0
        %1728 = vmatpush2.msra.mxu0 0.0
        %1729 = vmatprep.subr.mxu0 0.0
        %1730 = vmatpush2.msra.mxu0 0.0
        %1731 = vmatprep.subr.mxu0 0.0
        %1732 = vmatpush2.msra.mxu0 0.0
        %1733 = vmatprep.subr.mxu0 0.0
        %1734 = vmatpush2.msra.mxu0 0.0
        %1735 = vmatprep.mubr.f32.mxu0 0.0
        %1736 = vmatmul.mubr.f32.gmra.mxu0 %v1669
        %v1737 = vpop.f32.mrf.mxu0
        %v1738 = vadd.f32 0.0, %v1737
        %v1739 = vpop.f32.mrf.mxu0
        %1740 = vdwg.mxu0
        %v1741 = vmax.f32 %v1738, 0.0
        %v1743 = vsel %vm758, %v1741, 0
        %1745 = vmatprep.subr.mxu0 0.0
        %1746 = vmatpush1.msra.mxu0 0.0
        %1747 = vmatprep.subr.mxu0 0.0
        %1748 = vmatpush1.msra.mxu0 0.0
        %1749 = vmatprep.subr.mxu0 0.0
        %1750 = vmatpush1.msra.mxu0 0.0
        %1751 = vmatprep.subr.mxu0 0.0
        %1752 = vmatpush1.msra.mxu0 0.0
        %1753 = vmatprep.subr.mxu0 0.0
        %1754 = vmatpush1.msra.mxu0 0.0
        %1755 = vmatprep.subr.mxu0 0.0
        %1756 = vmatpush1.msra.mxu0 0.0
        %1757 = vmatprep.subr.mxu0 0.0
        %1758 = vmatpush1.msra.mxu0 0.0
        %1759 = vmatprep.subr.mxu0 0.0
        %1760 = vmatpush1.msra.mxu0 0.0
        %1761 = vmatprep.subr.mxu0 0.0
        %1762 = vmatpush1.msra.mxu0 0.0
        %1763 = vmatprep.subr.mxu0 0.0
        %1764 = vmatpush1.msra.mxu0 0.0
        %1765 = vmatprep.subr.mxu0 0.0
        %1766 = vmatpush1.msra.mxu0 0.0
        %1767 = vmatprep.subr.mxu0 0.0
        %1768 = vmatpush1.msra.mxu0 0.0
        %1769 = vmatprep.subr.mxu0 0.0
        %1770 = vmatpush1.msra.mxu0 %v551
        %1771 = vmatprep.subr.mxu0 0.0
        %1772 = vmatpush1.msra.mxu0 %v550
        %1773 = vmatprep.subr.mxu0 0.0
        %1774 = vmatpush1.msra.mxu0 %v549
        %1775 = vmatprep.subr.mxu0 0.0
        %1776 = vmatpush1.msra.mxu0 %v548
        %1777 = vmatprep.subr.mxu0 0.0
        %1778 = vmatpush2.msra.mxu0 0.0
        %1779 = vmatprep.subr.mxu0 0.0
        %1780 = vmatpush2.msra.mxu0 0.0
        %1781 = vmatprep.subr.mxu0 0.0
        %1782 = vmatpush2.msra.mxu0 0.0
        %1783 = vmatprep.subr.mxu0 0.0
        %1784 = vmatpush2.msra.mxu0 0.0
        %1785 = vmatprep.subr.mxu0 0.0
        %1786 = vmatpush2.msra.mxu0 0.0
        %1787 = vmatprep.subr.mxu0 0.0
        %1788 = vmatpush2.msra.mxu0 0.0
        %1789 = vmatprep.subr.mxu0 0.0
        %1790 = vmatpush2.msra.mxu0 0.0
        %1791 = vmatprep.subr.mxu0 0.0
        %1792 = vmatpush2.msra.mxu0 0.0
        %1793 = vmatprep.subr.mxu0 0.0
        %1794 = vmatpush2.msra.mxu0 0.0
        %1795 = vmatprep.subr.mxu0 0.0
        %1796 = vmatpush2.msra.mxu0 0.0
        %1797 = vmatprep.subr.mxu0 0.0
        %1798 = vmatpush2.msra.mxu0 0.0
        %1799 = vmatprep.subr.mxu0 0.0
        %1800 = vmatpush2.msra.mxu0 0.0
        %1801 = vmatprep.subr.mxu0 0.0
        %1802 = vmatpush2.msra.mxu0 0.0
        %1803 = vmatprep.subr.mxu0 0.0
        %1804 = vmatpush2.msra.mxu0 0.0
        %1805 = vmatprep.subr.mxu0 0.0
        %1806 = vmatpush2.msra.mxu0 0.0
        %1807 = vmatprep.subr.mxu0 0.0
        %1808 = vmatpush2.msra.mxu0 0.0
        %1809 = vmatprep.mubr.f32.mxu0 0.0
        %1810 = vmatmul.mubr.f32.gmra.mxu0 %v1743
        %v1811 = vpop.f32.mrf.mxu0
        %v1812 = vadd.f32 0.0, %v1811
        %v1813 = vpop.f32.mrf.mxu0
        %1814 = vdwg.mxu0
        %v1815 = vmax.f32 %v1812, 0.0
        %1816 = vrot.lane.b32.xlu0 %v933, 96
        %v1817 = vpop.permute.xlu0 %1816
        %v1819 = vsel %vm758, %v1815, %v1484
        %v1820 = vsel %vm834, %v1819, %v1817
        %v1822 = vsel %vm836, %v1820, 0
        %1824 = vmatprep.subr.mxu0 0.0
        %1825 = vmatpush1.msra.mxu0 0.0
        %1826 = vmatprep.subr.mxu0 0.0
        %1827 = vmatpush1.msra.mxu0 0.0
        %1828 = vmatprep.subr.mxu0 0.0
        %1829 = vmatpush1.msra.mxu0 0.0
        %1830 = vmatprep.subr.mxu0 0.0
        %1831 = vmatpush1.msra.mxu0 0.0
        %1832 = vmatprep.subr.mxu0 0.0
        %1833 = vmatpush1.msra.mxu0 %v563
        %1834 = vmatprep.subr.mxu0 0.0
        %1835 = vmatpush1.msra.mxu0 %v562
        %1836 = vmatprep.subr.mxu0 0.0
        %1837 = vmatpush1.msra.mxu0 %v561
        %1838 = vmatprep.subr.mxu0 0.0
        %1839 = vmatpush1.msra.mxu0 %v560
        %1840 = vmatprep.subr.mxu0 0.0
        %1841 = vmatpush1.msra.mxu0 %v559
        %1842 = vmatprep.subr.mxu0 0.0
        %1843 = vmatpush1.msra.mxu0 %v558
        %1844 = vmatprep.subr.mxu0 0.0
        %1845 = vmatpush1.msra.mxu0 %v557
        %1846 = vmatprep.subr.mxu0 0.0
        %1847 = vmatpush1.msra.mxu0 %v556
        %1848 = vmatprep.subr.mxu0 0.0
        %1849 = vmatpush1.msra.mxu0 %v555
        %1850 = vmatprep.subr.mxu0 0.0
        %1851 = vmatpush1.msra.mxu0 %v554
        %1852 = vmatprep.subr.mxu0 0.0
        %1853 = vmatpush1.msra.mxu0 %v553
        %1854 = vmatprep.subr.mxu0 0.0
        %1855 = vmatpush1.msra.mxu0 %v552
        %1856 = vmatprep.subr.mxu0 0.0
        %1857 = vmatpush2.msra.mxu0 0.0
        %1858 = vmatprep.subr.mxu0 0.0
        %1859 = vmatpush2.msra.mxu0 0.0
        %1860 = vmatprep.subr.mxu0 0.0
        %1861 = vmatpush2.msra.mxu0 0.0
        %1862 = vmatprep.subr.mxu0 0.0
        %1863 = vmatpush2.msra.mxu0 0.0
        %1864 = vmatprep.subr.mxu0 0.0
        %1865 = vmatpush2.msra.mxu0 0.0
        %1866 = vmatprep.subr.mxu0 0.0
        %1867 = vmatpush2.msra.mxu0 0.0
        %1868 = vmatprep.subr.mxu0 0.0
        %1869 = vmatpush2.msra.mxu0 0.0
        %1870 = vmatprep.subr.mxu0 0.0
        %1871 = vmatpush2.msra.mxu0 0.0
        %1872 = vmatprep.subr.mxu0 0.0
        %1873 = vmatpush2.msra.mxu0 0.0
        %1874 = vmatprep.subr.mxu0 0.0
        %1875 = vmatpush2.msra.mxu0 0.0
        %1876 = vmatprep.subr.mxu0 0.0
        %1877 = vmatpush2.msra.mxu0 0.0
        %1878 = vmatprep.subr.mxu0 0.0
        %1879 = vmatpush2.msra.mxu0 0.0
        %1880 = vmatprep.subr.mxu0 0.0
        %1881 = vmatpush2.msra.mxu0 0.0
        %1882 = vmatprep.subr.mxu0 0.0
        %1883 = vmatpush2.msra.mxu0 0.0
        %1884 = vmatprep.subr.mxu0 0.0
        %1885 = vmatpush2.msra.mxu0 0.0
        %1886 = vmatprep.subr.mxu0 0.0
        %1887 = vmatpush2.msra.mxu0 0.0
        %1888 = vmatprep.mubr.f32.mxu0 0.0
        %1889 = vmatmul.mubr.f32.gmra.mxu0 %v1822
        %v1890 = vpop.f32.mrf.mxu0
        %v1891 = vadd.f32 %v564, %v1890
        %v1892 = vpop.f32.mrf.mxu0
        %1893 = vdwg.mxu0
        %v1894 = vxor.u32 %v1891, 2147483648
        %v1895 = vmul.f32 %v1894, 1.442695
        %v1896 = vpow.pop %v1895
        %v1897 = vadd.f32 %v1896, 1.0
        %v1898 = vrcp.pop %v1897
        %v1899 = vmul.f32 1.0, %v1898
        %v1900 = vtanh.pop %v1891
        %v1901 = vmul.f32 %v1899, %v927
        %1903 = vrot.lane.b32.xlu0 %v1900, 64
        %v1904 = vpop.permute.xlu0 %1903
        %v1906 = vmul.f32 %v1899, %v1904
        %1908 = vrot.lane.b32.xlu0 %v1906, 32
        %v1909 = vpop.permute.xlu0 %1908
        %v1911 = vadd.f32 %v1901, %v1909
        %v1912 = vtanh.pop %v1911
        %1914 = vrot.lane.b32.xlu0 %v1912, 64
        %v1915 = vpop.permute.xlu0 %1914
        %v1917 = vmul.f32 %v1899, %v1915
        %1919 = vrot.lane.b32.xlu0 %v1480, 16
        %v1920 = vpop.permute.xlu0 %1919
        %v1922 = vsel %vm683, %v1406, %v1920
        %v1924 = vsel %vm758, %v1922, 0
        %1926 = vmatprep.subr.mxu0 0.0
        %1927 = vmatpush1.msra.mxu0 0.0
        %1928 = vmatprep.subr.mxu0 0.0
        %1929 = vmatpush1.msra.mxu0 0.0
        %1930 = vmatprep.subr.mxu0 0.0
        %1931 = vmatpush1.msra.mxu0 0.0
        %1932 = vmatprep.subr.mxu0 0.0
        %1933 = vmatpush1.msra.mxu0 0.0
        %1934 = vmatprep.subr.mxu0 0.0
        %1935 = vmatpush1.msra.mxu0 0.0
        %1936 = vmatprep.subr.mxu0 0.0
        %1937 = vmatpush1.msra.mxu0 0.0
        %1938 = vmatprep.subr.mxu0 0.0
        %1939 = vmatpush1.msra.mxu0 0.0
        %1940 = vmatprep.subr.mxu0 0.0
        %1941 = vmatpush1.msra.mxu0 0.0
        %1942 = vmatprep.subr.mxu0 0.0
        %1943 = vmatpush1.msra.mxu0 0.0
        %1944 = vmatprep.subr.mxu0 0.0
        %1945 = vmatpush1.msra.mxu0 0.0
        %1946 = vmatprep.subr.mxu0 0.0
        %1947 = vmatpush1.msra.mxu0 0.0
        %1948 = vmatprep.subr.mxu0 0.0
        %1949 = vmatpush1.msra.mxu0 0.0
        %1950 = vmatprep.subr.mxu0 %v594
        %1951 = vmatpush1.msra.mxu0 %v593
        %1952 = vmatprep.subr.mxu0 %v590
        %1953 = vmatpush1.msra.mxu0 %v589
        %1954 = vmatprep.subr.mxu0 %v586
        %1955 = vmatpush1.msra.mxu0 %v585
        %1956 = vmatprep.subr.mxu0 %v582
        %1957 = vmatpush1.msra.mxu0 %v581
        %1958 = vmatprep.subr.mxu0 0.0
        %1959 = vmatpush2.msra.mxu0 0.0
        %1960 = vmatprep.subr.mxu0 0.0
        %1961 = vmatpush2.msra.mxu0 0.0
        %1962 = vmatprep.subr.mxu0 0.0
        %1963 = vmatpush2.msra.mxu0 0.0
        %1964 = vmatprep.subr.mxu0 0.0
        %1965 = vmatpush2.msra.mxu0 0.0
        %1966 = vmatprep.subr.mxu0 0.0
        %1967 = vmatpush2.msra.mxu0 0.0
        %1968 = vmatprep.subr.mxu0 0.0
        %1969 = vmatpush2.msra.mxu0 0.0
        %1970 = vmatprep.subr.mxu0 0.0
        %1971 = vmatpush2.msra.mxu0 0.0
        %1972 = vmatprep.subr.mxu0 0.0
        %1973 = vmatpush2.msra.mxu0 0.0
        %1974 = vmatprep.subr.mxu0 0.0
        %1975 = vmatpush2.msra.mxu0 0.0
        %1976 = vmatprep.subr.mxu0 0.0
        %1977 = vmatpush2.msra.mxu0 0.0
        %1978 = vmatprep.subr.mxu0 0.0
        %1979 = vmatpush2.msra.mxu0 0.0
        %1980 = vmatprep.subr.mxu0 0.0
        %1981 = vmatpush2.msra.mxu0 0.0
        %1982 = vmatprep.subr.mxu0 0.0
        %1983 = vmatpush2.msra.mxu0 0.0
        %1984 = vmatprep.subr.mxu0 0.0
        %1985 = vmatpush2.msra.mxu0 0.0
        %1986 = vmatprep.subr.mxu0 0.0
        %1987 = vmatpush2.msra.mxu0 0.0
        %1988 = vmatprep.subr.mxu0 0.0
        %1989 = vmatpush2.msra.mxu0 0.0
        %1990 = vmatprep.mubr.f32.mxu0 0.0
        %1991 = vmatmul.mubr.f32.gmra.mxu0 %v1924
        %v1992 = vpop.f32.mrf.mxu0
        %v1993 = vadd.f32 0.0, %v1992
        %v1994 = vpop.f32.mrf.mxu0
        %v1995 = vadd.f32 0.0, %v1994
        %1996 = vdwg.mxu0
        %1997 = vmatprep.subr.mxu0 0.0
        %1998 = vmatpush1.msra.mxu0 0.0
        %1999 = vmatprep.subr.mxu0 0.0
        %2000 = vmatpush1.msra.mxu0 0.0
        %2001 = vmatprep.subr.mxu0 0.0
        %2002 = vmatpush1.msra.mxu0 0.0
        %2003 = vmatprep.subr.mxu0 0.0
        %2004 = vmatpush1.msra.mxu0 0.0
        %2005 = vmatprep.subr.mxu0 0.0
        %2006 = vmatpush1.msra.mxu0 0.0
        %2007 = vmatprep.subr.mxu0 0.0
        %2008 = vmatpush1.msra.mxu0 0.0
        %2009 = vmatprep.subr.mxu0 0.0
        %2010 = vmatpush1.msra.mxu0 0.0
        %2011 = vmatprep.subr.mxu0 0.0
        %2012 = vmatpush1.msra.mxu0 0.0
        %2013 = vmatprep.subr.mxu0 0.0
        %2014 = vmatpush1.msra.mxu0 0.0
        %2015 = vmatprep.subr.mxu0 0.0
        %2016 = vmatpush1.msra.mxu0 0.0
        %2017 = vmatprep.subr.mxu0 0.0
        %2018 = vmatpush1.msra.mxu0 0.0
        %2019 = vmatprep.subr.mxu0 0.0
        %2020 = vmatpush1.msra.mxu0 0.0
        %2021 = vmatprep.subr.mxu0 %v596
        %2022 = vmatpush1.msra.mxu0 %v595
        %2023 = vmatprep.subr.mxu0 %v592
        %2024 = vmatpush1.msra.mxu0 %v591
        %2025 = vmatprep.subr.mxu0 %v588
        %2026 = vmatpush1.msra.mxu0 %v587
        %2027 = vmatprep.subr.mxu0 %v584
        %2028 = vmatpush1.msra.mxu0 %v583
        %2029 = vmatprep.subr.mxu0 0.0
        %2030 = vmatpush2.msra.mxu0 0.0
        %2031 = vmatprep.subr.mxu0 0.0
        %2032 = vmatpush2.msra.mxu0 0.0
        %2033 = vmatprep.subr.mxu0 0.0
        %2034 = vmatpush2.msra.mxu0 0.0
        %2035 = vmatprep.subr.mxu0 0.0
        %2036 = vmatpush2.msra.mxu0 0.0
        %2037 = vmatprep.subr.mxu0 0.0
        %2038 = vmatpush2.msra.mxu0 0.0
        %2039 = vmatprep.subr.mxu0 0.0
        %2040 = vmatpush2.msra.mxu0 0.0
        %2041 = vmatprep.subr.mxu0 0.0
        %2042 = vmatpush2.msra.mxu0 0.0
        %2043 = vmatprep.subr.mxu0 0.0
        %2044 = vmatpush2.msra.mxu0 0.0
        %2045 = vmatprep.subr.mxu0 0.0
        %2046 = vmatpush2.msra.mxu0 0.0
        %2047 = vmatprep.subr.mxu0 0.0
        %2048 = vmatpush2.msra.mxu0 0.0
        %2049 = vmatprep.subr.mxu0 0.0
        %2050 = vmatpush2.msra.mxu0 0.0
        %2051 = vmatprep.subr.mxu0 0.0
        %2052 = vmatpush2.msra.mxu0 0.0
        %2053 = vmatprep.subr.mxu0 0.0
        %2054 = vmatpush2.msra.mxu0 0.0
        %2055 = vmatprep.subr.mxu0 0.0
        %2056 = vmatpush2.msra.mxu0 0.0
        %2057 = vmatprep.subr.mxu0 0.0
        %2058 = vmatpush2.msra.mxu0 0.0
        %2059 = vmatprep.subr.mxu0 0.0
        %2060 = vmatpush2.msra.mxu0 0.0
        %2061 = vmatprep.mubr.f32.mxu0 0.0
        %2062 = vmatmul.mubr.f32.gmra.mxu0 %v1924
        %v2063 = vpop.f32.mrf.mxu0
        %v2064 = vadd.f32 0.0, %v2063
        %v2065 = vpop.f32.mrf.mxu0
        %v2066 = vadd.f32 0.0, %v2065
        %2067 = vdwg.mxu0
        %2069 = vrot.lane.b32.xlu0 %v1917, 32
        %v2070 = vpop.permute.xlu0 %2069
        %v2071 = vsel %vm758, %v2070, 0
        %2073 = vmatprep.subr.mxu0 0.0
        %2074 = vmatpush1.msra.mxu0 0.0
        %2075 = vmatprep.subr.mxu0 0.0
        %2076 = vmatpush1.msra.mxu0 0.0
        %2077 = vmatprep.subr.mxu0 0.0
        %2078 = vmatpush1.msra.mxu0 0.0
        %2079 = vmatprep.subr.mxu0 0.0
        %2080 = vmatpush1.msra.mxu0 0.0
        %2081 = vmatprep.subr.mxu0 0.0
        %2082 = vmatpush1.msra.mxu0 0.0
        %2083 = vmatprep.subr.mxu0 0.0
        %2084 = vmatpush1.msra.mxu0 0.0
        %2085 = vmatprep.subr.mxu0 0.0
        %2086 = vmatpush1.msra.mxu0 0.0
        %2087 = vmatprep.subr.mxu0 0.0
        %2088 = vmatpush1.msra.mxu0 0.0
        %2089 = vmatprep.subr.mxu0 0.0
        %2090 = vmatpush1.msra.mxu0 0.0
        %2091 = vmatprep.subr.mxu0 0.0
        %2092 = vmatpush1.msra.mxu0 0.0
        %2093 = vmatprep.subr.mxu0 0.0
        %2094 = vmatpush1.msra.mxu0 0.0
        %2095 = vmatprep.subr.mxu0 0.0
        %2096 = vmatpush1.msra.mxu0 0.0
        %2097 = vmatprep.subr.mxu0 %v578
        %2098 = vmatpush1.msra.mxu0 %v577
        %2099 = vmatprep.subr.mxu0 %v574
        %2100 = vmatpush1.msra.mxu0 %v573
        %2101 = vmatprep.subr.mxu0 %v570
        %2102 = vmatpush1.msra.mxu0 %v569
        %2103 = vmatprep.subr.mxu0 %v566
        %2104 = vmatpush1.msra.mxu0 %v565
        %2105 = vmatprep.subr.mxu0 0.0
        %2106 = vmatpush2.msra.mxu0 0.0
        %2107 = vmatprep.subr.mxu0 0.0
        %2108 = vmatpush2.msra.mxu0 0.0
        %2109 = vmatprep.subr.mxu0 0.0
        %2110 = vmatpush2.msra.mxu0 0.0
        %2111 = vmatprep.subr.mxu0 0.0
        %2112 = vmatpush2.msra.mxu0 0.0
        %2113 = vmatprep.subr.mxu0 0.0
        %2114 = vmatpush2.msra.mxu0 0.0
        %2115 = vmatprep.subr.mxu0 0.0
        %2116 = vmatpush2.msra.mxu0 0.0
        %2117 = vmatprep.subr.mxu0 0.0
        %2118 = vmatpush2.msra.mxu0 0.0
        %2119 = vmatprep.subr.mxu0 0.0
        %2120 = vmatpush2.msra.mxu0 0.0
        %2121 = vmatprep.subr.mxu0 0.0
        %2122 = vmatpush2.msra.mxu0 0.0
        %2123 = vmatprep.subr.mxu0 0.0
        %2124 = vmatpush2.msra.mxu0 0.0
        %2125 = vmatprep.subr.mxu0 0.0
        %2126 = vmatpush2.msra.mxu0 0.0
        %2127 = vmatprep.subr.mxu0 0.0
        %2128 = vmatpush2.msra.mxu0 0.0
        %2129 = vmatprep.subr.mxu0 0.0
        %2130 = vmatpush2.msra.mxu0 0.0
        %2131 = vmatprep.subr.mxu0 0.0
        %2132 = vmatpush2.msra.mxu0 0.0
        %2133 = vmatprep.subr.mxu0 0.0
        %2134 = vmatpush2.msra.mxu0 0.0
        %2135 = vmatprep.subr.mxu0 0.0
        %2136 = vmatpush2.msra.mxu0 0.0
        %2137 = vmatprep.mubr.f32.mxu0 0.0
        %2138 = vmatmul.mubr.f32.gmra.mxu0 %v2071
        %v2139 = vpop.f32.mrf.mxu0
        %v2140 = vadd.f32 %v1086, %v2139
        %v2141 = vpop.f32.mrf.mxu0
        %v2142 = vadd.f32 %v1090, %v2141
        %2143 = vdwg.mxu0
        %2144 = vmatprep.subr.mxu0 0.0
        %2145 = vmatpush1.msra.mxu0 0.0
        %2146 = vmatprep.subr.mxu0 0.0
        %2147 = vmatpush1.msra.mxu0 0.0
        %2148 = vmatprep.subr.mxu0 0.0
        %2149 = vmatpush1.msra.mxu0 0.0
        %2150 = vmatprep.subr.mxu0 0.0
        %2151 = vmatpush1.msra.mxu0 0.0
        %2152 = vmatprep.subr.mxu0 0.0
        %2153 = vmatpush1.msra.mxu0 0.0
        %2154 = vmatprep.subr.mxu0 0.0
        %2155 = vmatpush1.msra.mxu0 0.0
        %2156 = vmatprep.subr.mxu0 0.0
        %2157 = vmatpush1.msra.mxu0 0.0
        %2158 = vmatprep.subr.mxu0 0.0
        %2159 = vmatpush1.msra.mxu0 0.0
        %2160 = vmatprep.subr.mxu0 0.0
        %2161 = vmatpush1.msra.mxu0 0.0
        %2162 = vmatprep.subr.mxu0 0.0
        %2163 = vmatpush1.msra.mxu0 0.0
        %2164 = vmatprep.subr.mxu0 0.0
        %2165 = vmatpush1.msra.mxu0 0.0
        %2166 = vmatprep.subr.mxu0 0.0
        %2167 = vmatpush1.msra.mxu0 0.0
        %2168 = vmatprep.subr.mxu0 %v580
        %2169 = vmatpush1.msra.mxu0 %v579
        %2170 = vmatprep.subr.mxu0 %v576
        %2171 = vmatpush1.msra.mxu0 %v575
        %2172 = vmatprep.subr.mxu0 %v572
        %2173 = vmatpush1.msra.mxu0 %v571
        %2174 = vmatprep.subr.mxu0 %v568
        %2175 = vmatpush1.msra.mxu0 %v567
        %2176 = vmatprep.subr.mxu0 0.0
        %2177 = vmatpush2.msra.mxu0 0.0
        %2178 = vmatprep.subr.mxu0 0.0
        %2179 = vmatpush2.msra.mxu0 0.0
        %2180 = vmatprep.subr.mxu0 0.0
        %2181 = vmatpush2.msra.mxu0 0.0
        %2182 = vmatprep.subr.mxu0 0.0
        %2183 = vmatpush2.msra.mxu0 0.0
        %2184 = vmatprep.subr.mxu0 0.0
        %2185 = vmatpush2.msra.mxu0 0.0
        %2186 = vmatprep.subr.mxu0 0.0
        %2187 = vmatpush2.msra.mxu0 0.0
        %2188 = vmatprep.subr.mxu0 0.0
        %2189 = vmatpush2.msra.mxu0 0.0
        %2190 = vmatprep.subr.mxu0 0.0
        %2191 = vmatpush2.msra.mxu0 0.0
        %2192 = vmatprep.subr.mxu0 0.0
        %2193 = vmatpush2.msra.mxu0 0.0
        %2194 = vmatprep.subr.mxu0 0.0
        %2195 = vmatpush2.msra.mxu0 0.0
        %2196 = vmatprep.subr.mxu0 0.0
        %2197 = vmatpush2.msra.mxu0 0.0
        %2198 = vmatprep.subr.mxu0 0.0
        %2199 = vmatpush2.msra.mxu0 0.0
        %2200 = vmatprep.subr.mxu0 0.0
        %2201 = vmatpush2.msra.mxu0 0.0
        %2202 = vmatprep.subr.mxu0 0.0
        %2203 = vmatpush2.msra.mxu0 0.0
        %2204 = vmatprep.subr.mxu0 0.0
        %2205 = vmatpush2.msra.mxu0 0.0
        %2206 = vmatprep.subr.mxu0 0.0
        %2207 = vmatpush2.msra.mxu0 0.0
        %2208 = vmatprep.mubr.f32.mxu0 0.0
        %2209 = vmatmul.mubr.f32.gmra.mxu0 %v2071
        %v2210 = vpop.f32.mrf.mxu0
        %v2211 = vadd.f32 %v1094, %v2210
        %v2212 = vpop.f32.mrf.mxu0
        %v2213 = vadd.f32 %v1098, %v2212
        %2214 = vdwg.mxu0
        %v2215 = vadd.f32 %v2140, %v1993
        %v2216 = vadd.f32 %v2142, %v1995
        %v2217 = vadd.f32 %v2211, %v2064
        %v2218 = vadd.f32 %v2213, %v2066
        %v2219 = vtanh.pop %v2215
        %v2220 = vtanh.pop %v2216
        %v2221 = vtanh.pop %v2217
        %v2222 = vtanh.pop %v2218
        %2223 = vmatprep.subr.mxu0 0.0
        %2224 = vmatpush1.msra.mxu0 %v612
        %2225 = vmatprep.subr.mxu0 0.0
        %2226 = vmatpush1.msra.mxu0 %v611
        %2227 = vmatprep.subr.mxu0 0.0
        %2228 = vmatpush1.msra.mxu0 %v610
        %2229 = vmatprep.subr.mxu0 0.0
        %2230 = vmatpush1.msra.mxu0 %v609
        %2231 = vmatprep.subr.mxu0 0.0
        %2232 = vmatpush1.msra.mxu0 %v608
        %2233 = vmatprep.subr.mxu0 0.0
        %2234 = vmatpush1.msra.mxu0 %v607
        %2235 = vmatprep.subr.mxu0 0.0
        %2236 = vmatpush1.msra.mxu0 %v606
        %2237 = vmatprep.subr.mxu0 0.0
        %2238 = vmatpush1.msra.mxu0 %v605
        %2239 = vmatprep.subr.mxu0 0.0
        %2240 = vmatpush1.msra.mxu0 %v604
        %2241 = vmatprep.subr.mxu0 0.0
        %2242 = vmatpush1.msra.mxu0 %v603
        %2243 = vmatprep.subr.mxu0 0.0
        %2244 = vmatpush1.msra.mxu0 %v602
        %2245 = vmatprep.subr.mxu0 0.0
        %2246 = vmatpush1.msra.mxu0 %v601
        %2247 = vmatprep.subr.mxu0 0.0
        %2248 = vmatpush1.msra.mxu0 %v600
        %2249 = vmatprep.subr.mxu0 0.0
        %2250 = vmatpush1.msra.mxu0 %v599
        %2251 = vmatprep.subr.mxu0 0.0
        %2252 = vmatpush1.msra.mxu0 %v598
        %2253 = vmatprep.subr.mxu0 0.0
        %2254 = vmatpush1.msra.mxu0 %v597
        %2255 = vmatprep.subr.mxu0 0.0
        %2256 = vmatpush2.msra.mxu0 %v628
        %2257 = vmatprep.subr.mxu0 0.0
        %2258 = vmatpush2.msra.mxu0 %v627
        %2259 = vmatprep.subr.mxu0 0.0
        %2260 = vmatpush2.msra.mxu0 %v626
        %2261 = vmatprep.subr.mxu0 0.0
        %2262 = vmatpush2.msra.mxu0 %v625
        %2263 = vmatprep.subr.mxu0 0.0
        %2264 = vmatpush2.msra.mxu0 %v624
        %2265 = vmatprep.subr.mxu0 0.0
        %2266 = vmatpush2.msra.mxu0 %v623
        %2267 = vmatprep.subr.mxu0 0.0
        %2268 = vmatpush2.msra.mxu0 %v622
        %2269 = vmatprep.subr.mxu0 0.0
        %2270 = vmatpush2.msra.mxu0 %v621
        %2271 = vmatprep.subr.mxu0 0.0
        %2272 = vmatpush2.msra.mxu0 %v620
        %2273 = vmatprep.subr.mxu0 0.0
        %2274 = vmatpush2.msra.mxu0 %v619
        %2275 = vmatprep.subr.mxu0 0.0
        %2276 = vmatpush2.msra.mxu0 %v618
        %2277 = vmatprep.subr.mxu0 0.0
        %2278 = vmatpush2.msra.mxu0 %v617
        %2279 = vmatprep.subr.mxu0 0.0
        %2280 = vmatpush2.msra.mxu0 %v616
        %2281 = vmatprep.subr.mxu0 0.0
        %2282 = vmatpush2.msra.mxu0 %v615
        %2283 = vmatprep.subr.mxu0 0.0
        %2284 = vmatpush2.msra.mxu0 %v614
        %2285 = vmatprep.subr.mxu0 0.0
        %2286 = vmatpush2.msra.mxu0 %v613
        %2287 = vmatprep.mubr.f32.mxu0 %v2220
        %2288 = vmatmul.mubr.f32.gmra.mxu0 %v2219
        %v2289 = vpop.f32.mrf.mxu0
        %v2290 = vadd.f32 %v545, %v2289
        %v2291 = vpop.f32.mrf.mxu0
        %2292 = vdwg.mxu0
        %2293 = vmatprep.subr.mxu0 0.0
        %2294 = vmatpush1.msra.mxu0 %v644
        %2295 = vmatprep.subr.mxu0 0.0
        %2296 = vmatpush1.msra.mxu0 %v643
        %2297 = vmatprep.subr.mxu0 0.0
        %2298 = vmatpush1.msra.mxu0 %v642
        %2299 = vmatprep.subr.mxu0 0.0
        %2300 = vmatpush1.msra.mxu0 %v641
        %2301 = vmatprep.subr.mxu0 0.0
        %2302 = vmatpush1.msra.mxu0 %v640
        %2303 = vmatprep.subr.mxu0 0.0
        %2304 = vmatpush1.msra.mxu0 %v639
        %2305 = vmatprep.subr.mxu0 0.0
        %2306 = vmatpush1.msra.mxu0 %v638
        %2307 = vmatprep.subr.mxu0 0.0
        %2308 = vmatpush1.msra.mxu0 %v637
        %2309 = vmatprep.subr.mxu0 0.0
        %2310 = vmatpush1.msra.mxu0 %v636
        %2311 = vmatprep.subr.mxu0 0.0
        %2312 = vmatpush1.msra.mxu0 %v635
        %2313 = vmatprep.subr.mxu0 0.0
        %2314 = vmatpush1.msra.mxu0 %v634
        %2315 = vmatprep.subr.mxu0 0.0
        %2316 = vmatpush1.msra.mxu0 %v633
        %2317 = vmatprep.subr.mxu0 0.0
        %2318 = vmatpush1.msra.mxu0 %v632
        %2319 = vmatprep.subr.mxu0 0.0
        %2320 = vmatpush1.msra.mxu0 %v631
        %2321 = vmatprep.subr.mxu0 0.0
        %2322 = vmatpush1.msra.mxu0 %v630
        %2323 = vmatprep.subr.mxu0 0.0
        %2324 = vmatpush1.msra.mxu0 %v629
        %2325 = vmatprep.subr.mxu0 0.0
        %2326 = vmatpush2.msra.mxu0 %v660
        %2327 = vmatprep.subr.mxu0 0.0
        %2328 = vmatpush2.msra.mxu0 %v659
        %2329 = vmatprep.subr.mxu0 0.0
        %2330 = vmatpush2.msra.mxu0 %v658
        %2331 = vmatprep.subr.mxu0 0.0
        %2332 = vmatpush2.msra.mxu0 %v657
        %2333 = vmatprep.subr.mxu0 0.0
        %2334 = vmatpush2.msra.mxu0 %v656
        %2335 = vmatprep.subr.mxu0 0.0
        %2336 = vmatpush2.msra.mxu0 %v655
        %2337 = vmatprep.subr.mxu0 0.0
        %2338 = vmatpush2.msra.mxu0 %v654
        %2339 = vmatprep.subr.mxu0 0.0
        %2340 = vmatpush2.msra.mxu0 %v653
        %2341 = vmatprep.subr.mxu0 0.0
        %2342 = vmatpush2.msra.mxu0 %v652
        %2343 = vmatprep.subr.mxu0 0.0
        %2344 = vmatpush2.msra.mxu0 %v651
        %2345 = vmatprep.subr.mxu0 0.0
        %2346 = vmatpush2.msra.mxu0 %v650
        %2347 = vmatprep.subr.mxu0 0.0
        %2348 = vmatpush2.msra.mxu0 %v649
        %2349 = vmatprep.subr.mxu0 0.0
        %2350 = vmatpush2.msra.mxu0 %v648
        %2351 = vmatprep.subr.mxu0 0.0
        %2352 = vmatpush2.msra.mxu0 %v647
        %2353 = vmatprep.subr.mxu0 0.0
        %2354 = vmatpush2.msra.mxu0 %v646
        %2355 = vmatprep.subr.mxu0 0.0
        %2356 = vmatpush2.msra.mxu0 %v645
        %2357 = vmatprep.mubr.f32.mxu0 %v2222
        %2358 = vmatmul.mubr.f32.gmra.mxu0 %v2221
        %v2359 = vpop.f32.mrf.mxu0
        %v2360 = vadd.f32 %v2290, %v2359
        %v2361 = vpop.f32.mrf.mxu0
        %2362 = vdwg.mxu0
        %v2363 = vsel %vm1395, %v2360, -inf
        %2364 = vmax.xlane.f32.xlu0 %v2363
        %v2365 = vpop.xlane.xlu0 %2364
        %v2366 = vsub.f32 %v2360, %v2365
        %v2367 = vmul.f32 %v2366, 1.442695
        %v2368 = vpow.pop %v2367
        %v2369 = vsel %vm1395, %v2368, 0.0
        %2370 = vadd.xlane.f32.xlu0 %v2369
        %v2371 = vpop.xlane.xlu0 %2370
        %v2372 = vrcp.pop %v2371
        %v2373 = vmul.f32 %v2368, %v2372
        %v2375 = vsel %vm683, %v2373, 0
        %2377 = vmatprep.subr.mxu0 0.0
        %2378 = vmatpush1.msra.mxu0 0.0
        %2379 = vmatprep.subr.mxu0 0.0
        %2380 = vmatpush1.msra.mxu0 0.0
        %2381 = vmatprep.subr.mxu0 0.0
        %2382 = vmatpush1.msra.mxu0 0.0
        %2383 = vmatprep.subr.mxu0 0.0
        %2384 = vmatpush1.msra.mxu0 0.0
        %2385 = vmatprep.subr.mxu0 0.0
        %2386 = vmatpush1.msra.mxu0 0.0
        %2387 = vmatprep.subr.mxu0 0.0
        %2388 = vmatpush1.msra.mxu0 0.0
        %2389 = vmatprep.subr.mxu0 0.0
        %2390 = vmatpush1.msra.mxu0 0.0
        %2391 = vmatprep.subr.mxu0 0.0
        %2392 = vmatpush1.msra.mxu0 0.0
        %2393 = vmatprep.subr.mxu0 0.0
        %2394 = vmatpush1.msra.mxu0 0.0
        %2395 = vmatprep.subr.mxu0 0.0
        %2396 = vmatpush1.msra.mxu0 0.0
        %2397 = vmatprep.subr.mxu0 0.0
        %2398 = vmatpush1.msra.mxu0 0.0
        %2399 = vmatprep.subr.mxu0 0.0
        %2400 = vmatpush1.msra.mxu0 0.0
        %2401 = vmatprep.subr.mxu0 0.0
        %2402 = vmatpush1.msra.mxu0 0.0
        %2403 = vmatprep.subr.mxu0 0.0
        %2404 = vmatpush1.msra.mxu0 0.0
        %2405 = vmatprep.subr.mxu0 0.0
        %2406 = vmatpush1.msra.mxu0 %v543
        %2407 = vmatprep.subr.mxu0 0.0
        %2408 = vmatpush1.msra.mxu0 %v542
        %2409 = vmatprep.subr.mxu0 0.0
        %2410 = vmatpush2.msra.mxu0 0.0
        %2411 = vmatprep.subr.mxu0 0.0
        %2412 = vmatpush2.msra.mxu0 0.0
        %2413 = vmatprep.subr.mxu0 0.0
        %2414 = vmatpush2.msra.mxu0 0.0
        %2415 = vmatprep.subr.mxu0 0.0
        %2416 = vmatpush2.msra.mxu0 0.0
        %2417 = vmatprep.subr.mxu0 0.0
        %2418 = vmatpush2.msra.mxu0 0.0
        %2419 = vmatprep.subr.mxu0 0.0
        %2420 = vmatpush2.msra.mxu0 0.0
        %2421 = vmatprep.subr.mxu0 0.0
        %2422 = vmatpush2.msra.mxu0 0.0
        %2423 = vmatprep.subr.mxu0 0.0
        %2424 = vmatpush2.msra.mxu0 0.0
        %2425 = vmatprep.subr.mxu0 0.0
        %2426 = vmatpush2.msra.mxu0 0.0
        %2427 = vmatprep.subr.mxu0 0.0
        %2428 = vmatpush2.msra.mxu0 0.0
        %2429 = vmatprep.subr.mxu0 0.0
        %2430 = vmatpush2.msra.mxu0 0.0
        %2431 = vmatprep.subr.mxu0 0.0
        %2432 = vmatpush2.msra.mxu0 0.0
        %2433 = vmatprep.subr.mxu0 0.0
        %2434 = vmatpush2.msra.mxu0 0.0
        %2435 = vmatprep.subr.mxu0 0.0
        %2436 = vmatpush2.msra.mxu0 0.0
        %2437 = vmatprep.subr.mxu0 0.0
        %2438 = vmatpush2.msra.mxu0 0.0
        %2439 = vmatprep.subr.mxu0 0.0
        %2440 = vmatpush2.msra.mxu0 0.0
        %2441 = vmatprep.mubr.f32.mxu0 0.0
        %2442 = vmatmul.mubr.f32.gmra.mxu0 %v2375
        %v2443 = vpop.f32.mrf.mxu0
        %v2444 = vadd.f32 0.0, %v2443
        %v2445 = vpop.f32.mrf.mxu0
        %2446 = vdwg.mxu0
        %v2447 = vadd.f32 %v1480, %v2373
        %2450 = vrot.lane.b32.xlu0 %v2444, 32
        %v2451 = vpop.permute.xlu0 %2450
        %2453 = vrot.lane.b32.xlu0 %v1584, 96
        %v2454 = vpop.permute.xlu0 %2453
        %v2456 = vsel %vm758, %v2070, %v2451
        %v2457 = vsel %vm834, %v2456, %v2454
        %v2459 = vsel %vm836, %v2457, 0
        %2461 = vmatprep.subr.mxu0 0.0
        %2462 = vmatpush1.msra.mxu0 0.0
        %2463 = vmatprep.subr.mxu0 0.0
        %2464 = vmatpush1.msra.mxu0 0.0
        %2465 = vmatprep.subr.mxu0 0.0
        %2466 = vmatpush1.msra.mxu0 0.0
        %2467 = vmatprep.subr.mxu0 0.0
        %2468 = vmatpush1.msra.mxu0 0.0
        %2469 = vmatprep.subr.mxu0 0.0
        %2470 = vmatpush1.msra.mxu0 %v672
        %2471 = vmatprep.subr.mxu0 0.0
        %2472 = vmatpush1.msra.mxu0 %v671
        %2473 = vmatprep.subr.mxu0 0.0
        %2474 = vmatpush1.msra.mxu0 %v670
        %2475 = vmatprep.subr.mxu0 0.0
        %2476 = vmatpush1.msra.mxu0 %v669
        %2477 = vmatprep.subr.mxu0 0.0
        %2478 = vmatpush1.msra.mxu0 %v668
        %2479 = vmatprep.subr.mxu0 0.0
        %2480 = vmatpush1.msra.mxu0 %v667
        %2481 = vmatprep.subr.mxu0 0.0
        %2482 = vmatpush1.msra.mxu0 %v666
        %2483 = vmatprep.subr.mxu0 0.0
        %2484 = vmatpush1.msra.mxu0 %v665
        %2485 = vmatprep.subr.mxu0 0.0
        %2486 = vmatpush1.msra.mxu0 %v664
        %2487 = vmatprep.subr.mxu0 0.0
        %2488 = vmatpush1.msra.mxu0 %v663
        %2489 = vmatprep.subr.mxu0 0.0
        %2490 = vmatpush1.msra.mxu0 %v662
        %2491 = vmatprep.subr.mxu0 0.0
        %2492 = vmatpush1.msra.mxu0 %v661
        %2493 = vmatprep.subr.mxu0 0.0
        %2494 = vmatpush2.msra.mxu0 0.0
        %2495 = vmatprep.subr.mxu0 0.0
        %2496 = vmatpush2.msra.mxu0 0.0
        %2497 = vmatprep.subr.mxu0 0.0
        %2498 = vmatpush2.msra.mxu0 0.0
        %2499 = vmatprep.subr.mxu0 0.0
        %2500 = vmatpush2.msra.mxu0 0.0
        %2501 = vmatprep.subr.mxu0 0.0
        %2502 = vmatpush2.msra.mxu0 0.0
        %2503 = vmatprep.subr.mxu0 0.0
        %2504 = vmatpush2.msra.mxu0 0.0
        %2505 = vmatprep.subr.mxu0 0.0
        %2506 = vmatpush2.msra.mxu0 0.0
        %2507 = vmatprep.subr.mxu0 0.0
        %2508 = vmatpush2.msra.mxu0 0.0
        %2509 = vmatprep.subr.mxu0 0.0
        %2510 = vmatpush2.msra.mxu0 0.0
        %2511 = vmatprep.subr.mxu0 0.0
        %2512 = vmatpush2.msra.mxu0 0.0
        %2513 = vmatprep.subr.mxu0 0.0
        %2514 = vmatpush2.msra.mxu0 0.0
        %2515 = vmatprep.subr.mxu0 0.0
        %2516 = vmatpush2.msra.mxu0 0.0
        %2517 = vmatprep.subr.mxu0 0.0
        %2518 = vmatpush2.msra.mxu0 0.0
        %2519 = vmatprep.subr.mxu0 0.0
        %2520 = vmatpush2.msra.mxu0 0.0
        %2521 = vmatprep.subr.mxu0 0.0
        %2522 = vmatpush2.msra.mxu0 0.0
        %2523 = vmatprep.subr.mxu0 0.0
        %2524 = vmatpush2.msra.mxu0 0.0
        %2525 = vmatprep.mubr.f32.mxu0 0.0
        %2526 = vmatmul.mubr.f32.gmra.mxu0 %v2459
        %v2527 = vpop.f32.mrf.mxu0
        %v2528 = vadd.f32 %v673, %v2527
        %v2529 = vpop.f32.mrf.mxu0
        %2530 = vdwg.mxu0
        %v2531 = vxor.u32 %v2528, 2147483648
        %v2532 = vmul.f32 %v2531, 1.442695
        %v2533 = vpow.pop %v2532
        %v2534 = vadd.f32 %v2533, 1.0
        %v2535 = vrcp.pop %v2534
        %v2536 = vmul.f32 1.0, %v2535
        %v2537 = vtanh.pop %v2528
        %v2538 = vmul.f32 %v2536, %v1578
        %2540 = vrot.lane.b32.xlu0 %v2537, 64
        %v2541 = vpop.permute.xlu0 %2540
        %v2543 = vmul.f32 %v2536, %v2541
        %2545 = vrot.lane.b32.xlu0 %v2543, 32
        %v2546 = vpop.permute.xlu0 %2545
        %v2548 = vadd.f32 %v2538, %v2546
        %v2549 = vtanh.pop %v2548
        %2551 = vrot.lane.b32.xlu0 %v2549, 64
        %v2552 = vpop.permute.xlu0 %2551
        %v2554 = vmul.f32 %v2536, %v2552
        %2556 = vrot.lane.b32.xlu0 %v2554, 32
        %v2557 = vpop.permute.xlu0 %2556
        %v2559 = vsel %vm758, %v2557, %v2451
        %v2561 = vsel %vm834, %v2559, 0
        %2563 = vmatprep.subr.mxu0 0.0
        %2564 = vmatpush1.msra.mxu0 0.0
        %2565 = vmatprep.subr.mxu0 0.0
        %2566 = vmatpush1.msra.mxu0 0.0
        %2567 = vmatprep.subr.mxu0 0.0
        %2568 = vmatpush1.msra.mxu0 0.0
        %2569 = vmatprep.subr.mxu0 0.0
        %2570 = vmatpush1.msra.mxu0 0.0
        %2571 = vmatprep.subr.mxu0 0.0
        %2572 = vmatpush1.msra.mxu0 0.0
        %2573 = vmatprep.subr.mxu0 0.0
        %2574 = vmatpush1.msra.mxu0 0.0
        %2575 = vmatprep.subr.mxu0 0.0
        %2576 = vmatpush1.msra.mxu0 0.0
        %2577 = vmatprep.subr.mxu0 0.0
        %2578 = vmatpush1.msra.mxu0 0.0
        %2579 = vmatprep.subr.mxu0 0.0
        %2580 = vmatpush1.msra.mxu0 %v681
        %2581 = vmatprep.subr.mxu0 0.0
        %2582 = vmatpush1.msra.mxu0 %v680
        %2583 = vmatprep.subr.mxu0 0.0
        %2584 = vmatpush1.msra.mxu0 %v679
        %2585 = vmatprep.subr.mxu0 0.0
        %2586 = vmatpush1.msra.mxu0 %v678
        %2587 = vmatprep.subr.mxu0 0.0
        %2588 = vmatpush1.msra.mxu0 %v677
        %2589 = vmatprep.subr.mxu0 0.0
        %2590 = vmatpush1.msra.mxu0 %v676
        %2591 = vmatprep.subr.mxu0 0.0
        %2592 = vmatpush1.msra.mxu0 %v675
        %2593 = vmatprep.subr.mxu0 0.0
        %2594 = vmatpush1.msra.mxu0 %v674
        %2595 = vmatprep.subr.mxu0 0.0
        %2596 = vmatpush2.msra.mxu0 0.0
        %2597 = vmatprep.subr.mxu0 0.0
        %2598 = vmatpush2.msra.mxu0 0.0
        %2599 = vmatprep.subr.mxu0 0.0
        %2600 = vmatpush2.msra.mxu0 0.0
        %2601 = vmatprep.subr.mxu0 0.0
        %2602 = vmatpush2.msra.mxu0 0.0
        %2603 = vmatprep.subr.mxu0 0.0
        %2604 = vmatpush2.msra.mxu0 0.0
        %2605 = vmatprep.subr.mxu0 0.0
        %2606 = vmatpush2.msra.mxu0 0.0
        %2607 = vmatprep.subr.mxu0 0.0
        %2608 = vmatpush2.msra.mxu0 0.0
        %2609 = vmatprep.subr.mxu0 0.0
        %2610 = vmatpush2.msra.mxu0 0.0
        %2611 = vmatprep.subr.mxu0 0.0
        %2612 = vmatpush2.msra.mxu0 0.0
        %2613 = vmatprep.subr.mxu0 0.0
        %2614 = vmatpush2.msra.mxu0 0.0
        %2615 = vmatprep.subr.mxu0 0.0
        %2616 = vmatpush2.msra.mxu0 0.0
        %2617 = vmatprep.subr.mxu0 0.0
        %2618 = vmatpush2.msra.mxu0 0.0
        %2619 = vmatprep.subr.mxu0 0.0
        %2620 = vmatpush2.msra.mxu0 0.0
        %2621 = vmatprep.subr.mxu0 0.0
        %2622 = vmatpush2.msra.mxu0 0.0
        %2623 = vmatprep.subr.mxu0 0.0
        %2624 = vmatpush2.msra.mxu0 0.0
        %2625 = vmatprep.subr.mxu0 0.0
        %2626 = vmatpush2.msra.mxu0 0.0
        %2627 = vmatprep.mubr.f32.mxu0 0.0
        %2628 = vmatmul.mubr.f32.gmra.mxu0 %v2561
        %v2629 = vpop.f32.mrf.mxu0
        %v2630 = vadd.f32 %v682, %v2629
        %v2631 = vpop.f32.mrf.mxu0
        %2632 = vdwg.mxu0
        %2633 = vrot.lane.b32.xlu0 %v2373, 17
        %v2634 = vpop.permute.xlu0 %2633
        %v2636 = vsel %vm1666, %v2630, %v2634
        %v2637 = vrot.slane %v541, 2
        %v2638 = vsel %vm683, %v2637, 0
        %2640 = vmatprep.subr.mxu0 0.0
        %2641 = vmatpush1.msra.mxu0 0.0
        %2642 = vmatprep.subr.mxu0 0.0
        %2643 = vmatpush1.msra.mxu0 0.0
        %2644 = vmatprep.subr.mxu0 0.0
        %2645 = vmatpush1.msra.mxu0 0.0
        %2646 = vmatprep.subr.mxu0 0.0
        %2647 = vmatpush1.msra.mxu0 0.0
        %2648 = vmatprep.subr.mxu0 0.0
        %2649 = vmatpush1.msra.mxu0 0.0
        %2650 = vmatprep.subr.mxu0 0.0
        %2651 = vmatpush1.msra.mxu0 0.0
        %2652 = vmatprep.subr.mxu0 0.0
        %2653 = vmatpush1.msra.mxu0 0.0
        %2654 = vmatprep.subr.mxu0 0.0
        %2655 = vmatpush1.msra.mxu0 0.0
        %2656 = vmatprep.subr.mxu0 0.0
        %2657 = vmatpush1.msra.mxu0 0.0
        %2658 = vmatprep.subr.mxu0 0.0
        %2659 = vmatpush1.msra.mxu0 0.0
        %2660 = vmatprep.subr.mxu0 0.0
        %2661 = vmatpush1.msra.mxu0 0.0
        %2662 = vmatprep.subr.mxu0 0.0
        %2663 = vmatpush1.msra.mxu0 0.0
        %2664 = vmatprep.subr.mxu0 0.0
        %2665 = vmatpush1.msra.mxu0 0.0
        %2666 = vmatprep.subr.mxu0 0.0
        %2667 = vmatpush1.msra.mxu0 0.0
        %2668 = vmatprep.subr.mxu0 0.0
        %2669 = vmatpush1.msra.mxu0 %v547
        %2670 = vmatprep.subr.mxu0 0.0
        %2671 = vmatpush1.msra.mxu0 %v546
        %2672 = vmatprep.subr.mxu0 0.0
        %2673 = vmatpush2.msra.mxu0 0.0
        %2674 = vmatprep.subr.mxu0 0.0
        %2675 = vmatpush2.msra.mxu0 0.0
        %2676 = vmatprep.subr.mxu0 0.0
        %2677 = vmatpush2.msra.mxu0 0.0
        %2678 = vmatprep.subr.mxu0 0.0
        %2679 = vmatpush2.msra.mxu0 0.0
        %2680 = vmatprep.subr.mxu0 0.0
        %2681 = vmatpush2.msra.mxu0 0.0
        %2682 = vmatprep.subr.mxu0 0.0
        %2683 = vmatpush2.msra.mxu0 0.0
        %2684 = vmatprep.subr.mxu0 0.0
        %2685 = vmatpush2.msra.mxu0 0.0
        %2686 = vmatprep.subr.mxu0 0.0
        %2687 = vmatpush2.msra.mxu0 0.0
        %2688 = vmatprep.subr.mxu0 0.0
        %2689 = vmatpush2.msra.mxu0 0.0
        %2690 = vmatprep.subr.mxu0 0.0
        %2691 = vmatpush2.msra.mxu0 0.0
        %2692 = vmatprep.subr.mxu0 0.0
        %2693 = vmatpush2.msra.mxu0 0.0
        %2694 = vmatprep.subr.mxu0 0.0
        %2695 = vmatpush2.msra.mxu0 0.0
        %2696 = vmatprep.subr.mxu0 0.0
        %2697 = vmatpush2.msra.mxu0 0.0
        %2698 = vmatprep.subr.mxu0 0.0
        %2699 = vmatpush2.msra.mxu0 0.0
        %2700 = vmatprep.subr.mxu0 0.0
        %2701 = vmatpush2.msra.mxu0 0.0
        %2702 = vmatprep.subr.mxu0 0.0
        %2703 = vmatpush2.msra.mxu0 0.0
        %2704 = vmatprep.mubr.f32.mxu0 0.0
        %2705 = vmatmul.mubr.f32.gmra.mxu0 %v2638
        %v2706 = vpop.f32.mrf.mxu0
        %v2707 = vadd.f32 0.0, %v2706
        %v2708 = vpop.f32.mrf.mxu0
        %2709 = vdwg.mxu0
        %v2710 = vmax.f32 %v2707, 0.0
        %v2712 = vsel %vm758, %v2710, 0
        %2714 = vmatprep.subr.mxu0 0.0
        %2715 = vmatpush1.msra.mxu0 0.0
        %2716 = vmatprep.subr.mxu0 0.0
        %2717 = vmatpush1.msra.mxu0 0.0
        %2718 = vmatprep.subr.mxu0 0.0
        %2719 = vmatpush1.msra.mxu0 0.0
        %2720 = vmatprep.subr.mxu0 0.0
        %2721 = vmatpush1.msra.mxu0 0.0
        %2722 = vmatprep.subr.mxu0 0.0
        %2723 = vmatpush1.msra.mxu0 0.0
        %2724 = vmatprep.subr.mxu0 0.0
        %2725 = vmatpush1.msra.mxu0 0.0
        %2726 = vmatprep.subr.mxu0 0.0
        %2727 = vmatpush1.msra.mxu0 0.0
        %2728 = vmatprep.subr.mxu0 0.0
        %2729 = vmatpush1.msra.mxu0 0.0
        %2730 = vmatprep.subr.mxu0 0.0
        %2731 = vmatpush1.msra.mxu0 0.0
        %2732 = vmatprep.subr.mxu0 0.0
        %2733 = vmatpush1.msra.mxu0 0.0
        %2734 = vmatprep.subr.mxu0 0.0
        %2735 = vmatpush1.msra.mxu0 0.0
        %2736 = vmatprep.subr.mxu0 0.0
        %2737 = vmatpush1.msra.mxu0 0.0
        %2738 = vmatprep.subr.mxu0 0.0
        %2739 = vmatpush1.msra.mxu0 %v551
        %2740 = vmatprep.subr.mxu0 0.0
        %2741 = vmatpush1.msra.mxu0 %v550
        %2742 = vmatprep.subr.mxu0 0.0
        %2743 = vmatpush1.msra.mxu0 %v549
        %2744 = vmatprep.subr.mxu0 0.0
        %2745 = vmatpush1.msra.mxu0 %v548
        %2746 = vmatprep.subr.mxu0 0.0
        %2747 = vmatpush2.msra.mxu0 0.0
        %2748 = vmatprep.subr.mxu0 0.0
        %2749 = vmatpush2.msra.mxu0 0.0
        %2750 = vmatprep.subr.mxu0 0.0
        %2751 = vmatpush2.msra.mxu0 0.0
        %2752 = vmatprep.subr.mxu0 0.0
        %2753 = vmatpush2.msra.mxu0 0.0
        %2754 = vmatprep.subr.mxu0 0.0
        %2755 = vmatpush2.msra.mxu0 0.0
        %2756 = vmatprep.subr.mxu0 0.0
        %2757 = vmatpush2.msra.mxu0 0.0
        %2758 = vmatprep.subr.mxu0 0.0
        %2759 = vmatpush2.msra.mxu0 0.0
        %2760 = vmatprep.subr.mxu0 0.0
        %2761 = vmatpush2.msra.mxu0 0.0
        %2762 = vmatprep.subr.mxu0 0.0
        %2763 = vmatpush2.msra.mxu0 0.0
        %2764 = vmatprep.subr.mxu0 0.0
        %2765 = vmatpush2.msra.mxu0 0.0
        %2766 = vmatprep.subr.mxu0 0.0
        %2767 = vmatpush2.msra.mxu0 0.0
        %2768 = vmatprep.subr.mxu0 0.0
        %2769 = vmatpush2.msra.mxu0 0.0
        %2770 = vmatprep.subr.mxu0 0.0
        %2771 = vmatpush2.msra.mxu0 0.0
        %2772 = vmatprep.subr.mxu0 0.0
        %2773 = vmatpush2.msra.mxu0 0.0
        %2774 = vmatprep.subr.mxu0 0.0
        %2775 = vmatpush2.msra.mxu0 0.0
        %2776 = vmatprep.subr.mxu0 0.0
        %2777 = vmatpush2.msra.mxu0 0.0
        %2778 = vmatprep.mubr.f32.mxu0 0.0
        %2779 = vmatmul.mubr.f32.gmra.mxu0 %v2712
        %v2780 = vpop.f32.mrf.mxu0
        %v2781 = vadd.f32 0.0, %v2780
        %v2782 = vpop.f32.mrf.mxu0
        %2783 = vdwg.mxu0
        %v2784 = vmax.f32 %v2781, 0.0
        %2785 = vrot.lane.b32.xlu0 %v1917, 96
        %v2786 = vpop.permute.xlu0 %2785
        %v2788 = vsel %vm758, %v2784, %v2451
        %v2789 = vsel %vm834, %v2788, %v2786
        %v2791 = vsel %vm836, %v2789, 0
        %2793 = vmatprep.subr.mxu0 0.0
        %2794 = vmatpush1.msra.mxu0 0.0
        %2795 = vmatprep.subr.mxu0 0.0
        %2796 = vmatpush1.msra.mxu0 0.0
        %2797 = vmatprep.subr.mxu0 0.0
        %2798 = vmatpush1.msra.mxu0 0.0
        %2799 = vmatprep.subr.mxu0 0.0
        %2800 = vmatpush1.msra.mxu0 0.0
        %2801 = vmatprep.subr.mxu0 0.0
        %2802 = vmatpush1.msra.mxu0 %v563
        %2803 = vmatprep.subr.mxu0 0.0
        %2804 = vmatpush1.msra.mxu0 %v562
        %2805 = vmatprep.subr.mxu0 0.0
        %2806 = vmatpush1.msra.mxu0 %v561
        %2807 = vmatprep.subr.mxu0 0.0
        %2808 = vmatpush1.msra.mxu0 %v560
        %2809 = vmatprep.subr.mxu0 0.0
        %2810 = vmatpush1.msra.mxu0 %v559
        %2811 = vmatprep.subr.mxu0 0.0
        %2812 = vmatpush1.msra.mxu0 %v558
        %2813 = vmatprep.subr.mxu0 0.0
        %2814 = vmatpush1.msra.mxu0 %v557
        %2815 = vmatprep.subr.mxu0 0.0
        %2816 = vmatpush1.msra.mxu0 %v556
        %2817 = vmatprep.subr.mxu0 0.0
        %2818 = vmatpush1.msra.mxu0 %v555
        %2819 = vmatprep.subr.mxu0 0.0
        %2820 = vmatpush1.msra.mxu0 %v554
        %2821 = vmatprep.subr.mxu0 0.0
        %2822 = vmatpush1.msra.mxu0 %v553
        %2823 = vmatprep.subr.mxu0 0.0
        %2824 = vmatpush1.msra.mxu0 %v552
        %2825 = vmatprep.subr.mxu0 0.0
        %2826 = vmatpush2.msra.mxu0 0.0
        %2827 = vmatprep.subr.mxu0 0.0
        %2828 = vmatpush2.msra.mxu0 0.0
        %2829 = vmatprep.subr.mxu0 0.0
        %2830 = vmatpush2.msra.mxu0 0.0
        %2831 = vmatprep.subr.mxu0 0.0
        %2832 = vmatpush2.msra.mxu0 0.0
        %2833 = vmatprep.subr.mxu0 0.0
        %2834 = vmatpush2.msra.mxu0 0.0
        %2835 = vmatprep.subr.mxu0 0.0
        %2836 = vmatpush2.msra.mxu0 0.0
        %2837 = vmatprep.subr.mxu0 0.0
        %2838 = vmatpush2.msra.mxu0 0.0
        %2839 = vmatprep.subr.mxu0 0.0
        %2840 = vmatpush2.msra.mxu0 0.0
        %2841 = vmatprep.subr.mxu0 0.0
        %2842 = vmatpush2.msra.mxu0 0.0
        %2843 = vmatprep.subr.mxu0 0.0
        %2844 = vmatpush2.msra.mxu0 0.0
        %2845 = vmatprep.subr.mxu0 0.0
        %2846 = vmatpush2.msra.mxu0 0.0
        %2847 = vmatprep.subr.mxu0 0.0
        %2848 = vmatpush2.msra.mxu0 0.0
        %2849 = vmatprep.subr.mxu0 0.0
        %2850 = vmatpush2.msra.mxu0 0.0
        %2851 = vmatprep.subr.mxu0 0.0
        %2852 = vmatpush2.msra.mxu0 0.0
        %2853 = vmatprep.subr.mxu0 0.0
        %2854 = vmatpush2.msra.mxu0 0.0
        %2855 = vmatprep.subr.mxu0 0.0
        %2856 = vmatpush2.msra.mxu0 0.0
        %2857 = vmatprep.mubr.f32.mxu0 0.0
        %2858 = vmatmul.mubr.f32.gmra.mxu0 %v2791
        %v2859 = vpop.f32.mrf.mxu0
        %v2860 = vadd.f32 %v564, %v2859
        %v2861 = vpop.f32.mrf.mxu0
        %2862 = vdwg.mxu0
        %v2863 = vxor.u32 %v2860, 2147483648
        %v2864 = vmul.f32 %v2863, 1.442695
        %v2865 = vpow.pop %v2864
        %v2866 = vadd.f32 %v2865, 1.0
        %v2867 = vrcp.pop %v2866
        %v2868 = vmul.f32 1.0, %v2867
        %v2869 = vtanh.pop %v2860
        %v2870 = vmul.f32 %v2868, %v1911
        %2872 = vrot.lane.b32.xlu0 %v2869, 64
        %v2873 = vpop.permute.xlu0 %2872
        %v2875 = vmul.f32 %v2868, %v2873
        %2877 = vrot.lane.b32.xlu0 %v2875, 32
        %v2878 = vpop.permute.xlu0 %2877
        %v2880 = vadd.f32 %v2870, %v2878
        %v2881 = vtanh.pop %v2880
        %2883 = vrot.lane.b32.xlu0 %v2881, 64
        %v2884 = vpop.permute.xlu0 %2883
        %v2886 = vmul.f32 %v2868, %v2884
        %2888 = vrot.lane.b32.xlu0 %v2447, 16
        %v2889 = vpop.permute.xlu0 %2888
        %v2891 = vsel %vm683, %v2373, %v2889
        %v2893 = vsel %vm758, %v2891, 0
        %2895 = vmatprep.subr.mxu0 0.0
        %2896 = vmatpush1.msra.mxu0 0.0
        %2897 = vmatprep.subr.mxu0 0.0
        %2898 = vmatpush1.msra.mxu0 0.0
        %2899 = vmatprep.subr.mxu0 0.0
        %2900 = vmatpush1.msra.mxu0 0.0
        %2901 = vmatprep.subr.mxu0 0.0
        %2902 = vmatpush1.msra.mxu0 0.0
        %2903 = vmatprep.subr.mxu0 0.0
        %2904 = vmatpush1.msra.mxu0 0.0
        %2905 = vmatprep.subr.mxu0 0.0
        %2906 = vmatpush1.msra.mxu0 0.0
        %2907 = vmatprep.subr.mxu0 0.0
        %2908 = vmatpush1.msra.mxu0 0.0
        %2909 = vmatprep.subr.mxu0 0.0
        %2910 = vmatpush1.msra.mxu0 0.0
        %2911 = vmatprep.subr.mxu0 0.0
        %2912 = vmatpush1.msra.mxu0 0.0
        %2913 = vmatprep.subr.mxu0 0.0
        %2914 = vmatpush1.msra.mxu0 0.0
        %2915 = vmatprep.subr.mxu0 0.0
        %2916 = vmatpush1.msra.mxu0 0.0
        %2917 = vmatprep.subr.mxu0 0.0
        %2918 = vmatpush1.msra.mxu0 0.0
        %2919 = vmatprep.subr.mxu0 %v594
        %2920 = vmatpush1.msra.mxu0 %v593
        %2921 = vmatprep.subr.mxu0 %v590
        %2922 = vmatpush1.msra.mxu0 %v589
        %2923 = vmatprep.subr.mxu0 %v586
        %2924 = vmatpush1.msra.mxu0 %v585
        %2925 = vmatprep.subr.mxu0 %v582
        %2926 = vmatpush1.msra.mxu0 %v581
        %2927 = vmatprep.subr.mxu0 0.0
        %2928 = vmatpush2.msra.mxu0 0.0
        %2929 = vmatprep.subr.mxu0 0.0
        %2930 = vmatpush2.msra.mxu0 0.0
        %2931 = vmatprep.subr.mxu0 0.0
        %2932 = vmatpush2.msra.mxu0 0.0
        %2933 = vmatprep.subr.mxu0 0.0
        %2934 = vmatpush2.msra.mxu0 0.0
        %2935 = vmatprep.subr.mxu0 0.0
        %2936 = vmatpush2.msra.mxu0 0.0
        %2937 = vmatprep.subr.mxu0 0.0
        %2938 = vmatpush2.msra.mxu0 0.0
        %2939 = vmatprep.subr.mxu0 0.0
        %2940 = vmatpush2.msra.mxu0 0.0
        %2941 = vmatprep.subr.mxu0 0.0
        %2942 = vmatpush2.msra.mxu0 0.0
        %2943 = vmatprep.subr.mxu0 0.0
        %2944 = vmatpush2.msra.mxu0 0.0
        %2945 = vmatprep.subr.mxu0 0.0
        %2946 = vmatpush2.msra.mxu0 0.0
        %2947 = vmatprep.subr.mxu0 0.0
        %2948 = vmatpush2.msra.mxu0 0.0
        %2949 = vmatprep.subr.mxu0 0.0
        %2950 = vmatpush2.msra.mxu0 0.0
        %2951 = vmatprep.subr.mxu0 0.0
        %2952 = vmatpush2.msra.mxu0 0.0
        %2953 = vmatprep.subr.mxu0 0.0
        %2954 = vmatpush2.msra.mxu0 0.0
        %2955 = vmatprep.subr.mxu0 0.0
        %2956 = vmatpush2.msra.mxu0 0.0
        %2957 = vmatprep.subr.mxu0 0.0
        %2958 = vmatpush2.msra.mxu0 0.0
        %2959 = vmatprep.mubr.f32.mxu0 0.0
        %2960 = vmatmul.mubr.f32.gmra.mxu0 %v2893
        %v2961 = vpop.f32.mrf.mxu0
        %v2962 = vadd.f32 0.0, %v2961
        %v2963 = vpop.f32.mrf.mxu0
        %v2964 = vadd.f32 0.0, %v2963
        %2965 = vdwg.mxu0
        %2966 = vmatprep.subr.mxu0 0.0
        %2967 = vmatpush1.msra.mxu0 0.0
        %2968 = vmatprep.subr.mxu0 0.0
        %2969 = vmatpush1.msra.mxu0 0.0
        %2970 = vmatprep.subr.mxu0 0.0
        %2971 = vmatpush1.msra.mxu0 0.0
        %2972 = vmatprep.subr.mxu0 0.0
        %2973 = vmatpush1.msra.mxu0 0.0
        %2974 = vmatprep.subr.mxu0 0.0
        %2975 = vmatpush1.msra.mxu0 0.0
        %2976 = vmatprep.subr.mxu0 0.0
        %2977 = vmatpush1.msra.mxu0 0.0
        %2978 = vmatprep.subr.mxu0 0.0
        %2979 = vmatpush1.msra.mxu0 0.0
        %2980 = vmatprep.subr.mxu0 0.0
        %2981 = vmatpush1.msra.mxu0 0.0
        %2982 = vmatprep.subr.mxu0 0.0
        %2983 = vmatpush1.msra.mxu0 0.0
        %2984 = vmatprep.subr.mxu0 0.0
        %2985 = vmatpush1.msra.mxu0 0.0
        %2986 = vmatprep.subr.mxu0 0.0
        %2987 = vmatpush1.msra.mxu0 0.0
        %2988 = vmatprep.subr.mxu0 0.0
        %2989 = vmatpush1.msra.mxu0 0.0
        %2990 = vmatprep.subr.mxu0 %v596
        %2991 = vmatpush1.msra.mxu0 %v595
        %2992 = vmatprep.subr.mxu0 %v592
        %2993 = vmatpush1.msra.mxu0 %v591
        %2994 = vmatprep.subr.mxu0 %v588
        %2995 = vmatpush1.msra.mxu0 %v587
        %2996 = vmatprep.subr.mxu0 %v584
        %2997 = vmatpush1.msra.mxu0 %v583
        %2998 = vmatprep.subr.mxu0 0.0
        %2999 = vmatpush2.msra.mxu0 0.0
        %3000 = vmatprep.subr.mxu0 0.0
        %3001 = vmatpush2.msra.mxu0 0.0
        %3002 = vmatprep.subr.mxu0 0.0
        %3003 = vmatpush2.msra.mxu0 0.0
        %3004 = vmatprep.subr.mxu0 0.0
        %3005 = vmatpush2.msra.mxu0 0.0
        %3006 = vmatprep.subr.mxu0 0.0
        %3007 = vmatpush2.msra.mxu0 0.0
        %3008 = vmatprep.subr.mxu0 0.0
        %3009 = vmatpush2.msra.mxu0 0.0
        %3010 = vmatprep.subr.mxu0 0.0
        %3011 = vmatpush2.msra.mxu0 0.0
        %3012 = vmatprep.subr.mxu0 0.0
        %3013 = vmatpush2.msra.mxu0 0.0
        %3014 = vmatprep.subr.mxu0 0.0
        %3015 = vmatpush2.msra.mxu0 0.0
        %3016 = vmatprep.subr.mxu0 0.0
        %3017 = vmatpush2.msra.mxu0 0.0
        %3018 = vmatprep.subr.mxu0 0.0
        %3019 = vmatpush2.msra.mxu0 0.0
        %3020 = vmatprep.subr.mxu0 0.0
        %3021 = vmatpush2.msra.mxu0 0.0
        %3022 = vmatprep.subr.mxu0 0.0
        %3023 = vmatpush2.msra.mxu0 0.0
        %3024 = vmatprep.subr.mxu0 0.0
        %3025 = vmatpush2.msra.mxu0 0.0
        %3026 = vmatprep.subr.mxu0 0.0
        %3027 = vmatpush2.msra.mxu0 0.0
        %3028 = vmatprep.subr.mxu0 0.0
        %3029 = vmatpush2.msra.mxu0 0.0
        %3030 = vmatprep.mubr.f32.mxu0 0.0
        %3031 = vmatmul.mubr.f32.gmra.mxu0 %v2893
        %v3032 = vpop.f32.mrf.mxu0
        %v3033 = vadd.f32 0.0, %v3032
        %v3034 = vpop.f32.mrf.mxu0
        %v3035 = vadd.f32 0.0, %v3034
        %3036 = vdwg.mxu0
        %3038 = vrot.lane.b32.xlu0 %v2886, 32
        %v3039 = vpop.permute.xlu0 %3038
        %v3040 = vsel %vm758, %v3039, 0
        %3042 = vmatprep.subr.mxu0 0.0
        %3043 = vmatpush1.msra.mxu0 0.0
        %3044 = vmatprep.subr.mxu0 0.0
        %3045 = vmatpush1.msra.mxu0 0.0
        %3046 = vmatprep.subr.mxu0 0.0
        %3047 = vmatpush1.msra.mxu0 0.0
        %3048 = vmatprep.subr.mxu0 0.0
        %3049 = vmatpush1.msra.mxu0 0.0
        %3050 = vmatprep.subr.mxu0 0.0
        %3051 = vmatpush1.msra.mxu0 0.0
        %3052 = vmatprep.subr.mxu0 0.0
        %3053 = vmatpush1.msra.mxu0 0.0
        %3054 = vmatprep.subr.mxu0 0.0
        %3055 = vmatpush1.msra.mxu0 0.0
        %3056 = vmatprep.subr.mxu0 0.0
        %3057 = vmatpush1.msra.mxu0 0.0
        %3058 = vmatprep.subr.mxu0 0.0
        %3059 = vmatpush1.msra.mxu0 0.0
        %3060 = vmatprep.subr.mxu0 0.0
        %3061 = vmatpush1.msra.mxu0 0.0
        %3062 = vmatprep.subr.mxu0 0.0
        %3063 = vmatpush1.msra.mxu0 0.0
        %3064 = vmatprep.subr.mxu0 0.0
        %3065 = vmatpush1.msra.mxu0 0.0
        %3066 = vmatprep.subr.mxu0 %v578
        %3067 = vmatpush1.msra.mxu0 %v577
        %3068 = vmatprep.subr.mxu0 %v574
        %3069 = vmatpush1.msra.mxu0 %v573
        %3070 = vmatprep.subr.mxu0 %v570
        %3071 = vmatpush1.msra.mxu0 %v569
        %3072 = vmatprep.subr.mxu0 %v566
        %3073 = vmatpush1.msra.mxu0 %v565
        %3074 = vmatprep.subr.mxu0 0.0
        %3075 = vmatpush2.msra.mxu0 0.0
        %3076 = vmatprep.subr.mxu0 0.0
        %3077 = vmatpush2.msra.mxu0 0.0
        %3078 = vmatprep.subr.mxu0 0.0
        %3079 = vmatpush2.msra.mxu0 0.0
        %3080 = vmatprep.subr.mxu0 0.0
        %3081 = vmatpush2.msra.mxu0 0.0
        %3082 = vmatprep.subr.mxu0 0.0
        %3083 = vmatpush2.msra.mxu0 0.0
        %3084 = vmatprep.subr.mxu0 0.0
        %3085 = vmatpush2.msra.mxu0 0.0
        %3086 = vmatprep.subr.mxu0 0.0
        %3087 = vmatpush2.msra.mxu0 0.0
        %3088 = vmatprep.subr.mxu0 0.0
        %3089 = vmatpush2.msra.mxu0 0.0
        %3090 = vmatprep.subr.mxu0 0.0
        %3091 = vmatpush2.msra.mxu0 0.0
        %3092 = vmatprep.subr.mxu0 0.0
        %3093 = vmatpush2.msra.mxu0 0.0
        %3094 = vmatprep.subr.mxu0 0.0
        %3095 = vmatpush2.msra.mxu0 0.0
        %3096 = vmatprep.subr.mxu0 0.0
        %3097 = vmatpush2.msra.mxu0 0.0
        %3098 = vmatprep.subr.mxu0 0.0
        %3099 = vmatpush2.msra.mxu0 0.0
        %3100 = vmatprep.subr.mxu0 0.0
        %3101 = vmatpush2.msra.mxu0 0.0
        %3102 = vmatprep.subr.mxu0 0.0
        %3103 = vmatpush2.msra.mxu0 0.0
        %3104 = vmatprep.subr.mxu0 0.0
        %3105 = vmatpush2.msra.mxu0 0.0
        %3106 = vmatprep.mubr.f32.mxu0 0.0
        %3107 = vmatmul.mubr.f32.gmra.mxu0 %v3040
        %v3108 = vpop.f32.mrf.mxu0
        %v3109 = vadd.f32 %v1086, %v3108
        %v3110 = vpop.f32.mrf.mxu0
        %v3111 = vadd.f32 %v1090, %v3110
        %3112 = vdwg.mxu0
        %3113 = vmatprep.subr.mxu0 0.0
        %3114 = vmatpush1.msra.mxu0 0.0
        %3115 = vmatprep.subr.mxu0 0.0
        %3116 = vmatpush1.msra.mxu0 0.0
        %3117 = vmatprep.subr.mxu0 0.0
        %3118 = vmatpush1.msra.mxu0 0.0
        %3119 = vmatprep.subr.mxu0 0.0
        %3120 = vmatpush1.msra.mxu0 0.0
        %3121 = vmatprep.subr.mxu0 0.0
        %3122 = vmatpush1.msra.mxu0 0.0
        %3123 = vmatprep.subr.mxu0 0.0
        %3124 = vmatpush1.msra.mxu0 0.0
        %3125 = vmatprep.subr.mxu0 0.0
        %3126 = vmatpush1.msra.mxu0 0.0
        %3127 = vmatprep.subr.mxu0 0.0
        %3128 = vmatpush1.msra.mxu0 0.0
        %3129 = vmatprep.subr.mxu0 0.0
        %3130 = vmatpush1.msra.mxu0 0.0
        %3131 = vmatprep.subr.mxu0 0.0
        %3132 = vmatpush1.msra.mxu0 0.0
        %3133 = vmatprep.subr.mxu0 0.0
        %3134 = vmatpush1.msra.mxu0 0.0
        %3135 = vmatprep.subr.mxu0 0.0
        %3136 = vmatpush1.msra.mxu0 0.0
        %3137 = vmatprep.subr.mxu0 %v580
        %3138 = vmatpush1.msra.mxu0 %v579
        %3139 = vmatprep.subr.mxu0 %v576
        %3140 = vmatpush1.msra.mxu0 %v575
        %3141 = vmatprep.subr.mxu0 %v572
        %3142 = vmatpush1.msra.mxu0 %v571
        %3143 = vmatprep.subr.mxu0 %v568
        %3144 = vmatpush1.msra.mxu0 %v567
        %3145 = vmatprep.subr.mxu0 0.0
        %3146 = vmatpush2.msra.mxu0 0.0
        %3147 = vmatprep.subr.mxu0 0.0
        %3148 = vmatpush2.msra.mxu0 0.0
        %3149 = vmatprep.subr.mxu0 0.0
        %3150 = vmatpush2.msra.mxu0 0.0
        %3151 = vmatprep.subr.mxu0 0.0
        %3152 = vmatpush2.msra.mxu0 0.0
        %3153 = vmatprep.subr.mxu0 0.0
        %3154 = vmatpush2.msra.mxu0 0.0
        %3155 = vmatprep.subr.mxu0 0.0
        %3156 = vmatpush2.msra.mxu0 0.0
        %3157 = vmatprep.subr.mxu0 0.0
        %3158 = vmatpush2.msra.mxu0 0.0
        %3159 = vmatprep.subr.mxu0 0.0
        %3160 = vmatpush2.msra.mxu0 0.0
        %3161 = vmatprep.subr.mxu0 0.0
        %3162 = vmatpush2.msra.mxu0 0.0
        %3163 = vmatprep.subr.mxu0 0.0
        %3164 = vmatpush2.msra.mxu0 0.0
        %3165 = vmatprep.subr.mxu0 0.0
        %3166 = vmatpush2.msra.mxu0 0.0
        %3167 = vmatprep.subr.mxu0 0.0
        %3168 = vmatpush2.msra.mxu0 0.0
        %3169 = vmatprep.subr.mxu0 0.0
        %3170 = vmatpush2.msra.mxu0 0.0
        %3171 = vmatprep.subr.mxu0 0.0
        %3172 = vmatpush2.msra.mxu0 0.0
        %3173 = vmatprep.subr.mxu0 0.0
        %3174 = vmatpush2.msra.mxu0 0.0
        %3175 = vmatprep.subr.mxu0 0.0
        %3176 = vmatpush2.msra.mxu0 0.0
        %3177 = vmatprep.mubr.f32.mxu0 0.0
        %3178 = vmatmul.mubr.f32.gmra.mxu0 %v3040
        %v3179 = vpop.f32.mrf.mxu0
        %v3180 = vadd.f32 %v1094, %v3179
        %v3181 = vpop.f32.mrf.mxu0
        %v3182 = vadd.f32 %v1098, %v3181
        %3183 = vdwg.mxu0
        %v3184 = vadd.f32 %v3109, %v2962
        %v3185 = vadd.f32 %v3111, %v2964
        %v3186 = vadd.f32 %v3180, %v3033
        %v3187 = vadd.f32 %v3182, %v3035
        %v3188 = vtanh.pop %v3184
        %v3189 = vtanh.pop %v3185
        %v3190 = vtanh.pop %v3186
        %v3191 = vtanh.pop %v3187
        %3192 = vmatprep.subr.mxu0 0.0
        %3193 = vmatpush1.msra.mxu0 %v612
        %3194 = vmatprep.subr.mxu0 0.0
        %3195 = vmatpush1.msra.mxu0 %v611
        %3196 = vmatprep.subr.mxu0 0.0
        %3197 = vmatpush1.msra.mxu0 %v610
        %3198 = vmatprep.subr.mxu0 0.0
        %3199 = vmatpush1.msra.mxu0 %v609
        %3200 = vmatprep.subr.mxu0 0.0
        %3201 = vmatpush1.msra.mxu0 %v608
        %3202 = vmatprep.subr.mxu0 0.0
        %3203 = vmatpush1.msra.mxu0 %v607
        %3204 = vmatprep.subr.mxu0 0.0
        %3205 = vmatpush1.msra.mxu0 %v606
        %3206 = vmatprep.subr.mxu0 0.0
        %3207 = vmatpush1.msra.mxu0 %v605
        %3208 = vmatprep.subr.mxu0 0.0
        %3209 = vmatpush1.msra.mxu0 %v604
        %3210 = vmatprep.subr.mxu0 0.0
        %3211 = vmatpush1.msra.mxu0 %v603
        %3212 = vmatprep.subr.mxu0 0.0
        %3213 = vmatpush1.msra.mxu0 %v602
        %3214 = vmatprep.subr.mxu0 0.0
        %3215 = vmatpush1.msra.mxu0 %v601
        %3216 = vmatprep.subr.mxu0 0.0
        %3217 = vmatpush1.msra.mxu0 %v600
        %3218 = vmatprep.subr.mxu0 0.0
        %3219 = vmatpush1.msra.mxu0 %v599
        %3220 = vmatprep.subr.mxu0 0.0
        %3221 = vmatpush1.msra.mxu0 %v598
        %3222 = vmatprep.subr.mxu0 0.0
        %3223 = vmatpush1.msra.mxu0 %v597
        %3224 = vmatprep.subr.mxu0 0.0
        %3225 = vmatpush2.msra.mxu0 %v628
        %3226 = vmatprep.subr.mxu0 0.0
        %3227 = vmatpush2.msra.mxu0 %v627
        %3228 = vmatprep.subr.mxu0 0.0
        %3229 = vmatpush2.msra.mxu0 %v626
        %3230 = vmatprep.subr.mxu0 0.0
        %3231 = vmatpush2.msra.mxu0 %v625
        %3232 = vmatprep.subr.mxu0 0.0
        %3233 = vmatpush2.msra.mxu0 %v624
        %3234 = vmatprep.subr.mxu0 0.0
        %3235 = vmatpush2.msra.mxu0 %v623
        %3236 = vmatprep.subr.mxu0 0.0
        %3237 = vmatpush2.msra.mxu0 %v622
        %3238 = vmatprep.subr.mxu0 0.0
        %3239 = vmatpush2.msra.mxu0 %v621
        %3240 = vmatprep.subr.mxu0 0.0
        %3241 = vmatpush2.msra.mxu0 %v620
        %3242 = vmatprep.subr.mxu0 0.0
        %3243 = vmatpush2.msra.mxu0 %v619
        %3244 = vmatprep.subr.mxu0 0.0
        %3245 = vmatpush2.msra.mxu0 %v618
        %3246 = vmatprep.subr.mxu0 0.0
        %3247 = vmatpush2.msra.mxu0 %v617
        %3248 = vmatprep.subr.mxu0 0.0
        %3249 = vmatpush2.msra.mxu0 %v616
        %3250 = vmatprep.subr.mxu0 0.0
        %3251 = vmatpush2.msra.mxu0 %v615
        %3252 = vmatprep.subr.mxu0 0.0
        %3253 = vmatpush2.msra.mxu0 %v614
        %3254 = vmatprep.subr.mxu0 0.0
        %3255 = vmatpush2.msra.mxu0 %v613
        %3256 = vmatprep.mubr.f32.mxu0 %v3189
        %3257 = vmatmul.mubr.f32.gmra.mxu0 %v3188
        %v3258 = vpop.f32.mrf.mxu0
        %v3259 = vadd.f32 %v545, %v3258
        %v3260 = vpop.f32.mrf.mxu0
        %3261 = vdwg.mxu0
        %3262 = vmatprep.subr.mxu0 0.0
        %3263 = vmatpush1.msra.mxu0 %v644
        %3264 = vmatprep.subr.mxu0 0.0
        %3265 = vmatpush1.msra.mxu0 %v643
        %3266 = vmatprep.subr.mxu0 0.0
        %3267 = vmatpush1.msra.mxu0 %v642
        %3268 = vmatprep.subr.mxu0 0.0
        %3269 = vmatpush1.msra.mxu0 %v641
        %3270 = vmatprep.subr.mxu0 0.0
        %3271 = vmatpush1.msra.mxu0 %v640
        %3272 = vmatprep.subr.mxu0 0.0
        %3273 = vmatpush1.msra.mxu0 %v639
        %3274 = vmatprep.subr.mxu0 0.0
        %3275 = vmatpush1.msra.mxu0 %v638
        %3276 = vmatprep.subr.mxu0 0.0
        %3277 = vmatpush1.msra.mxu0 %v637
        %3278 = vmatprep.subr.mxu0 0.0
        %3279 = vmatpush1.msra.mxu0 %v636
        %3280 = vmatprep.subr.mxu0 0.0
        %3281 = vmatpush1.msra.mxu0 %v635
        %3282 = vmatprep.subr.mxu0 0.0
        %3283 = vmatpush1.msra.mxu0 %v634
        %3284 = vmatprep.subr.mxu0 0.0
        %3285 = vmatpush1.msra.mxu0 %v633
        %3286 = vmatprep.subr.mxu0 0.0
        %3287 = vmatpush1.msra.mxu0 %v632
        %3288 = vmatprep.subr.mxu0 0.0
        %3289 = vmatpush1.msra.mxu0 %v631
        %3290 = vmatprep.subr.mxu0 0.0
        %3291 = vmatpush1.msra.mxu0 %v630
        %3292 = vmatprep.subr.mxu0 0.0
        %3293 = vmatpush1.msra.mxu0 %v629
        %3294 = vmatprep.subr.mxu0 0.0
        %3295 = vmatpush2.msra.mxu0 %v660
        %3296 = vmatprep.subr.mxu0 0.0
        %3297 = vmatpush2.msra.mxu0 %v659
        %3298 = vmatprep.subr.mxu0 0.0
        %3299 = vmatpush2.msra.mxu0 %v658
        %3300 = vmatprep.subr.mxu0 0.0
        %3301 = vmatpush2.msra.mxu0 %v657
        %3302 = vmatprep.subr.mxu0 0.0
        %3303 = vmatpush2.msra.mxu0 %v656
        %3304 = vmatprep.subr.mxu0 0.0
        %3305 = vmatpush2.msra.mxu0 %v655
        %3306 = vmatprep.subr.mxu0 0.0
        %3307 = vmatpush2.msra.mxu0 %v654
        %3308 = vmatprep.subr.mxu0 0.0
        %3309 = vmatpush2.msra.mxu0 %v653
        %3310 = vmatprep.subr.mxu0 0.0
        %3311 = vmatpush2.msra.mxu0 %v652
        %3312 = vmatprep.subr.mxu0 0.0
        %3313 = vmatpush2.msra.mxu0 %v651
        %3314 = vmatprep.subr.mxu0 0.0
        %3315 = vmatpush2.msra.mxu0 %v650
        %3316 = vmatprep.subr.mxu0 0.0
        %3317 = vmatpush2.msra.mxu0 %v649
        %3318 = vmatprep.subr.mxu0 0.0
        %3319 = vmatpush2.msra.mxu0 %v648
        %3320 = vmatprep.subr.mxu0 0.0
        %3321 = vmatpush2.msra.mxu0 %v647
        %3322 = vmatprep.subr.mxu0 0.0
        %3323 = vmatpush2.msra.mxu0 %v646
        %3324 = vmatprep.subr.mxu0 0.0
        %3325 = vmatpush2.msra.mxu0 %v645
        %3326 = vmatprep.mubr.f32.mxu0 %v3191
        %3327 = vmatmul.mubr.f32.gmra.mxu0 %v3190
        %v3328 = vpop.f32.mrf.mxu0
        %v3329 = vadd.f32 %v3259, %v3328
        %v3330 = vpop.f32.mrf.mxu0
        %3331 = vdwg.mxu0
        %v3332 = vsel %vm1395, %v3329, -inf
        %3333 = vmax.xlane.f32.xlu0 %v3332
        %v3334 = vpop.xlane.xlu0 %3333
        %v3335 = vsub.f32 %v3329, %v3334
        %v3336 = vmul.f32 %v3335, 1.442695
        %v3337 = vpow.pop %v3336
        %v3338 = vsel %vm1395, %v3337, 0.0
        %3339 = vadd.xlane.f32.xlu0 %v3338
        %v3340 = vpop.xlane.xlu0 %3339
        %v3341 = vrcp.pop %v3340
        %v3342 = vmul.f32 %v3337, %v3341
        %v3344 = vsel %vm683, %v3342, 0
        %3346 = vmatprep.subr.mxu0 0.0
        %3347 = vmatpush1.msra.mxu0 0.0
        %3348 = vmatprep.subr.mxu0 0.0
        %3349 = vmatpush1.msra.mxu0 0.0
        %3350 = vmatprep.subr.mxu0 0.0
        %3351 = vmatpush1.msra.mxu0 0.0
        %3352 = vmatprep.subr.mxu0 0.0
        %3353 = vmatpush1.msra.mxu0 0.0
        %3354 = vmatprep.subr.mxu0 0.0
        %3355 = vmatpush1.msra.mxu0 0.0
        %3356 = vmatprep.subr.mxu0 0.0
        %3357 = vmatpush1.msra.mxu0 0.0
        %3358 = vmatprep.subr.mxu0 0.0
        %3359 = vmatpush1.msra.mxu0 0.0
        %3360 = vmatprep.subr.mxu0 0.0
        %3361 = vmatpush1.msra.mxu0 0.0
        %3362 = vmatprep.subr.mxu0 0.0
        %3363 = vmatpush1.msra.mxu0 0.0
        %3364 = vmatprep.subr.mxu0 0.0
        %3365 = vmatpush1.msra.mxu0 0.0
        %3366 = vmatprep.subr.mxu0 0.0
        %3367 = vmatpush1.msra.mxu0 0.0
        %3368 = vmatprep.subr.mxu0 0.0
        %3369 = vmatpush1.msra.mxu0 0.0
        %3370 = vmatprep.subr.mxu0 0.0
        %3371 = vmatpush1.msra.mxu0 0.0
        %3372 = vmatprep.subr.mxu0 0.0
        %3373 = vmatpush1.msra.mxu0 0.0
        %3374 = vmatprep.subr.mxu0 0.0
        %3375 = vmatpush1.msra.mxu0 %v543
        %3376 = vmatprep.subr.mxu0 0.0
        %3377 = vmatpush1.msra.mxu0 %v542
        %3378 = vmatprep.subr.mxu0 0.0
        %3379 = vmatpush2.msra.mxu0 0.0
        %3380 = vmatprep.subr.mxu0 0.0
        %3381 = vmatpush2.msra.mxu0 0.0
        %3382 = vmatprep.subr.mxu0 0.0
        %3383 = vmatpush2.msra.mxu0 0.0
        %3384 = vmatprep.subr.mxu0 0.0
        %3385 = vmatpush2.msra.mxu0 0.0
        %3386 = vmatprep.subr.mxu0 0.0
        %3387 = vmatpush2.msra.mxu0 0.0
        %3388 = vmatprep.subr.mxu0 0.0
        %3389 = vmatpush2.msra.mxu0 0.0
        %3390 = vmatprep.subr.mxu0 0.0
        %3391 = vmatpush2.msra.mxu0 0.0
        %3392 = vmatprep.subr.mxu0 0.0
        %3393 = vmatpush2.msra.mxu0 0.0
        %3394 = vmatprep.subr.mxu0 0.0
        %3395 = vmatpush2.msra.mxu0 0.0
        %3396 = vmatprep.subr.mxu0 0.0
        %3397 = vmatpush2.msra.mxu0 0.0
        %3398 = vmatprep.subr.mxu0 0.0
        %3399 = vmatpush2.msra.mxu0 0.0
        %3400 = vmatprep.subr.mxu0 0.0
        %3401 = vmatpush2.msra.mxu0 0.0
        %3402 = vmatprep.subr.mxu0 0.0
        %3403 = vmatpush2.msra.mxu0 0.0
        %3404 = vmatprep.subr.mxu0 0.0
        %3405 = vmatpush2.msra.mxu0 0.0
        %3406 = vmatprep.subr.mxu0 0.0
        %3407 = vmatpush2.msra.mxu0 0.0
        %3408 = vmatprep.subr.mxu0 0.0
        %3409 = vmatpush2.msra.mxu0 0.0
        %3410 = vmatprep.mubr.f32.mxu0 0.0
        %3411 = vmatmul.mubr.f32.gmra.mxu0 %v3344
        %v3412 = vpop.f32.mrf.mxu0
        %v3413 = vadd.f32 0.0, %v3412
        %v3414 = vpop.f32.mrf.mxu0
        %3415 = vdwg.mxu0
        %v3416 = vadd.f32 %v2447, %v3342
        %3419 = vrot.lane.b32.xlu0 %v3413, 32
        %v3420 = vpop.permute.xlu0 %3419
        %3422 = vrot.lane.b32.xlu0 %v2554, 96
        %v3423 = vpop.permute.xlu0 %3422
        %v3425 = vsel %vm758, %v3039, %v3420
        %v3426 = vsel %vm834, %v3425, %v3423
        %v3428 = vsel %vm836, %v3426, 0
        %3430 = vmatprep.subr.mxu0 0.0
        %3431 = vmatpush1.msra.mxu0 0.0
        %3432 = vmatprep.subr.mxu0 0.0
        %3433 = vmatpush1.msra.mxu0 0.0
        %3434 = vmatprep.subr.mxu0 0.0
        %3435 = vmatpush1.msra.mxu0 0.0
        %3436 = vmatprep.subr.mxu0 0.0
        %3437 = vmatpush1.msra.mxu0 0.0
        %3438 = vmatprep.subr.mxu0 0.0
        %3439 = vmatpush1.msra.mxu0 %v672
        %3440 = vmatprep.subr.mxu0 0.0
        %3441 = vmatpush1.msra.mxu0 %v671
        %3442 = vmatprep.subr.mxu0 0.0
        %3443 = vmatpush1.msra.mxu0 %v670
        %3444 = vmatprep.subr.mxu0 0.0
        %3445 = vmatpush1.msra.mxu0 %v669
        %3446 = vmatprep.subr.mxu0 0.0
        %3447 = vmatpush1.msra.mxu0 %v668
        %3448 = vmatprep.subr.mxu0 0.0
        %3449 = vmatpush1.msra.mxu0 %v667
        %3450 = vmatprep.subr.mxu0 0.0
        %3451 = vmatpush1.msra.mxu0 %v666
        %3452 = vmatprep.subr.mxu0 0.0
        %3453 = vmatpush1.msra.mxu0 %v665
        %3454 = vmatprep.subr.mxu0 0.0
        %3455 = vmatpush1.msra.mxu0 %v664
        %3456 = vmatprep.subr.mxu0 0.0
        %3457 = vmatpush1.msra.mxu0 %v663
        %3458 = vmatprep.subr.mxu0 0.0
        %3459 = vmatpush1.msra.mxu0 %v662
        %3460 = vmatprep.subr.mxu0 0.0
        %3461 = vmatpush1.msra.mxu0 %v661
        %3462 = vmatprep.subr.mxu0 0.0
        %3463 = vmatpush2.msra.mxu0 0.0
        %3464 = vmatprep.subr.mxu0 0.0
        %3465 = vmatpush2.msra.mxu0 0.0
        %3466 = vmatprep.subr.mxu0 0.0
        %3467 = vmatpush2.msra.mxu0 0.0
        %3468 = vmatprep.subr.mxu0 0.0
        %3469 = vmatpush2.msra.mxu0 0.0
        %3470 = vmatprep.subr.mxu0 0.0
        %3471 = vmatpush2.msra.mxu0 0.0
        %3472 = vmatprep.subr.mxu0 0.0
        %3473 = vmatpush2.msra.mxu0 0.0
        %3474 = vmatprep.subr.mxu0 0.0
        %3475 = vmatpush2.msra.mxu0 0.0
        %3476 = vmatprep.subr.mxu0 0.0
        %3477 = vmatpush2.msra.mxu0 0.0
        %3478 = vmatprep.subr.mxu0 0.0
        %3479 = vmatpush2.msra.mxu0 0.0
        %3480 = vmatprep.subr.mxu0 0.0
        %3481 = vmatpush2.msra.mxu0 0.0
        %3482 = vmatprep.subr.mxu0 0.0
        %3483 = vmatpush2.msra.mxu0 0.0
        %3484 = vmatprep.subr.mxu0 0.0
        %3485 = vmatpush2.msra.mxu0 0.0
        %3486 = vmatprep.subr.mxu0 0.0
        %3487 = vmatpush2.msra.mxu0 0.0
        %3488 = vmatprep.subr.mxu0 0.0
        %3489 = vmatpush2.msra.mxu0 0.0
        %3490 = vmatprep.subr.mxu0 0.0
        %3491 = vmatpush2.msra.mxu0 0.0
        %3492 = vmatprep.subr.mxu0 0.0
        %3493 = vmatpush2.msra.mxu0 0.0
        %3494 = vmatprep.mubr.f32.mxu0 0.0
        %3495 = vmatmul.mubr.f32.gmra.mxu0 %v3428
        %v3496 = vpop.f32.mrf.mxu0
        %v3497 = vadd.f32 %v673, %v3496
        %v3498 = vpop.f32.mrf.mxu0
        %3499 = vdwg.mxu0
        %v3500 = vxor.u32 %v3497, 2147483648
        %v3501 = vmul.f32 %v3500, 1.442695
        %v3502 = vpow.pop %v3501
        %v3503 = vadd.f32 %v3502, 1.0
        %v3504 = vrcp.pop %v3503
        %v3505 = vmul.f32 1.0, %v3504
        %v3506 = vtanh.pop %v3497
        %v3507 = vmul.f32 %v3505, %v2548
        %3509 = vrot.lane.b32.xlu0 %v3506, 64
        %v3510 = vpop.permute.xlu0 %3509
        %v3512 = vmul.f32 %v3505, %v3510
        %3514 = vrot.lane.b32.xlu0 %v3512, 32
        %v3515 = vpop.permute.xlu0 %3514
        %v3517 = vadd.f32 %v3507, %v3515
        %v3518 = vtanh.pop %v3517
        %3520 = vrot.lane.b32.xlu0 %v3518, 64
        %v3521 = vpop.permute.xlu0 %3520
        %v3523 = vmul.f32 %v3505, %v3521
        %3525 = vrot.lane.b32.xlu0 %v3523, 32
        %v3526 = vpop.permute.xlu0 %3525
        %v3528 = vsel %vm758, %v3526, %v3420
        %v3530 = vsel %vm834, %v3528, 0
        %3532 = vmatprep.subr.mxu0 0.0
        %3533 = vmatpush1.msra.mxu0 0.0
        %3534 = vmatprep.subr.mxu0 0.0
        %3535 = vmatpush1.msra.mxu0 0.0
        %3536 = vmatprep.subr.mxu0 0.0
        %3537 = vmatpush1.msra.mxu0 0.0
        %3538 = vmatprep.subr.mxu0 0.0
        %3539 = vmatpush1.msra.mxu0 0.0
        %3540 = vmatprep.subr.mxu0 0.0
        %3541 = vmatpush1.msra.mxu0 0.0
        %3542 = vmatprep.subr.mxu0 0.0
        %3543 = vmatpush1.msra.mxu0 0.0
        %3544 = vmatprep.subr.mxu0 0.0
        %3545 = vmatpush1.msra.mxu0 0.0
        %3546 = vmatprep.subr.mxu0 0.0
        %3547 = vmatpush1.msra.mxu0 0.0
        %3548 = vmatprep.subr.mxu0 0.0
        %3549 = vmatpush1.msra.mxu0 %v681
        %3550 = vmatprep.subr.mxu0 0.0
        %3551 = vmatpush1.msra.mxu0 %v680
        %3552 = vmatprep.subr.mxu0 0.0
        %3553 = vmatpush1.msra.mxu0 %v679
        %3554 = vmatprep.subr.mxu0 0.0
        %3555 = vmatpush1.msra.mxu0 %v678
        %3556 = vmatprep.subr.mxu0 0.0
        %3557 = vmatpush1.msra.mxu0 %v677
        %3558 = vmatprep.subr.mxu0 0.0
        %3559 = vmatpush1.msra.mxu0 %v676
        %3560 = vmatprep.subr.mxu0 0.0
        %3561 = vmatpush1.msra.mxu0 %v675
        %3562 = vmatprep.subr.mxu0 0.0
        %3563 = vmatpush1.msra.mxu0 %v674
        %3564 = vmatprep.subr.mxu0 0.0
        %3565 = vmatpush2.msra.mxu0 0.0
        %3566 = vmatprep.subr.mxu0 0.0
        %3567 = vmatpush2.msra.mxu0 0.0
        %3568 = vmatprep.subr.mxu0 0.0
        %3569 = vmatpush2.msra.mxu0 0.0
        %3570 = vmatprep.subr.mxu0 0.0
        %3571 = vmatpush2.msra.mxu0 0.0
        %3572 = vmatprep.subr.mxu0 0.0
        %3573 = vmatpush2.msra.mxu0 0.0
        %3574 = vmatprep.subr.mxu0 0.0
        %3575 = vmatpush2.msra.mxu0 0.0
        %3576 = vmatprep.subr.mxu0 0.0
        %3577 = vmatpush2.msra.mxu0 0.0
        %3578 = vmatprep.subr.mxu0 0.0
        %3579 = vmatpush2.msra.mxu0 0.0
        %3580 = vmatprep.subr.mxu0 0.0
        %3581 = vmatpush2.msra.mxu0 0.0
        %3582 = vmatprep.subr.mxu0 0.0
        %3583 = vmatpush2.msra.mxu0 0.0
        %3584 = vmatprep.subr.mxu0 0.0
        %3585 = vmatpush2.msra.mxu0 0.0
        %3586 = vmatprep.subr.mxu0 0.0
        %3587 = vmatpush2.msra.mxu0 0.0
        %3588 = vmatprep.subr.mxu0 0.0
        %3589 = vmatpush2.msra.mxu0 0.0
        %3590 = vmatprep.subr.mxu0 0.0
        %3591 = vmatpush2.msra.mxu0 0.0
        %3592 = vmatprep.subr.mxu0 0.0
        %3593 = vmatpush2.msra.mxu0 0.0
        %3594 = vmatprep.subr.mxu0 0.0
        %3595 = vmatpush2.msra.mxu0 0.0
        %3596 = vmatprep.mubr.f32.mxu0 0.0
        %3597 = vmatmul.mubr.f32.gmra.mxu0 %v3530
        %v3598 = vpop.f32.mrf.mxu0
        %v3599 = vadd.f32 %v682, %v3598
        %v3600 = vpop.f32.mrf.mxu0
        %3601 = vdwg.mxu0
        %3602 = vrot.lane.b32.xlu0 %v3342, 17
        %v3603 = vpop.permute.xlu0 %3602
        %v3605 = vsel %vm1666, %v3599, %v3603
        %v3606 = vrot.slane %v541, 3
        %v3607 = vsel %vm683, %v3606, 0
        %3609 = vmatprep.subr.mxu0 0.0
        %3610 = vmatpush1.msra.mxu0 0.0
        %3611 = vmatprep.subr.mxu0 0.0
        %3612 = vmatpush1.msra.mxu0 0.0
        %3613 = vmatprep.subr.mxu0 0.0
        %3614 = vmatpush1.msra.mxu0 0.0
        %3615 = vmatprep.subr.mxu0 0.0
        %3616 = vmatpush1.msra.mxu0 0.0
        %3617 = vmatprep.subr.mxu0 0.0
        %3618 = vmatpush1.msra.mxu0 0.0
        %3619 = vmatprep.subr.mxu0 0.0
        %3620 = vmatpush1.msra.mxu0 0.0
        %3621 = vmatprep.subr.mxu0 0.0
        %3622 = vmatpush1.msra.mxu0 0.0
        %3623 = vmatprep.subr.mxu0 0.0
        %3624 = vmatpush1.msra.mxu0 0.0
        %3625 = vmatprep.subr.mxu0 0.0
        %3626 = vmatpush1.msra.mxu0 0.0
        %3627 = vmatprep.subr.mxu0 0.0
        %3628 = vmatpush1.msra.mxu0 0.0
        %3629 = vmatprep.subr.mxu0 0.0
        %3630 = vmatpush1.msra.mxu0 0.0
        %3631 = vmatprep.subr.mxu0 0.0
        %3632 = vmatpush1.msra.mxu0 0.0
        %3633 = vmatprep.subr.mxu0 0.0
        %3634 = vmatpush1.msra.mxu0 0.0
        %3635 = vmatprep.subr.mxu0 0.0
        %3636 = vmatpush1.msra.mxu0 0.0
        %3637 = vmatprep.subr.mxu0 0.0
        %3638 = vmatpush1.msra.mxu0 %v547
        %3639 = vmatprep.subr.mxu0 0.0
        %3640 = vmatpush1.msra.mxu0 %v546
        %3641 = vmatprep.subr.mxu0 0.0
        %3642 = vmatpush2.msra.mxu0 0.0
        %3643 = vmatprep.subr.mxu0 0.0
        %3644 = vmatpush2.msra.mxu0 0.0
        %3645 = vmatprep.subr.mxu0 0.0
        %3646 = vmatpush2.msra.mxu0 0.0
        %3647 = vmatprep.subr.mxu0 0.0
        %3648 = vmatpush2.msra.mxu0 0.0
        %3649 = vmatprep.subr.mxu0 0.0
        %3650 = vmatpush2.msra.mxu0 0.0
        %3651 = vmatprep.subr.mxu0 0.0
        %3652 = vmatpush2.msra.mxu0 0.0
        %3653 = vmatprep.subr.mxu0 0.0
        %3654 = vmatpush2.msra.mxu0 0.0
        %3655 = vmatprep.subr.mxu0 0.0
        %3656 = vmatpush2.msra.mxu0 0.0
        %3657 = vmatprep.subr.mxu0 0.0
        %3658 = vmatpush2.msra.mxu0 0.0
        %3659 = vmatprep.subr.mxu0 0.0
        %3660 = vmatpush2.msra.mxu0 0.0
        %3661 = vmatprep.subr.mxu0 0.0
        %3662 = vmatpush2.msra.mxu0 0.0
        %3663 = vmatprep.subr.mxu0 0.0
        %3664 = vmatpush2.msra.mxu0 0.0
        %3665 = vmatprep.subr.mxu0 0.0
        %3666 = vmatpush2.msra.mxu0 0.0
        %3667 = vmatprep.subr.mxu0 0.0
        %3668 = vmatpush2.msra.mxu0 0.0
        %3669 = vmatprep.subr.mxu0 0.0
        %3670 = vmatpush2.msra.mxu0 0.0
        %3671 = vmatprep.subr.mxu0 0.0
        %3672 = vmatpush2.msra.mxu0 0.0
        %3673 = vmatprep.mubr.f32.mxu0 0.0
        %3674 = vmatmul.mubr.f32.gmra.mxu0 %v3607
        %v3675 = vpop.f32.mrf.mxu0
        %v3676 = vadd.f32 0.0, %v3675
        %v3677 = vpop.f32.mrf.mxu0
        %3678 = vdwg.mxu0
        %v3679 = vmax.f32 %v3676, 0.0
        %v3681 = vsel %vm758, %v3679, 0
        %3683 = vmatprep.subr.mxu0 0.0
        %3684 = vmatpush1.msra.mxu0 0.0
        %3685 = vmatprep.subr.mxu0 0.0
        %3686 = vmatpush1.msra.mxu0 0.0
        %3687 = vmatprep.subr.mxu0 0.0
        %3688 = vmatpush1.msra.mxu0 0.0
        %3689 = vmatprep.subr.mxu0 0.0
        %3690 = vmatpush1.msra.mxu0 0.0
        %3691 = vmatprep.subr.mxu0 0.0
        %3692 = vmatpush1.msra.mxu0 0.0
        %3693 = vmatprep.subr.mxu0 0.0
        %3694 = vmatpush1.msra.mxu0 0.0
        %3695 = vmatprep.subr.mxu0 0.0
        %3696 = vmatpush1.msra.mxu0 0.0
        %3697 = vmatprep.subr.mxu0 0.0
        %3698 = vmatpush1.msra.mxu0 0.0
        %3699 = vmatprep.subr.mxu0 0.0
        %3700 = vmatpush1.msra.mxu0 0.0
        %3701 = vmatprep.subr.mxu0 0.0
        %3702 = vmatpush1.msra.mxu0 0.0
        %3703 = vmatprep.subr.mxu0 0.0
        %3704 = vmatpush1.msra.mxu0 0.0
        %3705 = vmatprep.subr.mxu0 0.0
        %3706 = vmatpush1.msra.mxu0 0.0
        %3707 = vmatprep.subr.mxu0 0.0
        %3708 = vmatpush1.msra.mxu0 %v551
        %3709 = vmatprep.subr.mxu0 0.0
        %3710 = vmatpush1.msra.mxu0 %v550
        %3711 = vmatprep.subr.mxu0 0.0
        %3712 = vmatpush1.msra.mxu0 %v549
        %3713 = vmatprep.subr.mxu0 0.0
        %3714 = vmatpush1.msra.mxu0 %v548
        %3715 = vmatprep.subr.mxu0 0.0
        %3716 = vmatpush2.msra.mxu0 0.0
        %3717 = vmatprep.subr.mxu0 0.0
        %3718 = vmatpush2.msra.mxu0 0.0
        %3719 = vmatprep.subr.mxu0 0.0
        %3720 = vmatpush2.msra.mxu0 0.0
        %3721 = vmatprep.subr.mxu0 0.0
        %3722 = vmatpush2.msra.mxu0 0.0
        %3723 = vmatprep.subr.mxu0 0.0
        %3724 = vmatpush2.msra.mxu0 0.0
        %3725 = vmatprep.subr.mxu0 0.0
        %3726 = vmatpush2.msra.mxu0 0.0
        %3727 = vmatprep.subr.mxu0 0.0
        %3728 = vmatpush2.msra.mxu0 0.0
        %3729 = vmatprep.subr.mxu0 0.0
        %3730 = vmatpush2.msra.mxu0 0.0
        %3731 = vmatprep.subr.mxu0 0.0
        %3732 = vmatpush2.msra.mxu0 0.0
        %3733 = vmatprep.subr.mxu0 0.0
        %3734 = vmatpush2.msra.mxu0 0.0
        %3735 = vmatprep.subr.mxu0 0.0
        %3736 = vmatpush2.msra.mxu0 0.0
        %3737 = vmatprep.subr.mxu0 0.0
        %3738 = vmatpush2.msra.mxu0 0.0
        %3739 = vmatprep.subr.mxu0 0.0
        %3740 = vmatpush2.msra.mxu0 0.0
        %3741 = vmatprep.subr.mxu0 0.0
        %3742 = vmatpush2.msra.mxu0 0.0
        %3743 = vmatprep.subr.mxu0 0.0
        %3744 = vmatpush2.msra.mxu0 0.0
        %3745 = vmatprep.subr.mxu0 0.0
        %3746 = vmatpush2.msra.mxu0 0.0
        %3747 = vmatprep.mubr.f32.mxu0 0.0
        %3748 = vmatmul.mubr.f32.gmra.mxu0 %v3681
        %v3749 = vpop.f32.mrf.mxu0
        %v3750 = vadd.f32 0.0, %v3749
        %v3751 = vpop.f32.mrf.mxu0
        %3752 = vdwg.mxu0
        %v3753 = vmax.f32 %v3750, 0.0
        %3754 = vrot.lane.b32.xlu0 %v2886, 96
        %v3755 = vpop.permute.xlu0 %3754
        %v3757 = vsel %vm758, %v3753, %v3420
        %v3758 = vsel %vm834, %v3757, %v3755
        %v3760 = vsel %vm836, %v3758, 0
        %3762 = vmatprep.subr.mxu0 0.0
        %3763 = vmatpush1.msra.mxu0 0.0
        %3764 = vmatprep.subr.mxu0 0.0
        %3765 = vmatpush1.msra.mxu0 0.0
        %3766 = vmatprep.subr.mxu0 0.0
        %3767 = vmatpush1.msra.mxu0 0.0
        %3768 = vmatprep.subr.mxu0 0.0
        %3769 = vmatpush1.msra.mxu0 0.0
        %3770 = vmatprep.subr.mxu0 0.0
        %3771 = vmatpush1.msra.mxu0 %v563
        %3772 = vmatprep.subr.mxu0 0.0
        %3773 = vmatpush1.msra.mxu0 %v562
        %3774 = vmatprep.subr.mxu0 0.0
        %3775 = vmatpush1.msra.mxu0 %v561
        %3776 = vmatprep.subr.mxu0 0.0
        %3777 = vmatpush1.msra.mxu0 %v560
        %3778 = vmatprep.subr.mxu0 0.0
        %3779 = vmatpush1.msra.mxu0 %v559
        %3780 = vmatprep.subr.mxu0 0.0
        %3781 = vmatpush1.msra.mxu0 %v558
        %3782 = vmatprep.subr.mxu0 0.0
        %3783 = vmatpush1.msra.mxu0 %v557
        %3784 = vmatprep.subr.mxu0 0.0
        %3785 = vmatpush1.msra.mxu0 %v556
        %3786 = vmatprep.subr.mxu0 0.0
        %3787 = vmatpush1.msra.mxu0 %v555
        %3788 = vmatprep.subr.mxu0 0.0
        %3789 = vmatpush1.msra.mxu0 %v554
        %3790 = vmatprep.subr.mxu0 0.0
        %3791 = vmatpush1.msra.mxu0 %v553
        %3792 = vmatprep.subr.mxu0 0.0
        %3793 = vmatpush1.msra.mxu0 %v552
        %3794 = vmatprep.subr.mxu0 0.0
        %3795 = vmatpush2.msra.mxu0 0.0
        %3796 = vmatprep.subr.mxu0 0.0
        %3797 = vmatpush2.msra.mxu0 0.0
        %3798 = vmatprep.subr.mxu0 0.0
        %3799 = vmatpush2.msra.mxu0 0.0
        %3800 = vmatprep.subr.mxu0 0.0
        %3801 = vmatpush2.msra.mxu0 0.0
        %3802 = vmatprep.subr.mxu0 0.0
        %3803 = vmatpush2.msra.mxu0 0.0
        %3804 = vmatprep.subr.mxu0 0.0
        %3805 = vmatpush2.msra.mxu0 0.0
        %3806 = vmatprep.subr.mxu0 0.0
        %3807 = vmatpush2.msra.mxu0 0.0
        %3808 = vmatprep.subr.mxu0 0.0
        %3809 = vmatpush2.msra.mxu0 0.0
        %3810 = vmatprep.subr.mxu0 0.0
        %3811 = vmatpush2.msra.mxu0 0.0
        %3812 = vmatprep.subr.mxu0 0.0
        %3813 = vmatpush2.msra.mxu0 0.0
        %3814 = vmatprep.subr.mxu0 0.0
        %3815 = vmatpush2.msra.mxu0 0.0
        %3816 = vmatprep.subr.mxu0 0.0
        %3817 = vmatpush2.msra.mxu0 0.0
        %3818 = vmatprep.subr.mxu0 0.0
        %3819 = vmatpush2.msra.mxu0 0.0
        %3820 = vmatprep.subr.mxu0 0.0
        %3821 = vmatpush2.msra.mxu0 0.0
        %3822 = vmatprep.subr.mxu0 0.0
        %3823 = vmatpush2.msra.mxu0 0.0
        %3824 = vmatprep.subr.mxu0 0.0
        %3825 = vmatpush2.msra.mxu0 0.0
        %3826 = vmatprep.mubr.f32.mxu0 0.0
        %3827 = vmatmul.mubr.f32.gmra.mxu0 %v3760
        %v3828 = vpop.f32.mrf.mxu0
        %v3829 = vadd.f32 %v564, %v3828
        %v3830 = vpop.f32.mrf.mxu0
        %3831 = vdwg.mxu0
        %v3832 = vxor.u32 %v3829, 2147483648
        %v3833 = vmul.f32 %v3832, 1.442695
        %v3834 = vpow.pop %v3833
        %v3835 = vadd.f32 %v3834, 1.0
        %v3836 = vrcp.pop %v3835
        %v3837 = vmul.f32 1.0, %v3836
        %v3838 = vtanh.pop %v3829
        %v3839 = vmul.f32 %v3837, %v2880
        %3841 = vrot.lane.b32.xlu0 %v3838, 64
        %v3842 = vpop.permute.xlu0 %3841
        %v3844 = vmul.f32 %v3837, %v3842
        %3846 = vrot.lane.b32.xlu0 %v3844, 32
        %v3847 = vpop.permute.xlu0 %3846
        %v3849 = vadd.f32 %v3839, %v3847
        %v3850 = vtanh.pop %v3849
        %3852 = vrot.lane.b32.xlu0 %v3850, 64
        %v3853 = vpop.permute.xlu0 %3852
        %v3855 = vmul.f32 %v3837, %v3853
        %3857 = vrot.lane.b32.xlu0 %v3416, 16
        %v3858 = vpop.permute.xlu0 %3857
        %v3860 = vsel %vm683, %v3342, %v3858
        %v3862 = vsel %vm758, %v3860, 0
        %3864 = vmatprep.subr.mxu0 0.0
        %3865 = vmatpush1.msra.mxu0 0.0
        %3866 = vmatprep.subr.mxu0 0.0
        %3867 = vmatpush1.msra.mxu0 0.0
        %3868 = vmatprep.subr.mxu0 0.0
        %3869 = vmatpush1.msra.mxu0 0.0
        %3870 = vmatprep.subr.mxu0 0.0
        %3871 = vmatpush1.msra.mxu0 0.0
        %3872 = vmatprep.subr.mxu0 0.0
        %3873 = vmatpush1.msra.mxu0 0.0
        %3874 = vmatprep.subr.mxu0 0.0
        %3875 = vmatpush1.msra.mxu0 0.0
        %3876 = vmatprep.subr.mxu0 0.0
        %3877 = vmatpush1.msra.mxu0 0.0
        %3878 = vmatprep.subr.mxu0 0.0
        %3879 = vmatpush1.msra.mxu0 0.0
        %3880 = vmatprep.subr.mxu0 0.0
        %3881 = vmatpush1.msra.mxu0 0.0
        %3882 = vmatprep.subr.mxu0 0.0
        %3883 = vmatpush1.msra.mxu0 0.0
        %3884 = vmatprep.subr.mxu0 0.0
        %3885 = vmatpush1.msra.mxu0 0.0
        %3886 = vmatprep.subr.mxu0 0.0
        %3887 = vmatpush1.msra.mxu0 0.0
        %3888 = vmatprep.subr.mxu0 %v594
        %3889 = vmatpush1.msra.mxu0 %v593
        %3890 = vmatprep.subr.mxu0 %v590
        %3891 = vmatpush1.msra.mxu0 %v589
        %3892 = vmatprep.subr.mxu0 %v586
        %3893 = vmatpush1.msra.mxu0 %v585
        %3894 = vmatprep.subr.mxu0 %v582
        %3895 = vmatpush1.msra.mxu0 %v581
        %3896 = vmatprep.subr.mxu0 0.0
        %3897 = vmatpush2.msra.mxu0 0.0
        %3898 = vmatprep.subr.mxu0 0.0
        %3899 = vmatpush2.msra.mxu0 0.0
        %3900 = vmatprep.subr.mxu0 0.0
        %3901 = vmatpush2.msra.mxu0 0.0
        %3902 = vmatprep.subr.mxu0 0.0
        %3903 = vmatpush2.msra.mxu0 0.0
        %3904 = vmatprep.subr.mxu0 0.0
        %3905 = vmatpush2.msra.mxu0 0.0
        %3906 = vmatprep.subr.mxu0 0.0
        %3907 = vmatpush2.msra.mxu0 0.0
        %3908 = vmatprep.subr.mxu0 0.0
        %3909 = vmatpush2.msra.mxu0 0.0
        %3910 = vmatprep.subr.mxu0 0.0
        %3911 = vmatpush2.msra.mxu0 0.0
        %3912 = vmatprep.subr.mxu0 0.0
        %3913 = vmatpush2.msra.mxu0 0.0
        %3914 = vmatprep.subr.mxu0 0.0
        %3915 = vmatpush2.msra.mxu0 0.0
        %3916 = vmatprep.subr.mxu0 0.0
        %3917 = vmatpush2.msra.mxu0 0.0
        %3918 = vmatprep.subr.mxu0 0.0
        %3919 = vmatpush2.msra.mxu0 0.0
        %3920 = vmatprep.subr.mxu0 0.0
        %3921 = vmatpush2.msra.mxu0 0.0
        %3922 = vmatprep.subr.mxu0 0.0
        %3923 = vmatpush2.msra.mxu0 0.0
        %3924 = vmatprep.subr.mxu0 0.0
        %3925 = vmatpush2.msra.mxu0 0.0
        %3926 = vmatprep.subr.mxu0 0.0
        %3927 = vmatpush2.msra.mxu0 0.0
        %3928 = vmatprep.mubr.f32.mxu0 0.0
        %3929 = vmatmul.mubr.f32.gmra.mxu0 %v3862
        %v3930 = vpop.f32.mrf.mxu0
        %v3931 = vadd.f32 0.0, %v3930
        %v3932 = vpop.f32.mrf.mxu0
        %v3933 = vadd.f32 0.0, %v3932
        %3934 = vdwg.mxu0
        %3935 = vmatprep.subr.mxu0 0.0
        %3936 = vmatpush1.msra.mxu0 0.0
        %3937 = vmatprep.subr.mxu0 0.0
        %3938 = vmatpush1.msra.mxu0 0.0
        %3939 = vmatprep.subr.mxu0 0.0
        %3940 = vmatpush1.msra.mxu0 0.0
        %3941 = vmatprep.subr.mxu0 0.0
        %3942 = vmatpush1.msra.mxu0 0.0
        %3943 = vmatprep.subr.mxu0 0.0
        %3944 = vmatpush1.msra.mxu0 0.0
        %3945 = vmatprep.subr.mxu0 0.0
        %3946 = vmatpush1.msra.mxu0 0.0
        %3947 = vmatprep.subr.mxu0 0.0
        %3948 = vmatpush1.msra.mxu0 0.0
        %3949 = vmatprep.subr.mxu0 0.0
        %3950 = vmatpush1.msra.mxu0 0.0
        %3951 = vmatprep.subr.mxu0 0.0
        %3952 = vmatpush1.msra.mxu0 0.0
        %3953 = vmatprep.subr.mxu0 0.0
        %3954 = vmatpush1.msra.mxu0 0.0
        %3955 = vmatprep.subr.mxu0 0.0
        %3956 = vmatpush1.msra.mxu0 0.0
        %3957 = vmatprep.subr.mxu0 0.0
        %3958 = vmatpush1.msra.mxu0 0.0
        %3959 = vmatprep.subr.mxu0 %v596
        %3960 = vmatpush1.msra.mxu0 %v595
        %3961 = vmatprep.subr.mxu0 %v592
        %3962 = vmatpush1.msra.mxu0 %v591
        %3963 = vmatprep.subr.mxu0 %v588
        %3964 = vmatpush1.msra.mxu0 %v587
        %3965 = vmatprep.subr.mxu0 %v584
        %3966 = vmatpush1.msra.mxu0 %v583
        %3967 = vmatprep.subr.mxu0 0.0
        %3968 = vmatpush2.msra.mxu0 0.0
        %3969 = vmatprep.subr.mxu0 0.0
        %3970 = vmatpush2.msra.mxu0 0.0
        %3971 = vmatprep.subr.mxu0 0.0
        %3972 = vmatpush2.msra.mxu0 0.0
        %3973 = vmatprep.subr.mxu0 0.0
        %3974 = vmatpush2.msra.mxu0 0.0
        %3975 = vmatprep.subr.mxu0 0.0
        %3976 = vmatpush2.msra.mxu0 0.0
        %3977 = vmatprep.subr.mxu0 0.0
        %3978 = vmatpush2.msra.mxu0 0.0
        %3979 = vmatprep.subr.mxu0 0.0
        %3980 = vmatpush2.msra.mxu0 0.0
        %3981 = vmatprep.subr.mxu0 0.0
        %3982 = vmatpush2.msra.mxu0 0.0
        %3983 = vmatprep.subr.mxu0 0.0
        %3984 = vmatpush2.msra.mxu0 0.0
        %3985 = vmatprep.subr.mxu0 0.0
        %3986 = vmatpush2.msra.mxu0 0.0
        %3987 = vmatprep.subr.mxu0 0.0
        %3988 = vmatpush2.msra.mxu0 0.0
        %3989 = vmatprep.subr.mxu0 0.0
        %3990 = vmatpush2.msra.mxu0 0.0
        %3991 = vmatprep.subr.mxu0 0.0
        %3992 = vmatpush2.msra.mxu0 0.0
        %3993 = vmatprep.subr.mxu0 0.0
        %3994 = vmatpush2.msra.mxu0 0.0
        %3995 = vmatprep.subr.mxu0 0.0
        %3996 = vmatpush2.msra.mxu0 0.0
        %3997 = vmatprep.subr.mxu0 0.0
        %3998 = vmatpush2.msra.mxu0 0.0
        %3999 = vmatprep.mubr.f32.mxu0 0.0
        %4000 = vmatmul.mubr.f32.gmra.mxu0 %v3862
        %v4001 = vpop.f32.mrf.mxu0
        %v4002 = vadd.f32 0.0, %v4001
        %v4003 = vpop.f32.mrf.mxu0
        %v4004 = vadd.f32 0.0, %v4003
        %4005 = vdwg.mxu0
        %4007 = vrot.lane.b32.xlu0 %v3855, 32
        %v4008 = vpop.permute.xlu0 %4007
        %v4009 = vsel %vm758, %v4008, 0
        %4011 = vmatprep.subr.mxu0 0.0
        %4012 = vmatpush1.msra.mxu0 0.0
        %4013 = vmatprep.subr.mxu0 0.0
        %4014 = vmatpush1.msra.mxu0 0.0
        %4015 = vmatprep.subr.mxu0 0.0
        %4016 = vmatpush1.msra.mxu0 0.0
        %4017 = vmatprep.subr.mxu0 0.0
        %4018 = vmatpush1.msra.mxu0 0.0
        %4019 = vmatprep.subr.mxu0 0.0
        %4020 = vmatpush1.msra.mxu0 0.0
        %4021 = vmatprep.subr.mxu0 0.0
        %4022 = vmatpush1.msra.mxu0 0.0
        %4023 = vmatprep.subr.mxu0 0.0
        %4024 = vmatpush1.msra.mxu0 0.0
        %4025 = vmatprep.subr.mxu0 0.0
        %4026 = vmatpush1.msra.mxu0 0.0
        %4027 = vmatprep.subr.mxu0 0.0
        %4028 = vmatpush1.msra.mxu0 0.0
        %4029 = vmatprep.subr.mxu0 0.0
        %4030 = vmatpush1.msra.mxu0 0.0
        %4031 = vmatprep.subr.mxu0 0.0
        %4032 = vmatpush1.msra.mxu0 0.0
        %4033 = vmatprep.subr.mxu0 0.0
        %4034 = vmatpush1.msra.mxu0 0.0
        %4035 = vmatprep.subr.mxu0 %v578
        %4036 = vmatpush1.msra.mxu0 %v577
        %4037 = vmatprep.subr.mxu0 %v574
        %4038 = vmatpush1.msra.mxu0 %v573
        %4039 = vmatprep.subr.mxu0 %v570
        %4040 = vmatpush1.msra.mxu0 %v569
        %4041 = vmatprep.subr.mxu0 %v566
        %4042 = vmatpush1.msra.mxu0 %v565
        %4043 = vmatprep.subr.mxu0 0.0
        %4044 = vmatpush2.msra.mxu0 0.0
        %4045 = vmatprep.subr.mxu0 0.0
        %4046 = vmatpush2.msra.mxu0 0.0
        %4047 = vmatprep.subr.mxu0 0.0
        %4048 = vmatpush2.msra.mxu0 0.0
        %4049 = vmatprep.subr.mxu0 0.0
        %4050 = vmatpush2.msra.mxu0 0.0
        %4051 = vmatprep.subr.mxu0 0.0
        %4052 = vmatpush2.msra.mxu0 0.0
        %4053 = vmatprep.subr.mxu0 0.0
        %4054 = vmatpush2.msra.mxu0 0.0
        %4055 = vmatprep.subr.mxu0 0.0
        %4056 = vmatpush2.msra.mxu0 0.0
        %4057 = vmatprep.subr.mxu0 0.0
        %4058 = vmatpush2.msra.mxu0 0.0
        %4059 = vmatprep.subr.mxu0 0.0
        %4060 = vmatpush2.msra.mxu0 0.0
        %4061 = vmatprep.subr.mxu0 0.0
        %4062 = vmatpush2.msra.mxu0 0.0
        %4063 = vmatprep.subr.mxu0 0.0
        %4064 = vmatpush2.msra.mxu0 0.0
        %4065 = vmatprep.subr.mxu0 0.0
        %4066 = vmatpush2.msra.mxu0 0.0
        %4067 = vmatprep.subr.mxu0 0.0
        %4068 = vmatpush2.msra.mxu0 0.0
        %4069 = vmatprep.subr.mxu0 0.0
        %4070 = vmatpush2.msra.mxu0 0.0
        %4071 = vmatprep.subr.mxu0 0.0
        %4072 = vmatpush2.msra.mxu0 0.0
        %4073 = vmatprep.subr.mxu0 0.0
        %4074 = vmatpush2.msra.mxu0 0.0
        %4075 = vmatprep.mubr.f32.mxu0 0.0
        %4076 = vmatmul.mubr.f32.gmra.mxu0 %v4009
        %v4077 = vpop.f32.mrf.mxu0
        %v4078 = vadd.f32 %v1086, %v4077
        %v4079 = vpop.f32.mrf.mxu0
        %v4080 = vadd.f32 %v1090, %v4079
        %4081 = vdwg.mxu0
        %4082 = vmatprep.subr.mxu0 0.0
        %4083 = vmatpush1.msra.mxu0 0.0
        %4084 = vmatprep.subr.mxu0 0.0
        %4085 = vmatpush1.msra.mxu0 0.0
        %4086 = vmatprep.subr.mxu0 0.0
        %4087 = vmatpush1.msra.mxu0 0.0
        %4088 = vmatprep.subr.mxu0 0.0
        %4089 = vmatpush1.msra.mxu0 0.0
        %4090 = vmatprep.subr.mxu0 0.0
        %4091 = vmatpush1.msra.mxu0 0.0
        %4092 = vmatprep.subr.mxu0 0.0
        %4093 = vmatpush1.msra.mxu0 0.0
        %4094 = vmatprep.subr.mxu0 0.0
        %4095 = vmatpush1.msra.mxu0 0.0
        %4096 = vmatprep.subr.mxu0 0.0
        %4097 = vmatpush1.msra.mxu0 0.0
        %4098 = vmatprep.subr.mxu0 0.0
        %4099 = vmatpush1.msra.mxu0 0.0
        %4100 = vmatprep.subr.mxu0 0.0
        %4101 = vmatpush1.msra.mxu0 0.0
        %4102 = vmatprep.subr.mxu0 0.0
        %4103 = vmatpush1.msra.mxu0 0.0
        %4104 = vmatprep.subr.mxu0 0.0
        %4105 = vmatpush1.msra.mxu0 0.0
        %4106 = vmatprep.subr.mxu0 %v580
        %4107 = vmatpush1.msra.mxu0 %v579
        %4108 = vmatprep.subr.mxu0 %v576
        %4109 = vmatpush1.msra.mxu0 %v575
        %4110 = vmatprep.subr.mxu0 %v572
        %4111 = vmatpush1.msra.mxu0 %v571
        %4112 = vmatprep.subr.mxu0 %v568
        %4113 = vmatpush1.msra.mxu0 %v567
        %4114 = vmatprep.subr.mxu0 0.0
        %4115 = vmatpush2.msra.mxu0 0.0
        %4116 = vmatprep.subr.mxu0 0.0
        %4117 = vmatpush2.msra.mxu0 0.0
        %4118 = vmatprep.subr.mxu0 0.0
        %4119 = vmatpush2.msra.mxu0 0.0
        %4120 = vmatprep.subr.mxu0 0.0
        %4121 = vmatpush2.msra.mxu0 0.0
        %4122 = vmatprep.subr.mxu0 0.0
        %4123 = vmatpush2.msra.mxu0 0.0
        %4124 = vmatprep.subr.mxu0 0.0
        %4125 = vmatpush2.msra.mxu0 0.0
        %4126 = vmatprep.subr.mxu0 0.0
        %4127 = vmatpush2.msra.mxu0 0.0
        %4128 = vmatprep.subr.mxu0 0.0
        %4129 = vmatpush2.msra.mxu0 0.0
        %4130 = vmatprep.subr.mxu0 0.0
        %4131 = vmatpush2.msra.mxu0 0.0
        %4132 = vmatprep.subr.mxu0 0.0
        %4133 = vmatpush2.msra.mxu0 0.0
        %4134 = vmatprep.subr.mxu0 0.0
        %4135 = vmatpush2.msra.mxu0 0.0
        %4136 = vmatprep.subr.mxu0 0.0
        %4137 = vmatpush2.msra.mxu0 0.0
        %4138 = vmatprep.subr.mxu0 0.0
        %4139 = vmatpush2.msra.mxu0 0.0
        %4140 = vmatprep.subr.mxu0 0.0
        %4141 = vmatpush2.msra.mxu0 0.0
        %4142 = vmatprep.subr.mxu0 0.0
        %4143 = vmatpush2.msra.mxu0 0.0
        %4144 = vmatprep.subr.mxu0 0.0
        %4145 = vmatpush2.msra.mxu0 0.0
        %4146 = vmatprep.mubr.f32.mxu0 0.0
        %4147 = vmatmul.mubr.f32.gmra.mxu0 %v4009
        %v4148 = vpop.f32.mrf.mxu0
        %v4149 = vadd.f32 %v1094, %v4148
        %v4150 = vpop.f32.mrf.mxu0
        %v4151 = vadd.f32 %v1098, %v4150
        %4152 = vdwg.mxu0
        %v4153 = vadd.f32 %v4078, %v3931
        %v4154 = vadd.f32 %v4080, %v3933
        %v4155 = vadd.f32 %v4149, %v4002
        %v4156 = vadd.f32 %v4151, %v4004
        %v4157 = vtanh.pop %v4153
        %v4158 = vtanh.pop %v4154
        %v4159 = vtanh.pop %v4155
        %v4160 = vtanh.pop %v4156
        %4161 = vmatprep.subr.mxu0 0.0
        %4162 = vmatpush1.msra.mxu0 %v612
        %4163 = vmatprep.subr.mxu0 0.0
        %4164 = vmatpush1.msra.mxu0 %v611
        %4165 = vmatprep.subr.mxu0 0.0
        %4166 = vmatpush1.msra.mxu0 %v610
        %4167 = vmatprep.subr.mxu0 0.0
        %4168 = vmatpush1.msra.mxu0 %v609
        %4169 = vmatprep.subr.mxu0 0.0
        %4170 = vmatpush1.msra.mxu0 %v608
        %4171 = vmatprep.subr.mxu0 0.0
        %4172 = vmatpush1.msra.mxu0 %v607
        %4173 = vmatprep.subr.mxu0 0.0
        %4174 = vmatpush1.msra.mxu0 %v606
        %4175 = vmatprep.subr.mxu0 0.0
        %4176 = vmatpush1.msra.mxu0 %v605
        %4177 = vmatprep.subr.mxu0 0.0
        %4178 = vmatpush1.msra.mxu0 %v604
        %4179 = vmatprep.subr.mxu0 0.0
        %4180 = vmatpush1.msra.mxu0 %v603
        %4181 = vmatprep.subr.mxu0 0.0
        %4182 = vmatpush1.msra.mxu0 %v602
        %4183 = vmatprep.subr.mxu0 0.0
        %4184 = vmatpush1.msra.mxu0 %v601
        %4185 = vmatprep.subr.mxu0 0.0
        %4186 = vmatpush1.msra.mxu0 %v600
        %4187 = vmatprep.subr.mxu0 0.0
        %4188 = vmatpush1.msra.mxu0 %v599
        %4189 = vmatprep.subr.mxu0 0.0
        %4190 = vmatpush1.msra.mxu0 %v598
        %4191 = vmatprep.subr.mxu0 0.0
        %4192 = vmatpush1.msra.mxu0 %v597
        %4193 = vmatprep.subr.mxu0 0.0
        %4194 = vmatpush2.msra.mxu0 %v628
        %4195 = vmatprep.subr.mxu0 0.0
        %4196 = vmatpush2.msra.mxu0 %v627
        %4197 = vmatprep.subr.mxu0 0.0
        %4198 = vmatpush2.msra.mxu0 %v626
        %4199 = vmatprep.subr.mxu0 0.0
        %4200 = vmatpush2.msra.mxu0 %v625
        %4201 = vmatprep.subr.mxu0 0.0
        %4202 = vmatpush2.msra.mxu0 %v624
        %4203 = vmatprep.subr.mxu0 0.0
        %4204 = vmatpush2.msra.mxu0 %v623
        %4205 = vmatprep.subr.mxu0 0.0
        %4206 = vmatpush2.msra.mxu0 %v622
        %4207 = vmatprep.subr.mxu0 0.0
        %4208 = vmatpush2.msra.mxu0 %v621
        %4209 = vmatprep.subr.mxu0 0.0
        %4210 = vmatpush2.msra.mxu0 %v620
        %4211 = vmatprep.subr.mxu0 0.0
        %4212 = vmatpush2.msra.mxu0 %v619
        %4213 = vmatprep.subr.mxu0 0.0
        %4214 = vmatpush2.msra.mxu0 %v618
        %4215 = vmatprep.subr.mxu0 0.0
        %4216 = vmatpush2.msra.mxu0 %v617
        %4217 = vmatprep.subr.mxu0 0.0
        %4218 = vmatpush2.msra.mxu0 %v616
        %4219 = vmatprep.subr.mxu0 0.0
        %4220 = vmatpush2.msra.mxu0 %v615
        %4221 = vmatprep.subr.mxu0 0.0
        %4222 = vmatpush2.msra.mxu0 %v614
        %4223 = vmatprep.subr.mxu0 0.0
        %4224 = vmatpush2.msra.mxu0 %v613
        %4225 = vmatprep.mubr.f32.mxu0 %v4158
        %4226 = vmatmul.mubr.f32.gmra.mxu0 %v4157
        %v4227 = vpop.f32.mrf.mxu0
        %v4228 = vadd.f32 %v545, %v4227
        %v4229 = vpop.f32.mrf.mxu0
        %4230 = vdwg.mxu0
        %4231 = vmatprep.subr.mxu0 0.0
        %4232 = vmatpush1.msra.mxu0 %v644
        %4233 = vmatprep.subr.mxu0 0.0
        %4234 = vmatpush1.msra.mxu0 %v643
        %4235 = vmatprep.subr.mxu0 0.0
        %4236 = vmatpush1.msra.mxu0 %v642
        %4237 = vmatprep.subr.mxu0 0.0
        %4238 = vmatpush1.msra.mxu0 %v641
        %4239 = vmatprep.subr.mxu0 0.0
        %4240 = vmatpush1.msra.mxu0 %v640
        %4241 = vmatprep.subr.mxu0 0.0
        %4242 = vmatpush1.msra.mxu0 %v639
        %4243 = vmatprep.subr.mxu0 0.0
        %4244 = vmatpush1.msra.mxu0 %v638
        %4245 = vmatprep.subr.mxu0 0.0
        %4246 = vmatpush1.msra.mxu0 %v637
        %4247 = vmatprep.subr.mxu0 0.0
        %4248 = vmatpush1.msra.mxu0 %v636
        %4249 = vmatprep.subr.mxu0 0.0
        %4250 = vmatpush1.msra.mxu0 %v635
        %4251 = vmatprep.subr.mxu0 0.0
        %4252 = vmatpush1.msra.mxu0 %v634
        %4253 = vmatprep.subr.mxu0 0.0
        %4254 = vmatpush1.msra.mxu0 %v633
        %4255 = vmatprep.subr.mxu0 0.0
        %4256 = vmatpush1.msra.mxu0 %v632
        %4257 = vmatprep.subr.mxu0 0.0
        %4258 = vmatpush1.msra.mxu0 %v631
        %4259 = vmatprep.subr.mxu0 0.0
        %4260 = vmatpush1.msra.mxu0 %v630
        %4261 = vmatprep.subr.mxu0 0.0
        %4262 = vmatpush1.msra.mxu0 %v629
        %4263 = vmatprep.subr.mxu0 0.0
        %4264 = vmatpush2.msra.mxu0 %v660
        %4265 = vmatprep.subr.mxu0 0.0
        %4266 = vmatpush2.msra.mxu0 %v659
        %4267 = vmatprep.subr.mxu0 0.0
        %4268 = vmatpush2.msra.mxu0 %v658
        %4269 = vmatprep.subr.mxu0 0.0
        %4270 = vmatpush2.msra.mxu0 %v657
        %4271 = vmatprep.subr.mxu0 0.0
        %4272 = vmatpush2.msra.mxu0 %v656
        %4273 = vmatprep.subr.mxu0 0.0
        %4274 = vmatpush2.msra.mxu0 %v655
        %4275 = vmatprep.subr.mxu0 0.0
        %4276 = vmatpush2.msra.mxu0 %v654
        %4277 = vmatprep.subr.mxu0 0.0
        %4278 = vmatpush2.msra.mxu0 %v653
        %4279 = vmatprep.subr.mxu0 0.0
        %4280 = vmatpush2.msra.mxu0 %v652
        %4281 = vmatprep.subr.mxu0 0.0
        %4282 = vmatpush2.msra.mxu0 %v651
        %4283 = vmatprep.subr.mxu0 0.0
        %4284 = vmatpush2.msra.mxu0 %v650
        %4285 = vmatprep.subr.mxu0 0.0
        %4286 = vmatpush2.msra.mxu0 %v649
        %4287 = vmatprep.subr.mxu0 0.0
        %4288 = vmatpush2.msra.mxu0 %v648
        %4289 = vmatprep.subr.mxu0 0.0
        %4290 = vmatpush2.msra.mxu0 %v647
        %4291 = vmatprep.subr.mxu0 0.0
        %4292 = vmatpush2.msra.mxu0 %v646
        %4293 = vmatprep.subr.mxu0 0.0
        %4294 = vmatpush2.msra.mxu0 %v645
        %4295 = vmatprep.mubr.f32.mxu0 %v4160
        %4296 = vmatmul.mubr.f32.gmra.mxu0 %v4159
        %v4297 = vpop.f32.mrf.mxu0
        %v4298 = vadd.f32 %v4228, %v4297
        %v4299 = vpop.f32.mrf.mxu0
        %4300 = vdwg.mxu0
        %v4301 = vsel %vm1395, %v4298, -inf
        %4302 = vmax.xlane.f32.xlu0 %v4301
        %v4303 = vpop.xlane.xlu0 %4302
        %v4304 = vsub.f32 %v4298, %v4303
        %v4305 = vmul.f32 %v4304, 1.442695
        %v4306 = vpow.pop %v4305
        %v4307 = vsel %vm1395, %v4306, 0.0
        %4308 = vadd.xlane.f32.xlu0 %v4307
        %v4309 = vpop.xlane.xlu0 %4308
        %v4310 = vrcp.pop %v4309
        %v4311 = vmul.f32 %v4306, %v4310
        %v4313 = vsel %vm683, %v4311, 0
        %4315 = vmatprep.subr.mxu0 0.0
        %4316 = vmatpush1.msra.mxu0 0.0
        %4317 = vmatprep.subr.mxu0 0.0
        %4318 = vmatpush1.msra.mxu0 0.0
        %4319 = vmatprep.subr.mxu0 0.0
        %4320 = vmatpush1.msra.mxu0 0.0
        %4321 = vmatprep.subr.mxu0 0.0
        %4322 = vmatpush1.msra.mxu0 0.0
        %4323 = vmatprep.subr.mxu0 0.0
        %4324 = vmatpush1.msra.mxu0 0.0
        %4325 = vmatprep.subr.mxu0 0.0
        %4326 = vmatpush1.msra.mxu0 0.0
        %4327 = vmatprep.subr.mxu0 0.0
        %4328 = vmatpush1.msra.mxu0 0.0
        %4329 = vmatprep.subr.mxu0 0.0
        %4330 = vmatpush1.msra.mxu0 0.0
        %4331 = vmatprep.subr.mxu0 0.0
        %4332 = vmatpush1.msra.mxu0 0.0
        %4333 = vmatprep.subr.mxu0 0.0
        %4334 = vmatpush1.msra.mxu0 0.0
        %4335 = vmatprep.subr.mxu0 0.0
        %4336 = vmatpush1.msra.mxu0 0.0
        %4337 = vmatprep.subr.mxu0 0.0
        %4338 = vmatpush1.msra.mxu0 0.0
        %4339 = vmatprep.subr.mxu0 0.0
        %4340 = vmatpush1.msra.mxu0 0.0
        %4341 = vmatprep.subr.mxu0 0.0
        %4342 = vmatpush1.msra.mxu0 0.0
        %4343 = vmatprep.subr.mxu0 0.0
        %4344 = vmatpush1.msra.mxu0 %v543
        %4345 = vmatprep.subr.mxu0 0.0
        %4346 = vmatpush1.msra.mxu0 %v542
        %4347 = vmatprep.subr.mxu0 0.0
        %4348 = vmatpush2.msra.mxu0 0.0
        %4349 = vmatprep.subr.mxu0 0.0
        %4350 = vmatpush2.msra.mxu0 0.0
        %4351 = vmatprep.subr.mxu0 0.0
        %4352 = vmatpush2.msra.mxu0 0.0
        %4353 = vmatprep.subr.mxu0 0.0
        %4354 = vmatpush2.msra.mxu0 0.0
        %4355 = vmatprep.subr.mxu0 0.0
        %4356 = vmatpush2.msra.mxu0 0.0
        %4357 = vmatprep.subr.mxu0 0.0
        %4358 = vmatpush2.msra.mxu0 0.0
        %4359 = vmatprep.subr.mxu0 0.0
        %4360 = vmatpush2.msra.mxu0 0.0
        %4361 = vmatprep.subr.mxu0 0.0
        %4362 = vmatpush2.msra.mxu0 0.0
        %4363 = vmatprep.subr.mxu0 0.0
        %4364 = vmatpush2.msra.mxu0 0.0
        %4365 = vmatprep.subr.mxu0 0.0
        %4366 = vmatpush2.msra.mxu0 0.0
        %4367 = vmatprep.subr.mxu0 0.0
        %4368 = vmatpush2.msra.mxu0 0.0
        %4369 = vmatprep.subr.mxu0 0.0
        %4370 = vmatpush2.msra.mxu0 0.0
        %4371 = vmatprep.subr.mxu0 0.0
        %4372 = vmatpush2.msra.mxu0 0.0
        %4373 = vmatprep.subr.mxu0 0.0
        %4374 = vmatpush2.msra.mxu0 0.0
        %4375 = vmatprep.subr.mxu0 0.0
        %4376 = vmatpush2.msra.mxu0 0.0
        %4377 = vmatprep.subr.mxu0 0.0
        %4378 = vmatpush2.msra.mxu0 0.0
        %4379 = vmatprep.mubr.f32.mxu0 0.0
        %4380 = vmatmul.mubr.f32.gmra.mxu0 %v4313
        %v4381 = vpop.f32.mrf.mxu0
        %v4382 = vadd.f32 0.0, %v4381
        %v4383 = vpop.f32.mrf.mxu0
        %4384 = vdwg.mxu0
        %4387 = vrot.lane.b32.xlu0 %v4382, 32
        %v4388 = vpop.permute.xlu0 %4387
        %4390 = vrot.lane.b32.xlu0 %v3523, 96
        %v4391 = vpop.permute.xlu0 %4390
        %v4393 = vsel %vm758, %v4008, %v4388
        %v4394 = vsel %vm834, %v4393, %v4391
        %v4396 = vsel %vm836, %v4394, 0
        %4398 = vmatprep.subr.mxu0 0.0
        %4399 = vmatpush1.msra.mxu0 0.0
        %4400 = vmatprep.subr.mxu0 0.0
        %4401 = vmatpush1.msra.mxu0 0.0
        %4402 = vmatprep.subr.mxu0 0.0
        %4403 = vmatpush1.msra.mxu0 0.0
        %4404 = vmatprep.subr.mxu0 0.0
        %4405 = vmatpush1.msra.mxu0 0.0
        %4406 = vmatprep.subr.mxu0 0.0
        %4407 = vmatpush1.msra.mxu0 %v672
        %4408 = vmatprep.subr.mxu0 0.0
        %4409 = vmatpush1.msra.mxu0 %v671
        %4410 = vmatprep.subr.mxu0 0.0
        %4411 = vmatpush1.msra.mxu0 %v670
        %4412 = vmatprep.subr.mxu0 0.0
        %4413 = vmatpush1.msra.mxu0 %v669
        %4414 = vmatprep.subr.mxu0 0.0
        %4415 = vmatpush1.msra.mxu0 %v668
        %4416 = vmatprep.subr.mxu0 0.0
        %4417 = vmatpush1.msra.mxu0 %v667
        %4418 = vmatprep.subr.mxu0 0.0
        %4419 = vmatpush1.msra.mxu0 %v666
        %4420 = vmatprep.subr.mxu0 0.0
        %4421 = vmatpush1.msra.mxu0 %v665
        %4422 = vmatprep.subr.mxu0 0.0
        %4423 = vmatpush1.msra.mxu0 %v664
        %4424 = vmatprep.subr.mxu0 0.0
        %4425 = vmatpush1.msra.mxu0 %v663
        %4426 = vmatprep.subr.mxu0 0.0
        %4427 = vmatpush1.msra.mxu0 %v662
        %4428 = vmatprep.subr.mxu0 0.0
        %4429 = vmatpush1.msra.mxu0 %v661
        %4430 = vmatprep.subr.mxu0 0.0
        %4431 = vmatpush2.msra.mxu0 0.0
        %4432 = vmatprep.subr.mxu0 0.0
        %4433 = vmatpush2.msra.mxu0 0.0
        %4434 = vmatprep.subr.mxu0 0.0
        %4435 = vmatpush2.msra.mxu0 0.0
        %4436 = vmatprep.subr.mxu0 0.0
        %4437 = vmatpush2.msra.mxu0 0.0
        %4438 = vmatprep.subr.mxu0 0.0
        %4439 = vmatpush2.msra.mxu0 0.0
        %4440 = vmatprep.subr.mxu0 0.0
        %4441 = vmatpush2.msra.mxu0 0.0
        %4442 = vmatprep.subr.mxu0 0.0
        %4443 = vmatpush2.msra.mxu0 0.0
        %4444 = vmatprep.subr.mxu0 0.0
        %4445 = vmatpush2.msra.mxu0 0.0
        %4446 = vmatprep.subr.mxu0 0.0
        %4447 = vmatpush2.msra.mxu0 0.0
        %4448 = vmatprep.subr.mxu0 0.0
        %4449 = vmatpush2.msra.mxu0 0.0
        %4450 = vmatprep.subr.mxu0 0.0
        %4451 = vmatpush2.msra.mxu0 0.0
        %4452 = vmatprep.subr.mxu0 0.0
        %4453 = vmatpush2.msra.mxu0 0.0
        %4454 = vmatprep.subr.mxu0 0.0
        %4455 = vmatpush2.msra.mxu0 0.0
        %4456 = vmatprep.subr.mxu0 0.0
        %4457 = vmatpush2.msra.mxu0 0.0
        %4458 = vmatprep.subr.mxu0 0.0
        %4459 = vmatpush2.msra.mxu0 0.0
        %4460 = vmatprep.subr.mxu0 0.0
        %4461 = vmatpush2.msra.mxu0 0.0
        %4462 = vmatprep.mubr.f32.mxu0 0.0
        %4463 = vmatmul.mubr.f32.gmra.mxu0 %v4396
        %v4464 = vpop.f32.mrf.mxu0
        %v4465 = vadd.f32 %v673, %v4464
        %v4466 = vpop.f32.mrf.mxu0
        %4467 = vdwg.mxu0
        %v4468 = vxor.u32 %v4465, 2147483648
        %v4469 = vmul.f32 %v4468, 1.442695
        %v4470 = vpow.pop %v4469
        %v4471 = vadd.f32 %v4470, 1.0
        %v4472 = vrcp.pop %v4471
        %v4473 = vmul.f32 1.0, %v4472
        %v4474 = vtanh.pop %v4465
        %v4475 = vmul.f32 %v4473, %v3517
        %4477 = vrot.lane.b32.xlu0 %v4474, 64
        %v4478 = vpop.permute.xlu0 %4477
        %v4480 = vmul.f32 %v4473, %v4478
        %4482 = vrot.lane.b32.xlu0 %v4480, 32
        %v4483 = vpop.permute.xlu0 %4482
        %v4485 = vadd.f32 %v4475, %v4483
        %v4486 = vtanh.pop %v4485
        %4488 = vrot.lane.b32.xlu0 %v4486, 64
        %v4489 = vpop.permute.xlu0 %4488
        %v4491 = vmul.f32 %v4473, %v4489
        %4493 = vrot.lane.b32.xlu0 %v4491, 32
        %v4494 = vpop.permute.xlu0 %4493
        %v4496 = vsel %vm758, %v4494, %v4388
        %v4498 = vsel %vm834, %v4496, 0
        %4500 = vmatprep.subr.mxu0 0.0
        %4501 = vmatpush1.msra.mxu0 0.0
        %4502 = vmatprep.subr.mxu0 0.0
        %4503 = vmatpush1.msra.mxu0 0.0
        %4504 = vmatprep.subr.mxu0 0.0
        %4505 = vmatpush1.msra.mxu0 0.0
        %4506 = vmatprep.subr.mxu0 0.0
        %4507 = vmatpush1.msra.mxu0 0.0
        %4508 = vmatprep.subr.mxu0 0.0
        %4509 = vmatpush1.msra.mxu0 0.0
        %4510 = vmatprep.subr.mxu0 0.0
        %4511 = vmatpush1.msra.mxu0 0.0
        %4512 = vmatprep.subr.mxu0 0.0
        %4513 = vmatpush1.msra.mxu0 0.0
        %4514 = vmatprep.subr.mxu0 0.0
        %4515 = vmatpush1.msra.mxu0 0.0
        %4516 = vmatprep.subr.mxu0 0.0
        %4517 = vmatpush1.msra.mxu0 %v681
        %4518 = vmatprep.subr.mxu0 0.0
        %4519 = vmatpush1.msra.mxu0 %v680
        %4520 = vmatprep.subr.mxu0 0.0
        %4521 = vmatpush1.msra.mxu0 %v679
        %4522 = vmatprep.subr.mxu0 0.0
        %4523 = vmatpush1.msra.mxu0 %v678
        %4524 = vmatprep.subr.mxu0 0.0
        %4525 = vmatpush1.msra.mxu0 %v677
        %4526 = vmatprep.subr.mxu0 0.0
        %4527 = vmatpush1.msra.mxu0 %v676
        %4528 = vmatprep.subr.mxu0 0.0
        %4529 = vmatpush1.msra.mxu0 %v675
        %4530 = vmatprep.subr.mxu0 0.0
        %4531 = vmatpush1.msra.mxu0 %v674
        %4532 = vmatprep.subr.mxu0 0.0
        %4533 = vmatpush2.msra.mxu0 0.0
        %4534 = vmatprep.subr.mxu0 0.0
        %4535 = vmatpush2.msra.mxu0 0.0
        %4536 = vmatprep.subr.mxu0 0.0
        %4537 = vmatpush2.msra.mxu0 0.0
        %4538 = vmatprep.subr.mxu0 0.0
        %4539 = vmatpush2.msra.mxu0 0.0
        %4540 = vmatprep.subr.mxu0 0.0
        %4541 = vmatpush2.msra.mxu0 0.0
        %4542 = vmatprep.subr.mxu0 0.0
        %4543 = vmatpush2.msra.mxu0 0.0
        %4544 = vmatprep.subr.mxu0 0.0
        %4545 = vmatpush2.msra.mxu0 0.0
        %4546 = vmatprep.subr.mxu0 0.0
        %4547 = vmatpush2.msra.mxu0 0.0
        %4548 = vmatprep.subr.mxu0 0.0
        %4549 = vmatpush2.msra.mxu0 0.0
        %4550 = vmatprep.subr.mxu0 0.0
        %4551 = vmatpush2.msra.mxu0 0.0
        %4552 = vmatprep.subr.mxu0 0.0
        %4553 = vmatpush2.msra.mxu0 0.0
        %4554 = vmatprep.subr.mxu0 0.0
        %4555 = vmatpush2.msra.mxu0 0.0
        %4556 = vmatprep.subr.mxu0 0.0
        %4557 = vmatpush2.msra.mxu0 0.0
        %4558 = vmatprep.subr.mxu0 0.0
        %4559 = vmatpush2.msra.mxu0 0.0
        %4560 = vmatprep.subr.mxu0 0.0
        %4561 = vmatpush2.msra.mxu0 0.0
        %4562 = vmatprep.subr.mxu0 0.0
        %4563 = vmatpush2.msra.mxu0 0.0
        %4564 = vmatprep.mubr.f32.mxu0 0.0
        %4565 = vmatmul.mubr.f32.gmra.mxu0 %v4498
        %v4566 = vpop.f32.mrf.mxu0
        %v4567 = vadd.f32 %v682, %v4566
        %v4568 = vpop.f32.mrf.mxu0
        %4569 = vdwg.mxu0
        %4570 = vrot.lane.b32.xlu0 %v4311, 17
        %v4571 = vpop.permute.xlu0 %4570
        %v4573 = vsel %vm1666, %v4567, %v4571
        %v4575 = vrot.slane %v2636, 7
        %v4578 = vrot.slane %v3605, 6
        %v4581 = vrot.slane %v4573, 5
        %vm4583 = vcmask 1040384
        %v4584 = vsel %vm4583, %v1667, %v4575
        %vm4585 = vcmask 1041408
        %v4586 = vsel %vm4585, %v4584, %v4578
        %vm4587 = vcmask 1042432
        %v4588 = vsel %vm4587, %v4586, %v4581
        %vm4589 = vcmask 265216
        %4590 = vst.msk [vmem:[%s524] sm:$0xf] %vm4589, %v4588
        %s4591 = sand.u32 %s372, 1
        %s4592 = scalar_lea.sflag [#allocation3], %s4591
        %s4593 = sand.u32 %s372, 1
        %s4594 = smul.addr %s4593, 4
        %s4595 = scalar_lea.vmem [#allocation2], %s4594
        // Predicated region
        $region81: #{tpu_custom_call.1} parent=79 // pred_check
          %p4596 = pneg %p382
        $region82: #{tpu_custom_call.1} parent=79 // pred_check_branch
          %4598 = sbr.rel (%p4596) target = $region84
        $region83: #{tpu_custom_call.1} parent=79 // pred_region
          %s4600 = ssub.s32 64, 64
          %4601 = vsyncadd %s4592, %s4600
          %s4602 = smul.addr %s29, 64
          %s4603 = scalar_lea.hbm %s15, %s4602
          %s4605 = sshll.u32 %s4595, 4
          %s4606 = int_to_ptr.vmem [resolvable:$true] %s4605
          %4608 = dma.vmem_to_hbm [thread:$0]  %s4606, 64, %s4603, %s4592
        $region84: #{tpu_custom_call.1} parent=79 // pred_fallthru
          _
      $region80: #{tpu_custom_call.1} parent=5 // pred_fallthru
        _
      %p4609 = scmp.le.s32.totalorder 2, %s24
      // Predicated region
      $region85: #{tpu_custom_call.1} parent=5 // pred_check
        %p4610 = pneg %p4609
      $region86: #{tpu_custom_call.1} parent=5 // pred_check_branch
        %4612 = sbr.rel (%p4610) target = $region88
      $region87: #{tpu_custom_call.1} parent=5 // pred_region
        %s4613 = ssub.s32 %s24, 2
        // Predicated region
        $region89: #{tpu_custom_call.1} parent=87 // pred_check
          %p4614 = pneg %p388
        $region90: #{tpu_custom_call.1} parent=87 // pred_check_branch
          %4616 = sbr.rel (%p4614) target = $region92
        $region91: #{tpu_custom_call.1} parent=87 // pred_region
          %s4617 = sand.u32 %s373, 1
          %s4618 = scalar_lea.sflag [#allocation3], %s4617
          %s4619 = sand.u32 %s373, 1
          %s4620 = smul.addr %s4619, 4
          %s4621 = scalar_lea.vmem [#allocation2], %s4620
          %4622 = dma.done %s4618, 64
        $region92: #{tpu_custom_call.1} parent=87 // pred_fallthru
          _
      $region88: #{tpu_custom_call.1} parent=5 // pred_fallthru
        _
    $region6: #{tpu_custom_call.1} parent=1 // loop_footer
      %s28 = sadd.s32 1, %s24
    $region7: #{tpu_custom_call.1} parent=1 // loop_footer_branch
      %23 = sbr.rel target = $region3
    $region8: #{tpu_custom_call.1} parent=1 // loop_exit
      _
    %4623 = vsyncpa [#allocation3], 1
    %s4624 = scalar_lea.sflag [#allocation3], 1
    %4625 = vsyncpa %s4624, 1

</llo_original>
